<compile_context>
chip_gen: v6e
topology: v6e:2x2x1
jax: 0.10.0
libtpu: 0.0.40
codegen_flags: <defaults>
</compile_context>

<pallas_src>
import functools

import jax
import jax.numpy as jnp
from jax.experimental import pallas as pl
from jax.experimental.pallas import tpu as pltpu

# ----------------------- small synthetic model config -----------------------
BATCH = 2
IN_CH = 3
IMG = 16
PATCH = 8
WIDTH = 128                      # hidden dim D (lane-dense: multiple of 128)
HEADS = 4
HEAD_DIM = WIDTH // HEADS        # 32
LAYERS = 2
MLP = 4 * WIDTH                  # 512
GRIDSZ = IMG // PATCH
NPATCH = GRIDSZ * GRIDSZ         # 4
SEQ = NPATCH + 1                 # 5  (+1 class token)
SEQ_PAD = ((SEQ + 7) // 8) * 8   # 8  (sublane-aligned residual rows)
CPP = IN_CH * PATCH * PATCH      # 192 flattened patch dim
LN_EPS = 1e-5
NEG_INF = -1e30
DTYPE = jnp.float32              # residual stream / LN / softmax math
WDTYPE = jnp.bfloat16            # MXU operand dtype (f32 accumulation)
VMEM_LIMIT = 32 * 1024 * 1024    # explicit scoped-VMEM budget (safe on v5e/v6e/v7x)


# ------------------------------ in-kernel helpers ----------------------------
def _layernorm(x, g, b):
    """Row-wise LayerNorm in f32. x:(M,D)  g,b:(1,D)."""
    mu = jnp.mean(x, axis=-1, keepdims=True)
    xc = x - mu
    var = jnp.mean(xc * xc, axis=-1, keepdims=True)
    return xc * jax.lax.rsqrt(var + LN_EPS) * g + b


# --------------------------------- kernels -----------------------------------
def _stem_kernel(p_ref, w_ref, cls_ref, pos_ref, g_ref, b_ref, o_ref):
    """Per-image fused stem: patch-projection (== stride-P bias-free conv1)
    + class token + positional embedding + ln_pre.
    Output block: (SEQ_PAD, D) residual rows, pad rows zeroed, one aligned store."""
    f32 = jnp.float32
    tok = jnp.dot(p_ref[...].astype(WDTYPE), w_ref[...],
                  preferred_element_type=f32)                          # (NPATCH, D)
    x = jnp.concatenate([cls_ref[...].astype(f32), tok], axis=0)       # (SEQ, D)
    x = x + pos_ref[...].astype(f32)
    x = _layernorm(x, g_ref[...].astype(f32), b_ref[...].astype(f32))
    out = jnp.concatenate(
        [x, jnp.zeros((SEQ_PAD - SEQ, WIDTH), f32)], axis=0)           # (SEQ_PAD, D)
    o_ref[...] = out.astype(o_ref.dtype)


def _transformer_kernel(x_ref, ln1g_ref, ln1b_ref, wqkv_ref, bqkv_ref, wo_ref,
                        bo_ref, ln2g_ref, ln2b_ref, w1_ref, b1_ref, w2_ref,
                        b2_ref, o_ref, res_ref):
    """All residual attention blocks of one image, one grid step per layer.
    grid = (BATCH, LAYERS); residual stays resident in `res_ref` across the
    layer axis; the last layer also emits the mean over the sequence axis
    (== torch.mean(x, 0) with x in (L, N, D))."""
    f32 = jnp.float32
    l = pl.program_id(1)

    @pl.when(l == 0)
    def _():
        res_ref[...] = x_ref[...].astype(f32)      # load stem output once per image

    x = res_ref[...]                               # (SEQ_PAD, D)

    # ---- x = x + out_proj(MHA(ln_1(x))) ----
    h = _layernorm(x, ln1g_ref[...].astype(f32), ln1b_ref[...].astype(f32))
    qkv = (jnp.dot(h.astype(WDTYPE), wqkv_ref[...], preferred_element_type=f32)
           + bqkv_ref[...].astype(f32))                                # (SEQ_PAD, 3D)

    # additive key bias hiding the zero-padded rows SEQ..SEQ_PAD-1 (keys only)
    col = jax.lax.broadcasted_iota(jnp.int32, (1, SEQ_PAD), 1)
    key_bias = jnp.where(col < SEQ, 0.0, NEG_INF).astype(f32)          # (1, SEQ_PAD)

    o_heads = []
    for hh in range(HEADS):
        lo = hh * HEAD_DIM
        hi = lo + HEAD_DIM
        qh = qkv[:, lo:hi].astype(WDTYPE)          # 1/sqrt(dh) folded into wqkv/bqkv
        kh = qkv[:, WIDTH + lo:WIDTH + hi].astype(WDTYPE)
        vh = qkv[:, 2 * WIDTH + lo:2 * WIDTH + hi].astype(WDTYPE)
        s = jax.lax.dot_general(qh, kh, (((1,), (1,)), ((), ())),
                                preferred_element_type=f32) + key_bias  # (SEQ_PAD, SEQ_PAD)
        s = s - jnp.max(s, axis=-1, keepdims=True)
        p = jnp.exp(s)
        inv = pl.reciprocal(jnp.sum(p, axis=-1, keepdims=True), approx=True)
        o_heads.append(jnp.dot(p.astype(WDTYPE), vh,
                               preferred_element_type=f32) * inv)       # (SEQ_PAD, dh)
    o_all = jnp.concatenate(o_heads, axis=-1)                           # (SEQ_PAD, D)
    x = x + (jnp.dot(o_all.astype(WDTYPE), wo_ref[...],                 # single K=128
                     preferred_element_type=f32)                        # out-projection
             + bo_ref[...].astype(f32))

    # ---- x = x + fc2(gelu(fc1(ln_2(x)))) ----
    h = _layernorm(x, ln2g_ref[...].astype(f32), ln2b_ref[...].astype(f32))
    h = (jnp.dot(h.astype(WDTYPE), w1_ref[...], preferred_element_type=f32)
         + b1_ref[...].astype(f32))
    h = jax.nn.gelu(h, approximate=True)          # tanh approx (EUP); torch ref is exact erf
    x = x + (jnp.dot(h.astype(WDTYPE), w2_ref[...], preferred_element_type=f32)
             + b2_ref[...].astype(f32))

    res_ref[...] = x                              # residual stays in VMEM for next layer

    @pl.when(l == pl.num_programs(1) - 1)
    def _():
        # mean over the SEQ real rows only (pad rows excluded)
        o_ref[...] = (jnp.sum(x[:SEQ, :], axis=0, keepdims=True)
                      * (1.0 / SEQ)).astype(o_ref.dtype)


# ------------------------------ kernel wrappers -------------------------------
def pallas_stem(patches, w_patch, cls, pos, g, b):
    return pl.pallas_call(
        _stem_kernel,
        out_shape=jax.ShapeDtypeStruct((BATCH, SEQ_PAD, WIDTH), DTYPE),
        grid_spec=pltpu.PrefetchScalarGridSpec(
            num_scalar_prefetch=0,
            grid=(BATCH,),
            in_specs=[
                pl.BlockSpec((None, NPATCH, CPP), lambda bi: (bi, 0, 0)),
                pl.BlockSpec((CPP, WIDTH), lambda bi: (0, 0)),
                pl.BlockSpec((1, WIDTH), lambda bi: (0, 0)),
                pl.BlockSpec((SEQ, WIDTH), lambda bi: (0, 0)),
                pl.BlockSpec((1, WIDTH), lambda bi: (0, 0)),
                pl.BlockSpec((1, WIDTH), lambda bi: (0, 0)),
            ],
            out_specs=pl.BlockSpec((None, SEQ_PAD, WIDTH), lambda bi: (bi, 0, 0)),
        ),
        compiler_params=pltpu.CompilerParams(
            dimension_semantics=("parallel",),
            vmem_limit_bytes=VMEM_LIMIT),
    )(patches, w_patch, cls, pos, g, b)


def pallas_transformer(x, p):
    """All transformer layers + final sequence-mean in ONE pallas_call."""
    wmap = lambda bi, li: (li, 0, 0)   # stacked per-layer weights
    xmap = lambda bi, li: (bi, 0, 0)   # per-image residual / output
    out = pl.pallas_call(
        _transformer_kernel,
        out_shape=jax.ShapeDtypeStruct((BATCH, 1, WIDTH), DTYPE),
        grid_spec=pltpu.PrefetchScalarGridSpec(
            num_scalar_prefetch=0,
            grid=(BATCH, LAYERS),
            in_specs=[
                pl.BlockSpec((None, SEQ_PAD, WIDTH), xmap),      # residual stream in
                pl.BlockSpec((None, 1, WIDTH), wmap),            # ln1_g
                pl.BlockSpec((None, 1, WIDTH), wmap),            # ln1_b
                pl.BlockSpec((None, WIDTH, 3 * WIDTH), wmap),    # wqkv
                pl.BlockSpec((None, 1, 3 * WIDTH), wmap),        # bqkv
                pl.BlockSpec((None, WIDTH, WIDTH), wmap),        # wo
                pl.BlockSpec((None, 1, WIDTH), wmap),            # bo
                pl.BlockSpec((None, 1, WIDTH), wmap),            # ln2_g
                pl.BlockSpec((None, 1, WIDTH), wmap),            # ln2_b
                pl.BlockSpec((None, WIDTH, MLP), wmap),          # w1
                pl.BlockSpec((None, 1, MLP), wmap),              # b1
                pl.BlockSpec((None, MLP, WIDTH), wmap),          # w2
                pl.BlockSpec((None, 1, WIDTH), wmap),            # b2
            ],
            out_specs=pl.BlockSpec((None, 1, WIDTH), xmap),
            scratch_shapes=[pltpu.VMEM((SEQ_PAD, WIDTH), jnp.float32)],
        ),
        compiler_params=pltpu.CompilerParams(
            dimension_semantics=("parallel", "arbitrary"),
            vmem_limit_bytes=VMEM_LIMIT),
    )(x, p["ln1_g"], p["ln1_b"], p["wqkv"], p["bqkv"], p["wo"], p["bo"],
      p["ln2_g"], p["ln2_b"], p["w1"], p["b1"], p["w2"], p["b2"])
    return out.reshape(BATCH, WIDTH)


# ------------------------------- parameters -----------------------------------
def init_params(key):
    ks = jax.random.split(key, 10)

    def nrm(k, shape, scale=0.02):
        return scale * jax.random.normal(k, shape, jnp.float32)

    # fold 1/sqrt(head_dim) into the Q columns of wqkv / bqkv (no in-kernel scale)
    scale = 1.0 / (HEAD_DIM ** 0.5)
    wqkv = nrm(ks[3], (LAYERS, WIDTH, 3 * WIDTH))
    wqkv = wqkv.at[:, :, :WIDTH].multiply(scale)
    bqkv = nrm(ks[4], (LAYERS, 1, 3 * WIDTH))
    bqkv = bqkv.at[:, :, :WIDTH].multiply(scale)

    return {
        # conv1.weight (D, C, P, P) pre-flattened + pre-transposed to (C*P*P, D)
        "w_patch": nrm(ks[0], (CPP, WIDTH)).astype(WDTYPE),
        "class_emb": nrm(ks[1], (1, WIDTH)).astype(DTYPE),
        "pos_emb": nrm(ks[2], (SEQ, WIDTH)).astype(DTYPE),
        "ln_pre_g": jnp.ones((1, WIDTH), DTYPE),
        "ln_pre_b": jnp.zeros((1, WIDTH), DTYPE),
        # per-layer weights stacked along a leading layer axis, (K, N) matmul layout
        "layers": {
            "ln1_g": jnp.ones((LAYERS, 1, WIDTH), DTYPE),
            "ln1_b": jnp.zeros((LAYERS, 1, WIDTH), DTYPE),
            "wqkv": wqkv.astype(WDTYPE),     # torch in_proj_weight (3D,D) pre-transposed
            "bqkv": bqkv.astype(DTYPE),
            "wo": nrm(ks[5], (LAYERS, WIDTH, WIDTH)).astype(WDTYPE),
            "bo": nrm(ks[6], (LAYERS, 1, WIDTH)).astype(DTYPE),
            "ln2_g": jnp.ones((LAYERS, 1, WIDTH), DTYPE),
            "ln2_b": jnp.zeros((LAYERS, 1, WIDTH), DTYPE),
            "w1": nrm(ks[7], (LAYERS, WIDTH, MLP)).astype(WDTYPE),
            "b1": jnp.zeros((LAYERS, 1, MLP), DTYPE),
            "w2": nrm(ks[8], (LAYERS, MLP, WIDTH)).astype(WDTYPE),
            "b2": jnp.zeros((LAYERS, 1, WIDTH), DTYPE),
        },
    }


# --------------------------------- forward ------------------------------------
def clip_vision_encoder_forward(x_nchw, params):
    B, C, H, W = x_nchw.shape
    gh, gw = H // PATCH, W // PATCH

    # conv1 (stride == kernel, bias-free) == patchify (layout glue) + in-kernel matmul
    # TODO(synk): at real 224x224 sizes, fuse this patchify into the stem kernel via a
    # grid over (B, gh, gw) with an index_map into the NCHW input (saves an HBM round trip).
    patches = x_nchw.reshape(B, C, gh, PATCH, gw, PATCH)
    patches = patches.transpose(0, 2, 4, 1, 3, 5).reshape(B, gh * gw, C * PATCH * PATCH)

    # stem: patch-proj + class token + pos-emb + ln_pre (patch_dropout=Identity -> no-op)
    x = pallas_stem(patches, params["w_patch"], params["class_emb"],
                    params["pos_emb"], params["ln_pre_g"], params["ln_pre_b"])

    # all residual blocks + torch.mean(x, 0) in one fused grid kernel
    return pallas_transformer(x, params["layers"])               # (B, D)


# ----------------------------------- main --------------------------------------
if __name__ == "__main__":
    key = jax.random.PRNGKey(0)
    pkey, xkey = jax.random.split(key)
    params = init_params(pkey)
    x = jax.random.normal(xkey, (BATCH, IN_CH, IMG, IMG), dtype=DTYPE)

    out = jax.jit(clip_vision_encoder_forward)(x, params)
    out = jax.block_until_ready(out)

    assert out.shape == (BATCH, WIDTH), out.shape
    assert bool(jnp.all(jnp.isfinite(out)))
    print("KERNEL_OK")
</pallas_src>

<mosaic_0001>
module attributes {stable_mosaic.version = 11 : i64} {
  func.func @_stem_kernel(%arg0: i32, %arg1: memref<1x4x192xf32, #tpu.memory_space<vmem>>, %arg2: memref<192x128xbf16, #tpu.memory_space<vmem>>, %arg3: memref<1x128xf32, #tpu.memory_space<vmem>>, %arg4: memref<5x128xf32, #tpu.memory_space<vmem>>, %arg5: memref<1x128xf32, #tpu.memory_space<vmem>>, %arg6: memref<1x128xf32, #tpu.memory_space<vmem>>, %arg7: memref<1x8x128xf32, #tpu.memory_space<vmem>>) attributes {dimension_semantics = [#tpu.dimension_semantics<parallel>], iteration_bounds = array<i64: 2>, scalar_prefetch = 0 : i64, scratch_operands = 0 : i64, tpu.core_type = #tpu.core_type<tc>, window_params = [{transform_indices = @transform_0, window_bounds = array<i64: 1, 4, 192>}, {pipeline_mode = #tpu.pipeline_mode<synchronous>, transform_indices = @transform_1, window_bounds = array<i64: 192, 128>}, {pipeline_mode = #tpu.pipeline_mode<synchronous>, transform_indices = @transform_2, window_bounds = array<i64: 1, 128>}, {pipeline_mode = #tpu.pipeline_mode<synchronous>, transform_indices = @transform_3, window_bounds = array<i64: 5, 128>}, {pipeline_mode = #tpu.pipeline_mode<synchronous>, transform_indices = @transform_4, window_bounds = array<i64: 1, 128>}, {pipeline_mode = #tpu.pipeline_mode<synchronous>, transform_indices = @transform_5, window_bounds = array<i64: 1, 128>}, {transform_indices = @transform_6, window_bounds = array<i64: 1, 8, 128>}]} {
    %c0 = arith.constant 0 : index
    %c0_0 = arith.constant 0 : index
    %c0_1 = arith.constant 0 : index
    %0 = vector.load %arg1[%c0, %c0_0, %c0_1] : memref<1x4x192xf32, #tpu.memory_space<vmem>>, vector<1x4x192xf32>
    %1 = vector.shape_cast %0 : vector<1x4x192xf32> to vector<4x192xf32>
    %2 = arith.truncf %1 : vector<4x192xf32> to vector<4x192xbf16>
    %c0_2 = arith.constant 0 : index
    %c0_3 = arith.constant 0 : index
    %3 = vector.load %arg2[%c0_2, %c0_3] : memref<192x128xbf16, #tpu.memory_space<vmem>>, vector<192x128xbf16>
    %cst = arith.constant dense<0.000000e+00> : vector<4x128xf32>
    %4 = tpu.matmul %2, %3, %cst {dimension_numbers = #tpu.dot_dimension_numbers<[1], [0], [0], [1], [0, 0, 1, 1], [], []>} : vector<4x192xbf16>, vector<192x128xbf16>, vector<4x128xf32> -> vector<4x128xf32>
    %c0_4 = arith.constant 0 : index
    %c0_5 = arith.constant 0 : index
    %5 = vector.load %arg3[%c0_4, %c0_5] : memref<1x128xf32, #tpu.memory_space<vmem>>, vector<1x128xf32>
    %6 = tpu.concatenate %5, %4 in 0 : vector<1x128xf32>, vector<4x128xf32> -> vector<5x128xf32>
    %c0_6 = arith.constant 0 : index
    %c0_7 = arith.constant 0 : index
    %7 = vector.load %arg4[%c0_6, %c0_7] : memref<5x128xf32, #tpu.memory_space<vmem>>, vector<5x128xf32>
    %8 = arith.addf %6, %7 : vector<5x128xf32>
    %c0_8 = arith.constant 0 : index
    %c0_9 = arith.constant 0 : index
    %9 = vector.load %arg5[%c0_8, %c0_9] : memref<1x128xf32, #tpu.memory_space<vmem>>, vector<1x128xf32>
    %c0_10 = arith.constant 0 : index
    %c0_11 = arith.constant 0 : index
    %10 = vector.load %arg6[%c0_10, %c0_11] : memref<1x128xf32, #tpu.memory_space<vmem>>, vector<1x128xf32>
    %cst_12 = arith.constant dense<0.000000e+00> : vector<5xf32>
    %11 = vector.multi_reduction <add>, %8, %cst_12 [1] : vector<5x128xf32> to vector<5xf32>
    %12 = vector.shape_cast %11 : vector<5xf32> to vector<5x1xf32>
    %cst_13 = arith.constant 1.280000e+02 : f32
    %13 = vector.broadcast %cst_13 : f32 to vector<5x1xf32>
    %14 = arith.divf %12, %13 : vector<5x1xf32>
    %15 = vector.broadcast %14 : vector<5x1xf32> to vector<5x128xf32>
    %16 = arith.subf %8, %15 : vector<5x128xf32>
    %17 = arith.mulf %16, %16 : vector<5x128xf32>
    %cst_14 = arith.constant dense<0.000000e+00> : vector<5xf32>
    %18 = vector.multi_reduction <add>, %17, %cst_14 [1] : vector<5x128xf32> to vector<5xf32>
    %19 = vector.shape_cast %18 : vector<5xf32> to vector<5x1xf32>
    %cst_15 = arith.constant 1.280000e+02 : f32
    %20 = vector.broadcast %cst_15 : f32 to vector<5x1xf32>
    %21 = arith.divf %19, %20 : vector<5x1xf32>
    %cst_16 = arith.constant 9.99999974E-6 : f32
    %22 = vector.broadcast %cst_16 : f32 to vector<5x1xf32>
    %23 = arith.addf %21, %22 : vector<5x1xf32>
    %24 = math.rsqrt %23 : vector<5x1xf32>
    %25 = vector.broadcast %24 : vector<5x1xf32> to vector<5x128xf32>
    %26 = arith.mulf %16, %25 : vector<5x128xf32>
    %27 = vector.broadcast %9 : vector<1x128xf32> to vector<5x128xf32>
    %28 = arith.mulf %26, %27 : vector<5x128xf32>
    %29 = vector.broadcast %10 : vector<1x128xf32> to vector<5x128xf32>
    %30 = arith.addf %28, %29 : vector<5x128xf32>
    %cst_17 = arith.constant 0.000000e+00 : f32
    %31 = vector.broadcast %cst_17 : f32 to vector<3x128xf32>
    %32 = tpu.concatenate %30, %31 in 0 : vector<5x128xf32>, vector<3x128xf32> -> vector<8x128xf32>
    %c0_18 = arith.constant 0 : index
    %c0_19 = arith.constant 0 : index
    %c0_20 = arith.constant 0 : index
    %33 = vector.load %arg7[%c0_18, %c0_19, %c0_20] : memref<1x8x128xf32, #tpu.memory_space<vmem>>, vector<1x8x128xf32>
    %34 = vector.shape_cast %33 : vector<1x8x128xf32> to vector<8x128xf32>
    %35 = vector.shape_cast %32 : vector<8x128xf32> to vector<1x8x128xf32>
    tpu.vector_store %arg7[%c0_18, %c0_19, %c0_20], %35 {strides = array<i32>} : memref<1x8x128xf32, #tpu.memory_space<vmem>>, vector<1x8x128xf32>,
    return
  }
  func.func @transform_0(%arg0: i32) -> (i32, i32, i32) {
    %c0_i32 = arith.constant 0 : i32
    %c0_i32_0 = arith.constant 0 : i32
    %c0_i32_1 = arith.constant 0 : i32
    return %arg0, %c0_i32, %c0_i32_0 : i32, i32, i32
  }
  func.func @transform_1(%arg0: i32) -> (i32, i32) {
    %c0_i32 = arith.constant 0 : i32
    %c0_i32_0 = arith.constant 0 : i32
    %c0_i32_1 = arith.constant 0 : i32
    return %c0_i32, %c0_i32_0 : i32, i32
  }
  func.func @transform_2(%arg0: i32) -> (i32, i32) {
    %c0_i32 = arith.constant 0 : i32
    %c0_i32_0 = arith.constant 0 : i32
    %c0_i32_1 = arith.constant 0 : i32
    return %c0_i32, %c0_i32_0 : i32, i32
  }
  func.func @transform_3(%arg0: i32) -> (i32, i32) {
    %c0_i32 = arith.constant 0 : i32
    %c0_i32_0 = arith.constant 0 : i32
    %c0_i32_1 = arith.constant 0 : i32
    return %c0_i32, %c0_i32_0 : i32, i32
  }
  func.func @transform_4(%arg0: i32) -> (i32, i32) {
    %c0_i32 = arith.constant 0 : i32
    %c0_i32_0 = arith.constant 0 : i32
    %c0_i32_1 = arith.constant 0 : i32
    return %c0_i32, %c0_i32_0 : i32, i32
  }
  func.func @transform_5(%arg0: i32) -> (i32, i32) {
    %c0_i32 = arith.constant 0 : i32
    %c0_i32_0 = arith.constant 0 : i32
    %c0_i32_1 = arith.constant 0 : i32
    return %c0_i32, %c0_i32_0 : i32, i32
  }
  func.func @transform_6(%arg0: i32) -> (i32, i32, i32) {
    %c0_i32 = arith.constant 0 : i32
    %c0_i32_0 = arith.constant 0 : i32
    %c0_i32_1 = arith.constant 0 : i32
    return %arg0, %c0_i32, %c0_i32_0 : i32, i32, i32
  }
}

module attributes {stable_mosaic.version = 11 : i64} {
  func.func @_transformer_kernel(%arg0: i32, %arg1: i32, %arg2: memref<1x8x128xf32, #tpu.memory_space<vmem>>, %arg3: memref<1x1x128xf32, #tpu.memory_space<vmem>>, %arg4: memref<1x1x128xf32, #tpu.memory_space<vmem>>, %arg5: memref<1x128x384xbf16, #tpu.memory_space<vmem>>, %arg6: memref<1x1x384xf32, #tpu.memory_space<vmem>>, %arg7: memref<1x128x128xbf16, #tpu.memory_space<vmem>>, %arg8: memref<1x1x128xf32, #tpu.memory_space<vmem>>, %arg9: memref<1x1x128xf32, #tpu.memory_space<vmem>>, %arg10: memref<1x1x128xf32, #tpu.memory_space<vmem>>, %arg11: memref<1x128x512xbf16, #tpu.memory_space<vmem>>, %arg12: memref<1x1x512xf32, #tpu.memory_space<vmem>>, %arg13: memref<1x512x128xbf16, #tpu.memory_space<vmem>>, %arg14: memref<1x1x128xf32, #tpu.memory_space<vmem>>, %arg15: memref<1x1x128xf32, #tpu.memory_space<vmem>>, %arg16: memref<8x128xf32, #tpu.memory_space<vmem>>) attributes {dimension_semantics = [#tpu.dimension_semantics<parallel>, #tpu.dimension_semantics<arbitrary>], iteration_bounds = array<i64: 2, 2>, scalar_prefetch = 0 : i64, scratch_operands = 1 : i64, tpu.core_type = #tpu.core_type<tc>, window_params = [{transform_indices = @transform_0, window_bounds = array<i64: 1, 8, 128>}, {transform_indices = @transform_1, window_bounds = array<i64: 1, 1, 128>}, {transform_indices = @transform_2, window_bounds = array<i64: 1, 1, 128>}, {transform_indices = @transform_3, window_bounds = array<i64: 1, 128, 384>}, {transform_indices = @transform_4, window_bounds = array<i64: 1, 1, 384>}, {transform_indices = @transform_5, window_bounds = array<i64: 1, 128, 128>}, {transform_indices = @transform_6, window_bounds = array<i64: 1, 1, 128>}, {transform_indices = @transform_7, window_bounds = array<i64: 1, 1, 128>}, {transform_indices = @transform_8, window_bounds = array<i64: 1, 1, 128>}, {transform_indices = @transform_9, window_bounds = array<i64: 1, 128, 512>}, {transform_indices = @transform_10, window_bounds = array<i64: 1, 1, 512>}, {transform_indices = @transform_11, window_bounds = array<i64: 1, 512, 128>}, {transform_indices = @transform_12, window_bounds = array<i64: 1, 1, 128>}, {transform_indices = @transform_13, window_bounds = array<i64: 1, 1, 128>}]} {
    %c0_i32 = arith.constant 0 : i32
    %0 = arith.cmpi eq, %arg1, %c0_i32 : i32
    %1 = arith.extui %0 : i1 to i32
    %c0_i32_0 = arith.constant 0 : i32
    %2 = arith.cmpi ne, %1, %c0_i32_0 : i32
    scf.if %2 {
      %c0_76 = arith.constant 0 : index
      %c0_77 = arith.constant 0 : index
      %c0_78 = arith.constant 0 : index
      %194 = vector.load %arg2[%c0_76, %c0_77, %c0_78] : memref<1x8x128xf32, #tpu.memory_space<vmem>>, vector<1x8x128xf32>
      %195 = vector.shape_cast %194 : vector<1x8x128xf32> to vector<8x128xf32>
      %c0_79 = arith.constant 0 : index
      %c0_80 = arith.constant 0 : index
      %196 = vector.load %arg16[%c0_79, %c0_80] : memref<8x128xf32, #tpu.memory_space<vmem>>, vector<8x128xf32>
      tpu.vector_store %arg16[%c0_79, %c0_80], %195 {strides = array<i32>} : memref<8x128xf32, #tpu.memory_space<vmem>>, vector<8x128xf32>,
    } else {
    }
    %c0 = arith.constant 0 : index
    %c0_1 = arith.constant 0 : index
    %3 = vector.load %arg16[%c0, %c0_1] : memref<8x128xf32, #tpu.memory_space<vmem>>, vector<8x128xf32>
    %c0_2 = arith.constant 0 : index
    %c0_3 = arith.constant 0 : index
    %c0_4 = arith.constant 0 : index
    %4 = vector.load %arg3[%c0_2, %c0_3, %c0_4] : memref<1x1x128xf32, #tpu.memory_space<vmem>>, vector<1x1x128xf32>
    %5 = vector.shape_cast %4 : vector<1x1x128xf32> to vector<1x128xf32>
    %c0_5 = arith.constant 0 : index
    %c0_6 = arith.constant 0 : index
    %c0_7 = arith.constant 0 : index
    %6 = vector.load %arg4[%c0_5, %c0_6, %c0_7] : memref<1x1x128xf32, #tpu.memory_space<vmem>>, vector<1x1x128xf32>
    %7 = vector.shape_cast %6 : vector<1x1x128xf32> to vector<1x128xf32>
    %cst = arith.constant dense<0.000000e+00> : vector<8xf32>
    %8 = vector.multi_reduction <add>, %3, %cst [1] : vector<8x128xf32> to vector<8xf32>
    %9 = vector.shape_cast %8 : vector<8xf32> to vector<8x1xf32>
    %cst_8 = arith.constant 1.280000e+02 : f32
    %10 = vector.broadcast %cst_8 : f32 to vector<8x1xf32>
    %11 = arith.divf %9, %10 : vector<8x1xf32>
    %12 = vector.broadcast %11 : vector<8x1xf32> to vector<8x128xf32>
    %13 = arith.subf %3, %12 : vector<8x128xf32>
    %14 = arith.mulf %13, %13 : vector<8x128xf32>
    %cst_9 = arith.constant dense<0.000000e+00> : vector<8xf32>
    %15 = vector.multi_reduction <add>, %14, %cst_9 [1] : vector<8x128xf32> to vector<8xf32>
    %16 = vector.shape_cast %15 : vector<8xf32> to vector<8x1xf32>
    %cst_10 = arith.constant 1.280000e+02 : f32
    %17 = vector.broadcast %cst_10 : f32 to vector<8x1xf32>
    %18 = arith.divf %16, %17 : vector<8x1xf32>
    %cst_11 = arith.constant 9.99999974E-6 : f32
    %19 = vector.broadcast %cst_11 : f32 to vector<8x1xf32>
    %20 = arith.addf %18, %19 : vector<8x1xf32>
    %21 = math.rsqrt %20 : vector<8x1xf32>
    %22 = vector.broadcast %21 : vector<8x1xf32> to vector<8x128xf32>
    %23 = arith.mulf %13, %22 : vector<8x128xf32>
    %24 = vector.broadcast %5 : vector<1x128xf32> to vector<8x128xf32>
    %25 = arith.mulf %23, %24 : vector<8x128xf32>
    %26 = vector.broadcast %7 : vector<1x128xf32> to vector<8x128xf32>
    %27 = arith.addf %25, %26 : vector<8x128xf32>
    %28 = arith.truncf %27 : vector<8x128xf32> to vector<8x128xbf16>
    %c0_12 = arith.constant 0 : index
    %c0_13 = arith.constant 0 : index
    %c0_14 = arith.constant 0 : index
    %29 = vector.load %arg5[%c0_12, %c0_13, %c0_14] : memref<1x128x384xbf16, #tpu.memory_space<vmem>>, vector<1x128x384xbf16>
    %30 = vector.shape_cast %29 : vector<1x128x384xbf16> to vector<128x384xbf16>
    %cst_15 = arith.constant dense<0.000000e+00> : vector<8x384xf32>
    %31 = tpu.matmul %28, %30, %cst_15 {dimension_numbers = #tpu.dot_dimension_numbers<[1], [0], [0], [1], [0, 0, 1, 1], [], []>} : vector<8x128xbf16>, vector<128x384xbf16>, vector<8x384xf32> -> vector<8x384xf32>
    %c0_16 = arith.constant 0 : index
    %c0_17 = arith.constant 0 : index
    %c0_18 = arith.constant 0 : index
    %32 = vector.load %arg6[%c0_16, %c0_17, %c0_18] : memref<1x1x384xf32, #tpu.memory_space<vmem>>, vector<1x1x384xf32>
    %33 = vector.shape_cast %32 : vector<1x1x384xf32> to vector<1x384xf32>
    %34 = vector.broadcast %33 : vector<1x384xf32> to vector<8x384xf32>
    %35 = arith.addf %31, %34 : vector<8x384xf32>
    %36 = tpu.iota {dimensions = array<i32: 1>} : vector<1x8xi32>
    %c5_i32 = arith.constant 5 : i32
    %37 = vector.broadcast %c5_i32 : i32 to vector<1x8xi32>
    %38 = arith.cmpi slt, %36, %37 : vector<1x8xi32>
    %cst_19 = arith.constant 0.000000e+00 : f32
    %cst_20 = arith.constant -1.000000e+30 : f32
    %39 = vector.broadcast %cst_19 : f32 to vector<1x8xf32>
    %40 = vector.broadcast %cst_20 : f32 to vector<1x8xf32>
    %41 = arith.select %38, %39, %40 : vector<1x8xi1>, vector<1x8xf32>
    %42 = vector.extract_strided_slice %35 {offsets = [0, 0], sizes = [8, 32], strides = [1, 1]} : vector<8x384xf32> to vector<8x32xf32>
    %43 = arith.truncf %42 : vector<8x32xf32> to vector<8x32xbf16>
    %44 = vector.extract_strided_slice %35 {offsets = [0, 128], sizes = [8, 32], strides = [1, 1]} : vector<8x384xf32> to vector<8x32xf32>
    %45 = arith.truncf %44 : vector<8x32xf32> to vector<8x32xbf16>
    %46 = vector.extract_strided_slice %35 {offsets = [0, 256], sizes = [8, 32], strides = [1, 1]} : vector<8x384xf32> to vector<8x32xf32>
    %47 = arith.truncf %46 : vector<8x32xf32> to vector<8x32xbf16>
    %cst_21 = arith.constant dense<0.000000e+00> : vector<8x8xf32>
    %48 = tpu.matmul %43, %45, %cst_21 {dimension_numbers = #tpu.dot_dimension_numbers<[1], [1], [0], [0], [0, 0, 1, 0], [], []>} : vector<8x32xbf16>, vector<8x32xbf16>, vector<8x8xf32> -> vector<8x8xf32>
    %49 = vector.broadcast %41 : vector<1x8xf32> to vector<8x8xf32>
    %50 = arith.addf %48, %49 : vector<8x8xf32>
    %cst_22 = arith.constant dense<0xFF800000> : vector<8xf32>
    %51 = vector.multi_reduction <maximumf>, %50, %cst_22 [1] : vector<8x8xf32> to vector<8xf32>
    %52 = vector.shape_cast %51 : vector<8xf32> to vector<8x1xf32>
    %53 = vector.broadcast %52 : vector<8x1xf32> to vector<8x8xf32>
    %54 = arith.subf %50, %53 : vector<8x8xf32>
    %55 = math.exp %54 : vector<8x8xf32>
    %cst_23 = arith.constant dense<0.000000e+00> : vector<8xf32>
    %56 = vector.multi_reduction <add>, %55, %cst_23 [1] : vector<8x8xf32> to vector<8xf32>
    %57 = vector.shape_cast %56 : vector<8xf32> to vector<8x1xf32>
    %58 = tpu.reciprocal %57 {approx = true} : vector<8x1xf32> -> vector<8x1xf32>
    %59 = arith.truncf %55 : vector<8x8xf32> to vector<8x8xbf16>
    %cst_24 = arith.constant dense<0.000000e+00> : vector<8x32xf32>
    %60 = tpu.matmul %59, %47, %cst_24 {dimension_numbers = #tpu.dot_dimension_numbers<[1], [0], [0], [1], [0, 0, 1, 1], [], []>} : vector<8x8xbf16>, vector<8x32xbf16>, vector<8x32xf32> -> vector<8x32xf32>
    %61 = vector.broadcast %58 : vector<8x1xf32> to vector<8x32xf32>
    %62 = arith.mulf %60, %61 : vector<8x32xf32>
    %63 = vector.extract_strided_slice %35 {offsets = [0, 32], sizes = [8, 32], strides = [1, 1]} : vector<8x384xf32> to vector<8x32xf32>
    %64 = arith.truncf %63 : vector<8x32xf32> to vector<8x32xbf16>
    %65 = vector.extract_strided_slice %35 {offsets = [0, 160], sizes = [8, 32], strides = [1, 1]} : vector<8x384xf32> to vector<8x32xf32>
    %66 = arith.truncf %65 : vector<8x32xf32> to vector<8x32xbf16>
    %67 = vector.extract_strided_slice %35 {offsets = [0, 288], sizes = [8, 32], strides = [1, 1]} : vector<8x384xf32> to vector<8x32xf32>
    %68 = arith.truncf %67 : vector<8x32xf32> to vector<8x32xbf16>
    %cst_25 = arith.constant dense<0.000000e+00> : vector<8x8xf32>
    %69 = tpu.matmul %64, %66, %cst_25 {dimension_numbers = #tpu.dot_dimension_numbers<[1], [1], [0], [0], [0, 0, 1, 0], [], []>} : vector<8x32xbf16>, vector<8x32xbf16>, vector<8x8xf32> -> vector<8x8xf32>
    %70 = vector.broadcast %41 : vector<1x8xf32> to vector<8x8xf32>
    %71 = arith.addf %69, %70 : vector<8x8xf32>
    %cst_26 = arith.constant dense<0xFF800000> : vector<8xf32>
    %72 = vector.multi_reduction <maximumf>, %71, %cst_26 [1] : vector<8x8xf32> to vector<8xf32>
    %73 = vector.shape_cast %72 : vector<8xf32> to vector<8x1xf32>
    %74 = vector.broadcast %73 : vector<8x1xf32> to vector<8x8xf32>
    %75 = arith.subf %71, %74 : vector<8x8xf32>
    %76 = math.exp %75 : vector<8x8xf32>
    %cst_27 = arith.constant dense<0.000000e+00> : vector<8xf32>
    %77 = vector.multi_reduction <add>, %76, %cst_27 [1] : vector<8x8xf32> to vector<8xf32>
    %78 = vector.shape_cast %77 : vector<8xf32> to vector<8x1xf32>
    %79 = tpu.reciprocal %78 {approx = true} : vector<8x1xf32> -> vector<8x1xf32>
    %80 = arith.truncf %76 : vector<8x8xf32> to vector<8x8xbf16>
    %cst_28 = arith.constant dense<0.000000e+00> : vector<8x32xf32>
    %81 = tpu.matmul %80, %68, %cst_28 {dimension_numbers = #tpu.dot_dimension_numbers<[1], [0], [0], [1], [0, 0, 1, 1], [], []>} : vector<8x8xbf16>, vector<8x32xbf16>, vector<8x32xf32> -> vector<8x32xf32>
    %82 = vector.broadcast %79 : vector<8x1xf32> to vector<8x32xf32>
    %83 = arith.mulf %81, %82 : vector<8x32xf32>
    %84 = vector.extract_strided_slice %35 {offsets = [0, 64], sizes = [8, 32], strides = [1, 1]} : vector<8x384xf32> to vector<8x32xf32>
    %85 = arith.truncf %84 : vector<8x32xf32> to vector<8x32xbf16>
    %86 = vector.extract_strided_slice %35 {offsets = [0, 192], sizes = [8, 32], strides = [1, 1]} : vector<8x384xf32> to vector<8x32xf32>
    %87 = arith.truncf %86 : vector<8x32xf32> to vector<8x32xbf16>
    %88 = vector.extract_strided_slice %35 {offsets = [0, 320], sizes = [8, 32], strides = [1, 1]} : vector<8x384xf32> to vector<8x32xf32>
    %89 = arith.truncf %88 : vector<8x32xf32> to vector<8x32xbf16>
    %cst_29 = arith.constant dense<0.000000e+00> : vector<8x8xf32>
    %90 = tpu.matmul %85, %87, %cst_29 {dimension_numbers = #tpu.dot_dimension_numbers<[1], [1], [0], [0], [0, 0, 1, 0], [], []>} : vector<8x32xbf16>, vector<8x32xbf16>, vector<8x8xf32> -> vector<8x8xf32>
    %91 = vector.broadcast %41 : vector<1x8xf32> to vector<8x8xf32>
    %92 = arith.addf %90, %91 : vector<8x8xf32>
    %cst_30 = arith.constant dense<0xFF800000> : vector<8xf32>
    %93 = vector.multi_reduction <maximumf>, %92, %cst_30 [1] : vector<8x8xf32> to vector<8xf32>
    %94 = vector.shape_cast %93 : vector<8xf32> to vector<8x1xf32>
    %95 = vector.broadcast %94 : vector<8x1xf32> to vector<8x8xf32>
    %96 = arith.subf %92, %95 : vector<8x8xf32>
    %97 = math.exp %96 : vector<8x8xf32>
    %cst_31 = arith.constant dense<0.000000e+00> : vector<8xf32>
    %98 = vector.multi_reduction <add>, %97, %cst_31 [1] : vector<8x8xf32> to vector<8xf32>
    %99 = vector.shape_cast %98 : vector<8xf32> to vector<8x1xf32>
    %100 = tpu.reciprocal %99 {approx = true} : vector<8x1xf32> -> vector<8x1xf32>
    %101 = arith.truncf %97 : vector<8x8xf32> to vector<8x8xbf16>
    %cst_32 = arith.constant dense<0.000000e+00> : vector<8x32xf32>
    %102 = tpu.matmul %101, %89, %cst_32 {dimension_numbers = #tpu.dot_dimension_numbers<[1], [0], [0], [1], [0, 0, 1, 1], [], []>} : vector<8x8xbf16>, vector<8x32xbf16>, vector<8x32xf32> -> vector<8x32xf32>
    %103 = vector.broadcast %100 : vector<8x1xf32> to vector<8x32xf32>
    %104 = arith.mulf %102, %103 : vector<8x32xf32>
    %105 = vector.extract_strided_slice %35 {offsets = [0, 96], sizes = [8, 32], strides = [1, 1]} : vector<8x384xf32> to vector<8x32xf32>
    %106 = arith.truncf %105 : vector<8x32xf32> to vector<8x32xbf16>
    %107 = vector.extract_strided_slice %35 {offsets = [0, 224], sizes = [8, 32], strides = [1, 1]} : vector<8x384xf32> to vector<8x32xf32>
    %108 = arith.truncf %107 : vector<8x32xf32> to vector<8x32xbf16>
    %109 = vector.extract_strided_slice %35 {offsets = [0, 352], sizes = [8, 32], strides = [1, 1]} : vector<8x384xf32> to vector<8x32xf32>
    %110 = arith.truncf %109 : vector<8x32xf32> to vector<8x32xbf16>
    %cst_33 = arith.constant dense<0.000000e+00> : vector<8x8xf32>
    %111 = tpu.matmul %106, %108, %cst_33 {dimension_numbers = #tpu.dot_dimension_numbers<[1], [1], [0], [0], [0, 0, 1, 0], [], []>} : vector<8x32xbf16>, vector<8x32xbf16>, vector<8x8xf32> -> vector<8x8xf32>
    %112 = vector.broadcast %41 : vector<1x8xf32> to vector<8x8xf32>
    %113 = arith.addf %111, %112 : vector<8x8xf32>
    %cst_34 = arith.constant dense<0xFF800000> : vector<8xf32>
    %114 = vector.multi_reduction <maximumf>, %113, %cst_34 [1] : vector<8x8xf32> to vector<8xf32>
    %115 = vector.shape_cast %114 : vector<8xf32> to vector<8x1xf32>
    %116 = vector.broadcast %115 : vector<8x1xf32> to vector<8x8xf32>
    %117 = arith.subf %113, %116 : vector<8x8xf32>
    %118 = math.exp %117 : vector<8x8xf32>
    %cst_35 = arith.constant dense<0.000000e+00> : vector<8xf32>
    %119 = vector.multi_reduction <add>, %118, %cst_35 [1] : vector<8x8xf32> to vector<8xf32>
    %120 = vector.shape_cast %119 : vector<8xf32> to vector<8x1xf32>
    %121 = tpu.reciprocal %120 {approx = true} : vector<8x1xf32> -> vector<8x1xf32>
    %122 = arith.truncf %118 : vector<8x8xf32> to vector<8x8xbf16>
    %cst_36 = arith.constant dense<0.000000e+00> : vector<8x32xf32>
    %123 = tpu.matmul %122, %110, %cst_36 {dimension_numbers = #tpu.dot_dimension_numbers<[1], [0], [0], [1], [0, 0, 1, 1], [], []>} : vector<8x8xbf16>, vector<8x32xbf16>, vector<8x32xf32> -> vector<8x32xf32>
    %124 = vector.broadcast %121 : vector<8x1xf32> to vector<8x32xf32>
    %125 = arith.mulf %123, %124 : vector<8x32xf32>
    %126 = tpu.concatenate %62, %83, %104, %125 in 1 : vector<8x32xf32>, vector<8x32xf32>, vector<8x32xf32>, vector<8x32xf32> -> vector<8x128xf32>
    %127 = arith.truncf %126 : vector<8x128xf32> to vector<8x128xbf16>
    %c0_37 = arith.constant 0 : index
    %c0_38 = arith.constant 0 : index
    %c0_39 = arith.constant 0 : index
    %128 = vector.load %arg7[%c0_37, %c0_38, %c0_39] : memref<1x128x128xbf16, #tpu.memory_space<vmem>>, vector<1x128x128xbf16>
    %129 = vector.shape_cast %128 : vector<1x128x128xbf16> to vector<128x128xbf16>
    %cst_40 = arith.constant dense<0.000000e+00> : vector<8x128xf32>
    %130 = tpu.matmul %127, %129, %cst_40 {dimension_numbers = #tpu.dot_dimension_numbers<[1], [0], [0], [1], [0, 0, 1, 1], [], []>} : vector<8x128xbf16>, vector<128x128xbf16>, vector<8x128xf32> -> vector<8x128xf32>
    %c0_41 = arith.constant 0 : index
    %c0_42 = arith.constant 0 : index
    %c0_43 = arith.constant 0 : index
    %131 = vector.load %arg8[%c0_41, %c0_42, %c0_43] : memref<1x1x128xf32, #tpu.memory_space<vmem>>, vector<1x1x128xf32>
    %132 = vector.shape_cast %131 : vector<1x1x128xf32> to vector<1x128xf32>
    %133 = vector.broadcast %132 : vector<1x128xf32> to vector<8x128xf32>
    %134 = arith.addf %130, %133 : vector<8x128xf32>
    %135 = arith.addf %3, %134 : vector<8x128xf32>
    %c0_44 = arith.constant 0 : index
    %c0_45 = arith.constant 0 : index
    %c0_46 = arith.constant 0 : index
    %136 = vector.load %arg9[%c0_44, %c0_45, %c0_46] : memref<1x1x128xf32, #tpu.memory_space<vmem>>, vector<1x1x128xf32>
    %137 = vector.shape_cast %136 : vector<1x1x128xf32> to vector<1x128xf32>
    %c0_47 = arith.constant 0 : index
    %c0_48 = arith.constant 0 : index
    %c0_49 = arith.constant 0 : index
    %138 = vector.load %arg10[%c0_47, %c0_48, %c0_49] : memref<1x1x128xf32, #tpu.memory_space<vmem>>, vector<1x1x128xf32>
    %139 = vector.shape_cast %138 : vector<1x1x128xf32> to vector<1x128xf32>
    %cst_50 = arith.constant dense<0.000000e+00> : vector<8xf32>
    %140 = vector.multi_reduction <add>, %135, %cst_50 [1] : vector<8x128xf32> to vector<8xf32>
    %141 = vector.shape_cast %140 : vector<8xf32> to vector<8x1xf32>
    %cst_51 = arith.constant 1.280000e+02 : f32
    %142 = vector.broadcast %cst_51 : f32 to vector<8x1xf32>
    %143 = arith.divf %141, %142 : vector<8x1xf32>
    %144 = vector.broadcast %143 : vector<8x1xf32> to vector<8x128xf32>
    %145 = arith.subf %135, %144 : vector<8x128xf32>
    %146 = arith.mulf %145, %145 : vector<8x128xf32>
    %cst_52 = arith.constant dense<0.000000e+00> : vector<8xf32>
    %147 = vector.multi_reduction <add>, %146, %cst_52 [1] : vector<8x128xf32> to vector<8xf32>
    %148 = vector.shape_cast %147 : vector<8xf32> to vector<8x1xf32>
    %cst_53 = arith.constant 1.280000e+02 : f32
    %149 = vector.broadcast %cst_53 : f32 to vector<8x1xf32>
    %150 = arith.divf %148, %149 : vector<8x1xf32>
    %cst_54 = arith.constant 9.99999974E-6 : f32
    %151 = vector.broadcast %cst_54 : f32 to vector<8x1xf32>
    %152 = arith.addf %150, %151 : vector<8x1xf32>
    %153 = math.rsqrt %152 : vector<8x1xf32>
    %154 = vector.broadcast %153 : vector<8x1xf32> to vector<8x128xf32>
    %155 = arith.mulf %145, %154 : vector<8x128xf32>
    %156 = vector.broadcast %137 : vector<1x128xf32> to vector<8x128xf32>
    %157 = arith.mulf %155, %156 : vector<8x128xf32>
    %158 = vector.broadcast %139 : vector<1x128xf32> to vector<8x128xf32>
    %159 = arith.addf %157, %158 : vector<8x128xf32>
    %160 = arith.truncf %159 : vector<8x128xf32> to vector<8x128xbf16>
    %c0_55 = arith.constant 0 : index
    %c0_56 = arith.constant 0 : index
    %c0_57 = arith.constant 0 : index
    %161 = vector.load %arg11[%c0_55, %c0_56, %c0_57] : memref<1x128x512xbf16, #tpu.memory_space<vmem>>, vector<1x128x512xbf16>
    %162 = vector.shape_cast %161 : vector<1x128x512xbf16> to vector<128x512xbf16>
    %cst_58 = arith.constant dense<0.000000e+00> : vector<8x512xf32>
    %163 = tpu.matmul %160, %162, %cst_58 {dimension_numbers = #tpu.dot_dimension_numbers<[1], [0], [0], [1], [0, 0, 1, 1], [], []>} : vector<8x128xbf16>, vector<128x512xbf16>, vector<8x512xf32> -> vector<8x512xf32>
    %c0_59 = arith.constant 0 : index
    %c0_60 = arith.constant 0 : index
    %c0_61 = arith.constant 0 : index
    %164 = vector.load %arg12[%c0_59, %c0_60, %c0_61] : memref<1x1x512xf32, #tpu.memory_space<vmem>>, vector<1x1x512xf32>
    %165 = vector.shape_cast %164 : vector<1x1x512xf32> to vector<1x512xf32>
    %166 = vector.broadcast %165 : vector<1x512xf32> to vector<8x512xf32>
    %167 = arith.addf %163, %166 : vector<8x512xf32>
    %168 = arith.mulf %167, %167 : vector<8x512xf32>
    %169 = arith.mulf %167, %168 : vector<8x512xf32>
    %cst_62 = arith.constant 4.471500e-02 : f32
    %170 = vector.broadcast %cst_62 : f32 to vector<8x512xf32>
    %171 = arith.mulf %170, %169 : vector<8x512xf32>
    %172 = arith.addf %167, %171 : vector<8x512xf32>
    %cst_63 = arith.constant 0.797884583 : f32
    %173 = vector.broadcast %cst_63 : f32 to vector<8x512xf32>
    %174 = arith.mulf %173, %172 : vector<8x512xf32>
    %175 = math.tanh %174 : vector<8x512xf32>
    %cst_64 = arith.constant 1.000000e+00 : f32
    %176 = vector.broadcast %cst_64 : f32 to vector<8x512xf32>
    %177 = arith.addf %176, %175 : vector<8x512xf32>
    %cst_65 = arith.constant 5.000000e-01 : f32
    %178 = vector.broadcast %cst_65 : f32 to vector<8x512xf32>
    %179 = arith.mulf %178, %177 : vector<8x512xf32>
    %180 = arith.mulf %167, %179 : vector<8x512xf32>
    %181 = arith.truncf %180 : vector<8x512xf32> to vector<8x512xbf16>
    %c0_66 = arith.constant 0 : index
    %c0_67 = arith.constant 0 : index
    %c0_68 = arith.constant 0 : index
    %182 = vector.load %arg13[%c0_66, %c0_67, %c0_68] : memref<1x512x128xbf16, #tpu.memory_space<vmem>>, vector<1x512x128xbf16>
    %183 = vector.shape_cast %182 : vector<1x512x128xbf16> to vector<512x128xbf16>
    %cst_69 = arith.constant dense<0.000000e+00> : vector<8x128xf32>
    %184 = tpu.matmul %181, %183, %cst_69 {dimension_numbers = #tpu.dot_dimension_numbers<[1], [0], [0], [1], [0, 0, 1, 1], [], []>} : vector<8x512xbf16>, vector<512x128xbf16>, vector<8x128xf32> -> vector<8x128xf32>
    %c0_70 = arith.constant 0 : index
    %c0_71 = arith.constant 0 : index
    %c0_72 = arith.constant 0 : index
    %185 = vector.load %arg14[%c0_70, %c0_71, %c0_72] : memref<1x1x128xf32, #tpu.memory_space<vmem>>, vector<1x1x128xf32>
    %186 = vector.shape_cast %185 : vector<1x1x128xf32> to vector<1x128xf32>
    %187 = vector.broadcast %186 : vector<1x128xf32> to vector<8x128xf32>
    %188 = arith.addf %184, %187 : vector<8x128xf32>
    %189 = arith.addf %135, %188 : vector<8x128xf32>
    %c0_73 = arith.constant 0 : index
    %c0_74 = arith.constant 0 : index
    %190 = vector.load %arg16[%c0_73, %c0_74] : memref<8x128xf32, #tpu.memory_space<vmem>>, vector<8x128xf32>
    tpu.vector_store %arg16[%c0_73, %c0_74], %189 {strides = array<i32>} : memref<8x128xf32, #tpu.memory_space<vmem>>, vector<8x128xf32>,
    %c1_i32 = arith.constant 1 : i32
    %191 = arith.cmpi eq, %arg1, %c1_i32 : i32
    %192 = arith.extui %191 : i1 to i32
    %c0_i32_75 = arith.constant 0 : i32
    %193 = arith.cmpi ne, %192, %c0_i32_75 : i32
    scf.if %193 {
      %194 = vector.extract_strided_slice %189 {offsets = [0, 0], sizes = [5, 128], strides = [1, 1]} : vector<8x128xf32> to vector<5x128xf32>
      %cst_76 = arith.constant dense<0.000000e+00> : vector<128xf32>
      %195 = vector.multi_reduction <add>, %194, %cst_76 [0] : vector<5x128xf32> to vector<128xf32>
      %196 = vector.shape_cast %195 : vector<128xf32> to vector<1x128xf32>
      %cst_77 = arith.constant 2.000000e-01 : f32
      %197 = vector.broadcast %cst_77 : f32 to vector<1x128xf32>
      %198 = arith.mulf %196, %197 : vector<1x128xf32>
      %c0_78 = arith.constant 0 : index
      %c0_79 = arith.constant 0 : index
      %c0_80 = arith.constant 0 : index
      %199 = vector.load %arg15[%c0_78, %c0_79, %c0_80] : memref<1x1x128xf32, #tpu.memory_space<vmem>>, vector<1x1x128xf32>
      %200 = vector.shape_cast %199 : vector<1x1x128xf32> to vector<1x128xf32>
      %201 = vector.shape_cast %198 : vector<1x128xf32> to vector<1x1x128xf32>
      tpu.vector_store %arg15[%c0_78, %c0_79, %c0_80], %201 {strides = array<i32>} : memref<1x1x128xf32, #tpu.memory_space<vmem>>, vector<1x1x128xf32>,
    } else {
    }
    return
  }
  func.func @transform_0(%arg0: i32, %arg1: i32) -> (i32, i32, i32) {
    %c0_i32 = arith.constant 0 : i32
    %c0_i32_0 = arith.constant 0 : i32
    %c0_i32_1 = arith.constant 0 : i32
    return %arg0, %c0_i32, %c0_i32_0 : i32, i32, i32
  }
  func.func @transform_1(%arg0: i32, %arg1: i32) -> (i32, i32, i32) {
    %c0_i32 = arith.constant 0 : i32
    %c0_i32_0 = arith.constant 0 : i32
    %c0_i32_1 = arith.constant 0 : i32
    return %arg1, %c0_i32, %c0_i32_0 : i32, i32, i32
  }
  func.func @transform_2(%arg0: i32, %arg1: i32) -> (i32, i32, i32) {
    %c0_i32 = arith.constant 0 : i32
    %c0_i32_0 = arith.constant 0 : i32
    %c0_i32_1 = arith.constant 0 : i32
    return %arg1, %c0_i32, %c0_i32_0 : i32, i32, i32
  }
  func.func @transform_3(%arg0: i32, %arg1: i32) -> (i32, i32, i32) {
    %c0_i32 = arith.constant 0 : i32
    %c0_i32_0 = arith.constant 0 : i32
    %c0_i32_1 = arith.constant 0 : i32
    return %arg1, %c0_i32, %c0_i32_0 : i32, i32, i32
  }
  func.func @transform_4(%arg0: i32, %arg1: i32) -> (i32, i32, i32) {
    %c0_i32 = arith.constant 0 : i32
    %c0_i32_0 = arith.constant 0 : i32
    %c0_i32_1 = arith.constant 0 : i32
    return %arg1, %c0_i32, %c0_i32_0 : i32, i32, i32
  }
  func.func @transform_5(%arg0: i32, %arg1: i32) -> (i32, i32, i32) {
    %c0_i32 = arith.constant 0 : i32
    %c0_i32_0 = arith.constant 0 : i32
    %c0_i32_1 = arith.constant 0 : i32
    return %arg1, %c0_i32, %c0_i32_0 : i32, i32, i32
  }
  func.func @transform_6(%arg0: i32, %arg1: i32) -> (i32, i32, i32) {
    %c0_i32 = arith.constant 0 : i32
    %c0_i32_0 = arith.constant 0 : i32
    %c0_i32_1 = arith.constant 0 : i32
    return %arg1, %c0_i32, %c0_i32_0 : i32, i32, i32
  }
  func.func @transform_7(%arg0: i32, %arg1: i32) -> (i32, i32, i32) {
    %c0_i32 = arith.constant 0 : i32
    %c0_i32_0 = arith.constant 0 : i32
    %c0_i32_1 = arith.constant 0 : i32
    return %arg1, %c0_i32, %c0_i32_0 : i32, i32, i32
  }
  func.func @transform_8(%arg0: i32, %arg1: i32) -> (i32, i32, i32) {
    %c0_i32 = arith.constant 0 : i32
    %c0_i32_0 = arith.constant 0 : i32
    %c0_i32_1 = arith.constant 0 : i32
    return %arg1, %c0_i32, %c0_i32_0 : i32, i32, i32
  }
  func.func @transform_9(%arg0: i32, %arg1: i32) -> (i32, i32, i32) {
    %c0_i32 = arith.constant 0 : i32
    %c0_i32_0 = arith.constant 0 : i32
    %c0_i32_1 = arith.constant 0 : i32
    return %arg1, %c0_i32, %c0_i32_0 : i32, i32, i32
  }
  func.func @transform_10(%arg0: i32, %arg1: i32) -> (i32, i32, i32) {
    %c0_i32 = arith.constant 0 : i32
    %c0_i32_0 = arith.constant 0 : i32
    %c0_i32_1 = arith.constant 0 : i32
    return %arg1, %c0_i32, %c0_i32_0 : i32, i32, i32
  }
  func.func @transform_11(%arg0: i32, %arg1: i32) -> (i32, i32, i32) {
    %c0_i32 = arith.constant 0 : i32
    %c0_i32_0 = arith.constant 0 : i32
    %c0_i32_1 = arith.constant 0 : i32
    return %arg1, %c0_i32, %c0_i32_0 : i32, i32, i32
  }
  func.func @transform_12(%arg0: i32, %arg1: i32) -> (i32, i32, i32) {
    %c0_i32 = arith.constant 0 : i32
    %c0_i32_0 = arith.constant 0 : i32
    %c0_i32_1 = arith.constant 0 : i32
    return %arg1, %c0_i32, %c0_i32_0 : i32, i32, i32
  }
  func.func @transform_13(%arg0: i32, %arg1: i32) -> (i32, i32, i32) {
    %c0_i32 = arith.constant 0 : i32
    %c0_i32_0 = arith.constant 0 : i32
    %c0_i32_1 = arith.constant 0 : i32
    return %arg0, %c0_i32, %c0_i32_0 : i32, i32, i32
  }
}

</mosaic_0001>

<llo_original>
// kernel: clip_vision_encoder_forward.2
$region0: #{clip_vision_encoder_forward.2}
  #allocation0 [shape = 'u32[]', space=smem, size = 0x4, offset = 0x4, fixed_abs, tag = 'smem constant byte address 0x4 - core index']
  #allocation1 [shape = 'u32[144,128]{1,0:T(1,128)}', space=vmem, size = 0x12000, scoped, tag = 'internal scratch']
  %s0 = inlined_call_operand.vmem [shape: f32[2,4,192], index: 0, kind: input, shape index: {}]
  %s1 = inlined_call_operand.hbm [shape: bf16[192,128], index: 1, kind: input, shape index: {}]
  %s2 = inlined_call_operand.hbm [shape: f32[1,128], index: 2, kind: input, shape index: {}]
  %s3 = inlined_call_operand.vmem [shape: f32[5,128], index: 3, kind: input, shape index: {}]
  %s4 = inlined_call_operand.vmem [shape: f32[1,128], index: 4, kind: input, shape index: {}]
  %s5 = inlined_call_operand.hbm [shape: f32[1,128], index: 5, kind: input, shape index: {}]
  %s6 = inlined_call_operand.vmem [shape: f32[2,8,128], index: 6, kind: output, shape index: {}]
  %s7 = sld [smem:[#allocation0]]
  $region69: #{clip_vision_encoder_forward.2} parent=0
    _
  %s9 = ssub.s32 1, %s7
  %s10 = scalar_select 0, %s9, %s7
  $region1: #{clip_vision_encoder_forward.2} parent=0
    #allocation2 [shape = 'u8[49152]{0}', space=vmem, size = 0xc000, scoped, tag = 'input window, operand 1, single buffered']
    #allocation3 [shape = 's32[2]{0}', space=sflag, size = 0x8, scoped, tag = 'scoped memory for clip_vision_encoder_forward.2']
    #allocation4 [shape = 'u8[512]{0}', space=vmem, size = 0x400, scoped, tag = 'input window, operand 2, single buffered']
    #allocation5 [shape = 's32[1]{0}', space=sflag, size = 0x4, scoped, tag = 'scoped memory for clip_vision_encoder_forward.2']
    #allocation6 [shape = 'u8[512]{0}', space=vmem, size = 0x400, scoped, tag = 'input window, operand 5, single buffered']
    %11 = vsyncpa [#allocation3], 0
    %12 = vsyncpa [#allocation5], 0
    loop: start=0, step=1, limit=4
    $region2: #{clip_vision_encoder_forward.2} parent=1 // loop_pre_header
      _
    $region3: #{clip_vision_encoder_forward.2} parent=1 // loop_header
      %s14 = sphi 0, %s18
      %p15 = scmp.ge.s32.totalorder %s14, 4
      %s24 = sphi 0, %s26
      %s27 = sphi 0, %s24
      %s28 = sphi 0, %s27
      %s44 = sphi 0, %s28
      %s48 = sphi 0, %s48
      %s50 = sphi 0, %s48
      %s51 = sphi 0, %s50
      %s65 = sphi 0, %s51
      %s69 = sphi 0, %s69
      %s71 = sphi 0, %s69
      %s72 = sphi 0, %s71
      %s86 = sphi 0, %s72
      %s90 = sphi 0, %s90
      %s92 = sphi 0, %s90
      %s93 = sphi 0, %s92
      %s107 = sphi 0, %s93
      %s111 = sphi 0, %s111
      %s113 = sphi 0, %s111
      %s114 = sphi 0, %s113
      %s128 = sphi 0, %s114
      %s132 = sphi 0, %s132
      %s134 = sphi 0, %s132
      %s135 = sphi 0, %s134
      %s149 = sphi 0, %s135
      %s155 = sphi 0, %s157
      %s158 = sphi 0, %s155
      %s159 = sphi 0, %s158
      %s175 = sphi 0, %s159
    $region4: #{clip_vision_encoder_forward.2} parent=1 // loop_header_branch
      %17 = sbr.rel (%p15) target = $region8
    $region5: #{clip_vision_encoder_forward.2} parent=1 // loop_body
      %s19 = ssub.s32 %s14, 1
      %s20 = ssub.s32 %s14, 2
      %s21 = sadd.s32 %s14, 1
      %s22 = ssub.s32 %s14, %s21
      %p23 = scmp.eq.s32.totalorder %s22, 0
      %s25 = sadd.s32 %s24, 1
      %s26 = scalar_select %p23, %s24, %s25
      %p29 = pneg %p23
      %p30 = scmp.eq.s32.totalorder %s14, 1
      %p31 = por %p29, %p30
      %p32 = scmp.ne.s32.totalorder %s24, %s27
      %p33 = scmp.eq.s32.totalorder %s14, 0
      %p34 = por %p32, %p33
      %p35 = scmp.ne.s32.totalorder %s24, %s27
      %p36 = scmp.eq.s32.totalorder %s19, 1
      %p37 = por %p35, %p36
      %p38 = scmp.ne.s32.totalorder %s27, %s28
      %p39 = scmp.eq.s32.totalorder %s19, 0
      %p40 = por %p38, %p39
      %p41 = scmp.ne.s32.totalorder %s27, %s28
      %p42 = scmp.eq.s32.totalorder %s20, 1
      %p43 = por %p41, %p42
      %p45 = scmp.ne.s32.totalorder %s28, %s44
      %p46 = scmp.eq.s32.totalorder %s20, 0
      %p47 = por %p45, %p46
      %s49 = sadd.s32 %s48, 1
      %p52 = scmp.eq.s32.totalorder %s14, 1
      %p53 = scmp.ne.s32.totalorder %s48, %s50
      %p54 = scmp.eq.s32.totalorder %s14, 0
      %p55 = por %p53, %p54
      %p56 = scmp.ne.s32.totalorder %s48, %s50
      %p57 = scmp.eq.s32.totalorder %s19, 1
      %p58 = por %p56, %p57
      %p59 = scmp.ne.s32.totalorder %s50, %s51
      %p60 = scmp.eq.s32.totalorder %s19, 0
      %p61 = por %p59, %p60
      %p62 = scmp.ne.s32.totalorder %s50, %s51
      %p63 = scmp.eq.s32.totalorder %s20, 1
      %p64 = por %p62, %p63
      %p66 = scmp.ne.s32.totalorder %s51, %s65
      %p67 = scmp.eq.s32.totalorder %s20, 0
      %p68 = por %p66, %p67
      %s70 = sadd.s32 %s69, 1
      %p73 = scmp.eq.s32.totalorder %s14, 1
      %p74 = scmp.ne.s32.totalorder %s69, %s71
      %p75 = scmp.eq.s32.totalorder %s14, 0
      %p76 = por %p74, %p75
      %p77 = scmp.ne.s32.totalorder %s69, %s71
      %p78 = scmp.eq.s32.totalorder %s19, 1
      %p79 = por %p77, %p78
      %p80 = scmp.ne.s32.totalorder %s71, %s72
      %p81 = scmp.eq.s32.totalorder %s19, 0
      %p82 = por %p80, %p81
      %p83 = scmp.ne.s32.totalorder %s71, %s72
      %p84 = scmp.eq.s32.totalorder %s20, 1
      %p85 = por %p83, %p84
      %p87 = scmp.ne.s32.totalorder %s72, %s86
      %p88 = scmp.eq.s32.totalorder %s20, 0
      %p89 = por %p87, %p88
      %s91 = sadd.s32 %s90, 1
      %p94 = scmp.eq.s32.totalorder %s14, 1
      %p95 = scmp.ne.s32.totalorder %s90, %s92
      %p96 = scmp.eq.s32.totalorder %s14, 0
      %p97 = por %p95, %p96
      %p98 = scmp.ne.s32.totalorder %s90, %s92
      %p99 = scmp.eq.s32.totalorder %s19, 1
      %p100 = por %p98, %p99
      %p101 = scmp.ne.s32.totalorder %s92, %s93
      %p102 = scmp.eq.s32.totalorder %s19, 0
      %p103 = por %p101, %p102
      %p104 = scmp.ne.s32.totalorder %s92, %s93
      %p105 = scmp.eq.s32.totalorder %s20, 1
      %p106 = por %p104, %p105
      %p108 = scmp.ne.s32.totalorder %s93, %s107
      %p109 = scmp.eq.s32.totalorder %s20, 0
      %p110 = por %p108, %p109
      %s112 = sadd.s32 %s111, 1
      %p115 = scmp.eq.s32.totalorder %s14, 1
      %p116 = scmp.ne.s32.totalorder %s111, %s113
      %p117 = scmp.eq.s32.totalorder %s14, 0
      %p118 = por %p116, %p117
      %p119 = scmp.ne.s32.totalorder %s111, %s113
      %p120 = scmp.eq.s32.totalorder %s19, 1
      %p121 = por %p119, %p120
      %p122 = scmp.ne.s32.totalorder %s113, %s114
      %p123 = scmp.eq.s32.totalorder %s19, 0
      %p124 = por %p122, %p123
      %p125 = scmp.ne.s32.totalorder %s113, %s114
      %p126 = scmp.eq.s32.totalorder %s20, 1
      %p127 = por %p125, %p126
      %p129 = scmp.ne.s32.totalorder %s114, %s128
      %p130 = scmp.eq.s32.totalorder %s20, 0
      %p131 = por %p129, %p130
      %s133 = sadd.s32 %s132, 1
      %p136 = scmp.eq.s32.totalorder %s14, 1
      %p137 = scmp.ne.s32.totalorder %s132, %s134
      %p138 = scmp.eq.s32.totalorder %s14, 0
      %p139 = por %p137, %p138
      %p140 = scmp.ne.s32.totalorder %s132, %s134
      %p141 = scmp.eq.s32.totalorder %s19, 1
      %p142 = por %p140, %p141
      %p143 = scmp.ne.s32.totalorder %s134, %s135
      %p144 = scmp.eq.s32.totalorder %s19, 0
      %p145 = por %p143, %p144
      %p146 = scmp.ne.s32.totalorder %s134, %s135
      %p147 = scmp.eq.s32.totalorder %s20, 1
      %p148 = por %p146, %p147
      %p150 = scmp.ne.s32.totalorder %s135, %s149
      %p151 = scmp.eq.s32.totalorder %s20, 0
      %p152 = por %p150, %p151
      %s153 = ssub.s32 %s14, %s21
      %p154 = scmp.eq.s32.totalorder %s153, 0
      %s156 = sadd.s32 %s155, 1
      %s157 = scalar_select %p154, %s155, %s156
      %p160 = pneg %p154
      %p161 = scmp.eq.s32.totalorder %s14, 1
      %p162 = por %p160, %p161
      %p163 = scmp.ne.s32.totalorder %s155, %s158
      %p164 = scmp.eq.s32.totalorder %s14, 0
      %p165 = por %p163, %p164
      %p166 = scmp.ne.s32.totalorder %s155, %s158
      %p167 = scmp.eq.s32.totalorder %s19, 1
      %p168 = por %p166, %p167
      %p169 = scmp.ne.s32.totalorder %s158, %s159
      %p170 = scmp.eq.s32.totalorder %s19, 0
      %p171 = por %p169, %p170
      %p172 = scmp.ne.s32.totalorder %s158, %s159
      %p173 = scmp.eq.s32.totalorder %s20, 1
      %p174 = por %p172, %p173
      %p176 = scmp.ne.s32.totalorder %s159, %s175
      %p177 = scmp.eq.s32.totalorder %s20, 0
      %p178 = por %p176, %p177
      %p179 = scmp.le.s32.totalorder 1, %s14
      %p180 = scmp.lt.s32.totalorder %s14, 3
      %p181 = pnand %p179, %p180
      %p182 = pneg %p181
      // Predicated region
      $region9: #{clip_vision_encoder_forward.2} parent=5 // pred_check
        _
      $region10: #{clip_vision_encoder_forward.2} parent=5 // pred_check_branch
        %184 = sbr.rel (%p181) target = $region12
      $region11: #{clip_vision_encoder_forward.2} parent=5 // pred_region
        %s185 = ssub.s32 %s14, 1
        // Predicated region
        $region13: #{clip_vision_encoder_forward.2} parent=11 // pred_check
          %p186 = pneg %p61
        $region14: #{clip_vision_encoder_forward.2} parent=11 // pred_check_branch
          %188 = sbr.rel (%p186) target = $region16
        $region15: #{clip_vision_encoder_forward.2} parent=11 // pred_region
          %s190 = ssub.s32 1536, 1536
          %191 = vsyncadd [#allocation3], %s190
          %s192 = sshll.u32 [#allocation2], 4
          %s193 = int_to_ptr.vmem [resolvable:$true] %s192
          %198 = dma.hbm_to_vmem [thread:$0]  %s1, 1536, %s193, [#allocation3], 64, 64, 4
        $region16: #{clip_vision_encoder_forward.2} parent=11 // pred_fallthru
          _
        // Predicated region
        $region17: #{clip_vision_encoder_forward.2} parent=11 // pred_check
          %p199 = pneg %p82
        $region18: #{clip_vision_encoder_forward.2} parent=11 // pred_check_branch
          %201 = sbr.rel (%p199) target = $region20
        $region19: #{clip_vision_encoder_forward.2} parent=11 // pred_region
          %s203 = ssub.s32 16, 16
          %204 = vsyncadd [#allocation5], %s203
          %s206 = sshll.u32 [#allocation4], 4
          %s207 = int_to_ptr.vmem [resolvable:$true] %s206
          %209 = dma.hbm_to_vmem [thread:$0]  %s2, 16, %s207, [#allocation5]
        $region20: #{clip_vision_encoder_forward.2} parent=11 // pred_fallthru
          _
        // Predicated region
        $region21: #{clip_vision_encoder_forward.2} parent=11 // pred_check
          %p210 = pneg %p103
        $region22: #{clip_vision_encoder_forward.2} parent=11 // pred_check_branch
          %212 = sbr.rel (%p210) target = $region24
        $region23: #{clip_vision_encoder_forward.2} parent=11 // pred_region
          _
        $region24: #{clip_vision_encoder_forward.2} parent=11 // pred_fallthru
          _
        // Predicated region
        $region25: #{clip_vision_encoder_forward.2} parent=11 // pred_check
          %p213 = pneg %p124
        $region26: #{clip_vision_encoder_forward.2} parent=11 // pred_check_branch
          %215 = sbr.rel (%p213) target = $region28
        $region27: #{clip_vision_encoder_forward.2} parent=11 // pred_region
          _
        $region28: #{clip_vision_encoder_forward.2} parent=11 // pred_fallthru
          _
        // Predicated region
        $region29: #{clip_vision_encoder_forward.2} parent=11 // pred_check
          %p216 = pneg %p145
        $region30: #{clip_vision_encoder_forward.2} parent=11 // pred_check_branch
          %218 = sbr.rel (%p216) target = $region32
        $region31: #{clip_vision_encoder_forward.2} parent=11 // pred_region
          %s220 = ssub.s32 16, 16
          %221 = vsyncadd [#allocation5], %s220
          %s223 = sshll.u32 [#allocation6], 4
          %s224 = int_to_ptr.vmem [resolvable:$true] %s223
          %226 = dma.hbm_to_vmem [thread:$0]  %s5, 16, %s224, [#allocation5]
        $region32: #{clip_vision_encoder_forward.2} parent=11 // pred_fallthru
          _
      $region12: #{clip_vision_encoder_forward.2} parent=5 // pred_fallthru
        _
      %p227 = scmp.lt.s32.totalorder %s14, 2
      // Predicated region
      $region33: #{clip_vision_encoder_forward.2} parent=5 // pred_check
        %p228 = pneg %p227
      $region34: #{clip_vision_encoder_forward.2} parent=5 // pred_check_branch
        %230 = sbr.rel (%p228) target = $region36
      $region35: #{clip_vision_encoder_forward.2} parent=5 // pred_region
        // Predicated region
        $region37: #{clip_vision_encoder_forward.2} parent=35 // pred_check
          %p231 = pneg %p34
        $region38: #{clip_vision_encoder_forward.2} parent=35 // pred_check_branch
          %233 = sbr.rel (%p231) target = $region40
        $region39: #{clip_vision_encoder_forward.2} parent=35 // pred_region
          %p234 = scmp.lt.s32.totalorder %s14, 1
          %s235 = scalar_select %p234, %s14, 1
          %s236 = smul.addr %s235, 2
          %s237 = smul.addr %s236, 4
          %s238 = scalar_lea.vmem %s0, %s237
        $region40: #{clip_vision_encoder_forward.2} parent=35 // pred_fallthru
          _
      $region36: #{clip_vision_encoder_forward.2} parent=5 // pred_fallthru
        _
      %p239 = scmp.le.s32.totalorder 1, %s14
      %p240 = scmp.lt.s32.totalorder %s14, 3
      %p241 = pnand %p239, %p240
      %p242 = pneg %p241
      // Predicated region
      $region41: #{clip_vision_encoder_forward.2} parent=5 // pred_check
        _
      $region42: #{clip_vision_encoder_forward.2} parent=5 // pred_check_branch
        %244 = sbr.rel (%p241) target = $region44
      $region43: #{clip_vision_encoder_forward.2} parent=5 // pred_region
        %s245 = ssub.s32 %s14, 1
        // Predicated region
        $region45: #{clip_vision_encoder_forward.2} parent=43 // pred_check
          %p246 = pneg %p61
        $region46: #{clip_vision_encoder_forward.2} parent=43 // pred_check_branch
          %248 = sbr.rel (%p246) target = $region48
        $region47: #{clip_vision_encoder_forward.2} parent=43 // pred_region
          %249 = dma.done [#allocation3], 1536
        $region48: #{clip_vision_encoder_forward.2} parent=43 // pred_fallthru
          _
        // Predicated region
        $region49: #{clip_vision_encoder_forward.2} parent=43 // pred_check
          %p250 = pneg %p82
        $region50: #{clip_vision_encoder_forward.2} parent=43 // pred_check_branch
          %252 = sbr.rel (%p250) target = $region52
        $region51: #{clip_vision_encoder_forward.2} parent=43 // pred_region
          %253 = dma.done [#allocation5], 16
        $region52: #{clip_vision_encoder_forward.2} parent=43 // pred_fallthru
          _
        // Predicated region
        $region53: #{clip_vision_encoder_forward.2} parent=43 // pred_check
          %p254 = pneg %p145
        $region54: #{clip_vision_encoder_forward.2} parent=43 // pred_check_branch
          %256 = sbr.rel (%p254) target = $region56
        $region55: #{clip_vision_encoder_forward.2} parent=43 // pred_region
          %257 = dma.done [#allocation5], 16
        $region56: #{clip_vision_encoder_forward.2} parent=43 // pred_fallthru
          _
        %p258 = scmp.lt.s32.totalorder %s19, 1
        %s259 = scalar_select %p258, %s19, 1
        %s260 = smul.addr %s259, 2
        %s261 = smul.addr %s260, 4
        %s262 = scalar_lea.vmem %s0, %s261
        %p263 = pneg %p40
        %p264 = pneg %p37
        %p265 = pneg %p61
        %p266 = pneg %p58
        %p267 = pneg %p82
        %p268 = pneg %p79
        %p269 = pneg %p103
        %p270 = pneg %p100
        %p271 = pneg %p124
        %p272 = pneg %p121
        %p273 = pneg %p145
        %p274 = pneg %p142
        %p275 = pneg %p171
        %p276 = pneg %p168
        %p277 = scmp.lt.s32.totalorder %s19, 1
        %s278 = scalar_select %p277, %s19, 1
        %s279 = smul.addr %s278, 8
        %s280 = scalar_lea.vmem %s6, %s279
        %p281 = scmp.lt.s32.totalorder %s19, 1
        %s282 = scalar_select %p281, %s19, 1
        %s283 = smul.addr %s282, 2
        %s284 = smul.addr %s283, 4
        %s285 = scalar_lea.vmem %s0, %s284
        %p286 = scmp.lt.s32.totalorder %s19, 1
        %s287 = scalar_select %p286, %s19, 1
        %s288 = smul.addr %s287, 8
        %s289 = scalar_lea.vmem %s6, %s288
        %v291 = vld [vmem:[%s285] sm:$0xff]
        %v293 = vcombine.high %v291, %v291
        %v295 = vpack.c.bf16 %v291, %v291
        %v296 = vpack.c.bf16 %v293, %v293
        %v297 = vld [vmem:[#allocation2] sm:$0xf]
        %v298 = vld [vmem:[#allocation2 + $0x4] sm:$0xf]
        %v299 = vld [vmem:[#allocation2 + $0x8] sm:$0xf]
        %v300 = vld [vmem:[#allocation2 + $0xc] sm:$0xf]
        %v301 = vld [vmem:[#allocation2 + $0x10] sm:$0xf]
        %v302 = vld [vmem:[#allocation2 + $0x14] sm:$0xf]
        %v303 = vld [vmem:[#allocation2 + $0x18] sm:$0xf]
        %v304 = vld [vmem:[#allocation2 + $0x1c] sm:$0xf]
        %v305 = vld [vmem:[#allocation2 + $0x20] sm:$0xf]
        %v306 = vld [vmem:[#allocation2 + $0x24] sm:$0xf]
        %v307 = vld [vmem:[#allocation2 + $0x28] sm:$0xf]
        %v308 = vld [vmem:[#allocation2 + $0x2c] sm:$0xf]
        %v309 = vld [vmem:[#allocation2 + $0x30] sm:$0xf]
        %v310 = vld [vmem:[#allocation2 + $0x34] sm:$0xf]
        %v311 = vld [vmem:[#allocation2 + $0x38] sm:$0xf]
        %v312 = vld [vmem:[#allocation2 + $0x3c] sm:$0xf]
        %v313 = vld [vmem:[#allocation2 + $0x40] sm:$0xf]
        %v314 = vld [vmem:[#allocation2 + $0x44] sm:$0xf]
        %v315 = vld [vmem:[#allocation2 + $0x48] sm:$0xf]
        %v316 = vld [vmem:[#allocation2 + $0x4c] sm:$0xf]
        %v317 = vld [vmem:[#allocation2 + $0x50] sm:$0xf]
        %v318 = vld [vmem:[#allocation2 + $0x54] sm:$0xf]
        %v319 = vld [vmem:[#allocation2 + $0x58] sm:$0xf]
        %v320 = vld [vmem:[#allocation2 + $0x5c] sm:$0xf]
        %v345 = vunpack.c.l.b16 %v297
        %v346 = vunpack.c.l.b16 %v298
        %v347 = vunpack.c.l.b16 %v299
        %v348 = vunpack.c.l.b16 %v300
        %v349 = vunpack.c.l.b16 %v301
        %v350 = vunpack.c.l.b16 %v302
        %v351 = vunpack.c.l.b16 %v303
        %v352 = vunpack.c.l.b16 %v304
        %v353 = vunpack.c.l.b16 %v305
        %v354 = vunpack.c.l.b16 %v306
        %v355 = vunpack.c.l.b16 %v307
        %v356 = vunpack.c.l.b16 %v308
        %v357 = vunpack.c.l.b16 %v309
        %v358 = vunpack.c.l.b16 %v310
        %v359 = vunpack.c.l.b16 %v311
        %v360 = vunpack.c.l.b16 %v312
        %v361 = vunpack.c.l.b16 %v313
        %v362 = vunpack.c.l.b16 %v314
        %v363 = vunpack.c.l.b16 %v315
        %v364 = vunpack.c.l.b16 %v316
        %v365 = vunpack.c.l.b16 %v317
        %v366 = vunpack.c.l.b16 %v318
        %v367 = vunpack.c.l.b16 %v319
        %v368 = vunpack.c.l.b16 %v320
        %v369 = vpack.c.b16 %v346, %v345
        %v370 = vpack.c.b16 %v348, %v347
        %v371 = vpack.c.b16 %v350, %v349
        %v372 = vpack.c.b16 %v352, %v351
        %v373 = vpack.c.b16 %v354, %v353
        %v374 = vpack.c.b16 %v356, %v355
        %v375 = vpack.c.b16 %v358, %v357
        %v376 = vpack.c.b16 %v360, %v359
        %v377 = vpack.c.b16 %v362, %v361
        %v378 = vpack.c.b16 %v364, %v363
        %v379 = vpack.c.b16 %v366, %v365
        %v380 = vpack.c.b16 %v368, %v367
        %vm393 = vcmask 523264
        %v395 = vsel %vm393, %v296, 0
        %397 = vmatprep.subr.bf16.mxu0 0
        %398 = vmatpush1.bf16.msra.mxu0 %v376
        %399 = vmatprep.subr.bf16.mxu0 0
        %400 = vmatpush1.bf16.msra.mxu0 %v375
        %401 = vmatprep.subr.bf16.mxu0 0
        %402 = vmatpush1.bf16.msra.mxu0 %v374
        %403 = vmatprep.subr.bf16.mxu0 0
        %404 = vmatpush1.bf16.msra.mxu0 %v373
        %405 = vmatprep.subr.bf16.mxu0 0
        %406 = vmatpush1.bf16.msra.mxu0 %v372
        %407 = vmatprep.subr.bf16.mxu0 0
        %408 = vmatpush1.bf16.msra.mxu0 %v371
        %409 = vmatprep.subr.bf16.mxu0 0
        %410 = vmatpush1.bf16.msra.mxu0 %v370
        %411 = vmatprep.subr.bf16.mxu0 0
        %412 = vmatpush1.bf16.msra.mxu0 %v369
        %413 = vmatprep.subr.bf16.mxu0 0
        %414 = vmatpush2.bf16.msra.mxu0 0
        %415 = vmatprep.subr.bf16.mxu0 0
        %416 = vmatpush2.bf16.msra.mxu0 0
        %417 = vmatprep.subr.bf16.mxu0 0
        %418 = vmatpush2.bf16.msra.mxu0 0
        %419 = vmatprep.subr.bf16.mxu0 0
        %420 = vmatpush2.bf16.msra.mxu0 0
        %421 = vmatprep.subr.bf16.mxu0 0
        %422 = vmatpush2.bf16.msra.mxu0 %v380
        %423 = vmatprep.subr.bf16.mxu0 0
        %424 = vmatpush2.bf16.msra.mxu0 %v379
        %425 = vmatprep.subr.bf16.mxu0 0
        %426 = vmatpush2.bf16.msra.mxu0 %v378
        %427 = vmatprep.subr.bf16.mxu0 0
        %428 = vmatpush2.bf16.msra.mxu0 %v377
        %429 = vmatprep.mubr.bf16.mxu0 %v395
        %430 = vmatmul.mubr.bf16.gmra.mxu0 %v295
        %v431 = vpop.f32.mrf.mxu0
        %v432 = vadd.f32 0.0, %v431
        %v433 = vpop.f32.mrf.mxu0
        %v434 = vpop.f32.mrf.mxu0
        %v435 = vpop.f32.mrf.mxu0
        %436 = vdwg.mxu0
        %v437 = vld [vmem:[#allocation4] sm:$0x1]
        %v439 = vrot.slane %v432, 7
        %vm441 = vcmask 1040384
        %v442 = vsel %vm441, %v437, %v439
        %v443 = vld [vmem:[%s3] sm:$0x1f]
        %v444 = vadd.f32 %v442, %v443
        %v445 = vld [vmem:[%s4] sm:$0x1]
        %v446 = vld [vmem:[#allocation6] sm:$0x1]
        %vm447 = vcmask 1044480
        %v448 = vsel %vm447, %v444, 0.0
        %449 = vadd.xlane.f32.xlu0 %v448
        %v450 = vpop.xlane.xlu0 %449
        %v451 = vrcp.pop 128.0
        %v452 = vmul.f32 %v450, %v451
        %v453 = vsub.f32 %v444, %v452
        %v454 = vmul.f32 %v453, %v453
        %v455 = vsel %vm447, %v454, 0.0
        %456 = vadd.xlane.f32.xlu0 %v455
        %v457 = vpop.xlane.xlu0 %456
        %v458 = vmul.f32 %v457, %v451
        %v459 = vadd.f32 %v458, 1e-05
        %v460 = vrsqrt.pop %v459
        %v461 = vmul.f32 %v453, %v460
        %v463 = vlaneseq
        %v464 = vshrl.u32 %v463, 7
        %v465 = vsub.s32 0, %v464
        %v466 = vrot.slane %v445, %v465
        %v468 = vmul.f32 %v461, %v466
        %v470 = vlaneseq
        %v471 = vshrl.u32 %v470, 7
        %v472 = vsub.s32 0, %v471
        %v473 = vrot.slane %v446, %v472
        %v475 = vadd.f32 %v468, %v473
        %v476 = vsel %vm447, %v475, 0.0
        %477 = vst [vmem:[%s289] sm:$0xff] %v476
        %p478 = scmp.lt.s32.totalorder %s19, 1
        %s479 = scalar_select %p478, %s19, 1
        %s480 = smul.addr %s479, 8
        %s481 = scalar_lea.vmem %s6, %s480
        // Predicated region
        $region57: #{clip_vision_encoder_forward.2} parent=43 // pred_check
          %p482 = pneg %p168
        $region58: #{clip_vision_encoder_forward.2} parent=43 // pred_check_branch
          %484 = sbr.rel (%p482) target = $region60
        $region59: #{clip_vision_encoder_forward.2} parent=43 // pred_region
          _
        $region60: #{clip_vision_encoder_forward.2} parent=43 // pred_fallthru
          _
      $region44: #{clip_vision_encoder_forward.2} parent=5 // pred_fallthru
        _
      %p485 = scmp.le.s32.totalorder 2, %s14
      // Predicated region
      $region61: #{clip_vision_encoder_forward.2} parent=5 // pred_check
        %p486 = pneg %p485
      $region62: #{clip_vision_encoder_forward.2} parent=5 // pred_check_branch
        %488 = sbr.rel (%p486) target = $region64
      $region63: #{clip_vision_encoder_forward.2} parent=5 // pred_region
        %s489 = ssub.s32 %s14, 2
        // Predicated region
        $region65: #{clip_vision_encoder_forward.2} parent=63 // pred_check
          %p490 = pneg %p174
        $region66: #{clip_vision_encoder_forward.2} parent=63 // pred_check_branch
          %492 = sbr.rel (%p490) target = $region68
        $region67: #{clip_vision_encoder_forward.2} parent=63 // pred_region
          %p493 = scmp.lt.s32.totalorder %s20, 1
          %s494 = scalar_select %p493, %s20, 1
          %s495 = smul.addr %s494, 8
          %s496 = scalar_lea.vmem %s6, %s495
        $region68: #{clip_vision_encoder_forward.2} parent=63 // pred_fallthru
          _
      $region64: #{clip_vision_encoder_forward.2} parent=5 // pred_fallthru
        _
    $region6: #{clip_vision_encoder_forward.2} parent=1 // loop_footer
      %s18 = sadd.s32 1, %s14
    $region7: #{clip_vision_encoder_forward.2} parent=1 // loop_footer_branch
      %13 = sbr.rel target = $region3
    $region8: #{clip_vision_encoder_forward.2} parent=1 // loop_exit
      _
    %497 = vsyncpa [#allocation3], 1
    %s498 = scalar_lea.sflag [#allocation3], 1
    %499 = vsyncpa %s498, 1
    %500 = vsyncpa [#allocation5], 1

// kernel: clip_vision_encoder_forward.3
$region0: #{clip_vision_encoder_forward.3}
  #allocation0 [shape = 'u32[]', space=smem, size = 0x4, offset = 0x4, fixed_abs, tag = 'smem constant byte address 0x4 - core index']
  #allocation1 [shape = 'u32[144,128]{1,0:T(1,128)}', space=vmem, size = 0x12000, scoped, tag = 'internal scratch']
  #allocation2 [shape = 'f32[8,128]{1,0:T(8,128)}', space=vmem, size = 0x1000, scoped, tag = 'scratch operand']
  %s0 = inlined_call_operand.vmem [shape: f32[2,8,128], index: 0, kind: input, shape index: {}]
  %s1 = inlined_call_operand.vmem [shape: f32[2,1,128], index: 1, kind: input, shape index: {}]
  %s2 = inlined_call_operand.vmem [shape: f32[2,1,128], index: 2, kind: input, shape index: {}]
  %s3 = inlined_call_operand.hbm [shape: bf16[2,128,384], index: 3, kind: input, shape index: {}]
  %s4 = inlined_call_operand.hbm [shape: f32[2,1,384], index: 4, kind: input, shape index: {}]
  %s5 = inlined_call_operand.hbm [shape: bf16[2,128,128], index: 5, kind: input, shape index: {}]
  %s6 = inlined_call_operand.hbm [shape: f32[2,1,128], index: 6, kind: input, shape index: {}]
  %s7 = inlined_call_operand.hbm [shape: f32[2,1,128], index: 7, kind: input, shape index: {}]
  %s8 = inlined_call_operand.hbm [shape: f32[2,1,128], index: 8, kind: input, shape index: {}]
  %s9 = inlined_call_operand.vmem [shape: bf16[2,128,512], index: 9, kind: input, shape index: {}]
  %s10 = inlined_call_operand.hbm [shape: f32[2,1,512], index: 10, kind: input, shape index: {}]
  %s11 = inlined_call_operand.vmem [shape: bf16[2,512,128], index: 11, kind: input, shape index: {}]
  %s12 = inlined_call_operand.hbm [shape: f32[2,1,128], index: 12, kind: input, shape index: {}]
  %s13 = inlined_call_operand.hbm [shape: f32[2,1,128], index: 13, kind: output, shape index: {}]
  %s14 = sld [smem:[#allocation0]]
  $region125: #{clip_vision_encoder_forward.3} parent=0
    _
  %s16 = ssub.s32 1, %s14
  %s17 = scalar_select 0, %s16, %s14
  $region1: #{clip_vision_encoder_forward.3} parent=0
    #allocation3 [shape = 'u8[196608]{0}', space=vmem, size = 0x30000, scoped, tag = 'input window, operand 3']
    #allocation4 [shape = 's32[2]{0}', space=sflag, size = 0x8, scoped, tag = 'scoped memory for clip_vision_encoder_forward.3']
    #allocation5 [shape = 's32[2]{0}', space=sflag, size = 0x8, scoped, tag = 'scoped memory for clip_vision_encoder_forward.3']
    #allocation6 [shape = 'u8[3072]{0}', space=vmem, size = 0xc00, scoped, tag = 'input window, operand 4']
    #allocation7 [shape = 's32[2]{0}', space=sflag, size = 0x8, scoped, tag = 'scoped memory for clip_vision_encoder_forward.3']
    #allocation8 [shape = 'u8[65536]{0}', space=vmem, size = 0x10000, scoped, tag = 'input window, operand 5']
    #allocation9 [shape = 'u8[1024]{0}', space=vmem, size = 0x400, scoped, tag = 'input window, operand 6']
    #allocation10 [shape = 's32[2]{0}', space=sflag, size = 0x8, scoped, tag = 'scoped memory for clip_vision_encoder_forward.3']
    #allocation11 [shape = 'u8[1024]{0}', space=vmem, size = 0x400, scoped, tag = 'input window, operand 7']
    #allocation12 [shape = 'u8[1024]{0}', space=vmem, size = 0x400, scoped, tag = 'input window, operand 8']
    #allocation13 [shape = 's32[2]{0}', space=sflag, size = 0x8, scoped, tag = 'scoped memory for clip_vision_encoder_forward.3']
    #allocation14 [shape = 'u8[4096]{0}', space=vmem, size = 0x1000, scoped, tag = 'input window, operand 10']
    #allocation15 [shape = 'u8[1024]{0}', space=vmem, size = 0x400, scoped, tag = 'input window, operand 12']
    #allocation16 [shape = 's32[2]{0}', space=sflag, size = 0x8, scoped, tag = 'scoped memory for clip_vision_encoder_forward.3']
    #allocation17 [shape = 'u8[1024]{0}', space=vmem, size = 0x400, scoped, tag = 'output window, operand 0']
    %18 = vsyncpa [#allocation4], 0
    %s19 = scalar_lea.sflag [#allocation4], 1
    %20 = vsyncpa %s19, 0
    %21 = vsyncpa [#allocation7], 0
    %s22 = scalar_lea.sflag [#allocation7], 1
    %23 = vsyncpa %s22, 0
    %24 = vsyncpa [#allocation10], 0
    %s25 = scalar_lea.sflag [#allocation10], 1
    %26 = vsyncpa %s25, 0
    %27 = vsyncpa [#allocation13], 0
    %s28 = scalar_lea.sflag [#allocation13], 1
    %29 = vsyncpa %s28, 0
    %30 = vsyncpa [#allocation16], 0
    %s31 = scalar_lea.sflag [#allocation16], 1
    %32 = vsyncpa %s31, 0
    %33 = vsyncpa [#allocation5], 0
    %s34 = scalar_lea.sflag [#allocation5], 1
    %35 = vsyncpa %s34, 0
    loop: start=0, step=1, limit=6
    $region2: #{clip_vision_encoder_forward.3} parent=1 // loop_pre_header
      _
    $region3: #{clip_vision_encoder_forward.3} parent=1 // loop_header
      %s37 = sphi 0, %s41
      %p38 = scmp.ge.s32.totalorder %s37, 6
      %s44 = sphi 0, %s56
      %s45 = sphi 0, %s52
      %s46 = sphi 0, %s44
      %s47 = sphi 0, %s45
      %s48 = sphi 0, %s46
      %s49 = sphi 0, %s47
      %s59 = sphi 0, %s61
      %s62 = sphi 0, %s59
      %s63 = sphi 0, %s62
      %s79 = sphi 0, %s63
      %s85 = sphi 0, %s87
      %s88 = sphi 0, %s85
      %s89 = sphi 0, %s88
      %s105 = sphi 0, %s89
      %s111 = sphi 0, %s113
      %s114 = sphi 0, %s111
      %s115 = sphi 0, %s114
      %s131 = sphi 0, %s115
      %s137 = sphi 0, %s139
      %s140 = sphi 0, %s137
      %s141 = sphi 0, %s140
      %s157 = sphi 0, %s141
      %s163 = sphi 0, %s165
      %s166 = sphi 0, %s163
      %s167 = sphi 0, %s166
      %s183 = sphi 0, %s167
      %s189 = sphi 0, %s191
      %s192 = sphi 0, %s189
      %s193 = sphi 0, %s192
      %s209 = sphi 0, %s193
      %s215 = sphi 0, %s217
      %s218 = sphi 0, %s215
      %s219 = sphi 0, %s218
      %s235 = sphi 0, %s219
      %s241 = sphi 0, %s243
      %s244 = sphi 0, %s241
      %s245 = sphi 0, %s244
      %s261 = sphi 0, %s245
      %s267 = sphi 0, %s269
      %s270 = sphi 0, %s267
      %s271 = sphi 0, %s270
      %s287 = sphi 0, %s271
      %s293 = sphi 0, %s295
      %s296 = sphi 0, %s293
      %s297 = sphi 0, %s296
      %s313 = sphi 0, %s297
      %s319 = sphi 0, %s321
      %s322 = sphi 0, %s319
      %s323 = sphi 0, %s322
      %s339 = sphi 0, %s323
      %s345 = sphi 0, %s347
      %s348 = sphi 0, %s345
      %s349 = sphi 0, %s348
      %s365 = sphi 0, %s349
      %s371 = sphi 0, %s373
      %s374 = sphi 0, %s371
      %s375 = sphi 0, %s374
      %s391 = sphi 0, %s375
      %s397 = sphi 0, %s399
      %s400 = sphi 0, %s397
      %s401 = sphi 0, %s400
      %s417 = sphi 0, %s401
    $region4: #{clip_vision_encoder_forward.3} parent=1 // loop_header_branch
      %40 = sbr.rel (%p38) target = $region8
    $region5: #{clip_vision_encoder_forward.3} parent=1 // loop_body
      %s42 = ssub.s32 %s37, 1
      %s43 = ssub.s32 %s37, 2
      %s50 = sadd.s32 1, %s45
      %p51 = scmp.ge.s32.totalorder %s50, 2
      %s52 = scalar_select %p51, 0, %s50
      %s53 = sadd.s32 1, %s44
      %s54 = scalar_select %p51, %s53, %s44
      %p55 = scmp.ge.s32.totalorder %s54, 2
      %s56 = scalar_select %p55, 0, %s54
      %s57 = ssub.s32 %s44, %s56
      %p58 = scmp.eq.s32.totalorder %s57, 0
      %s60 = sadd.s32 %s59, 1
      %s61 = scalar_select %p58, %s59, %s60
      %p64 = pneg %p58
      %p65 = scmp.eq.s32.totalorder %s37, 3
      %p66 = por %p64, %p65
      %p67 = scmp.ne.s32.totalorder %s59, %s62
      %p68 = scmp.eq.s32.totalorder %s37, 0
      %p69 = por %p67, %p68
      %p70 = scmp.ne.s32.totalorder %s59, %s62
      %p71 = scmp.eq.s32.totalorder %s42, 3
      %p72 = por %p70, %p71
      %p73 = scmp.ne.s32.totalorder %s62, %s63
      %p74 = scmp.eq.s32.totalorder %s42, 0
      %p75 = por %p73, %p74
      %p76 = scmp.ne.s32.totalorder %s62, %s63
      %p77 = scmp.eq.s32.totalorder %s43, 3
      %p78 = por %p76, %p77
      %p80 = scmp.ne.s32.totalorder %s63, %s79
      %p81 = scmp.eq.s32.totalorder %s43, 0
      %p82 = por %p80, %p81
      %s83 = ssub.s32 %s45, %s52
      %p84 = scmp.eq.s32.totalorder %s83, 0
      %s86 = sadd.s32 %s85, 1
      %s87 = scalar_select %p84, %s85, %s86
      %p90 = pneg %p84
      %p91 = scmp.eq.s32.totalorder %s37, 3
      %p92 = por %p90, %p91
      %p93 = scmp.ne.s32.totalorder %s85, %s88
      %p94 = scmp.eq.s32.totalorder %s37, 0
      %p95 = por %p93, %p94
      %p96 = scmp.ne.s32.totalorder %s85, %s88
      %p97 = scmp.eq.s32.totalorder %s42, 3
      %p98 = por %p96, %p97
      %p99 = scmp.ne.s32.totalorder %s88, %s89
      %p100 = scmp.eq.s32.totalorder %s42, 0
      %p101 = por %p99, %p100
      %p102 = scmp.ne.s32.totalorder %s88, %s89
      %p103 = scmp.eq.s32.totalorder %s43, 3
      %p104 = por %p102, %p103
      %p106 = scmp.ne.s32.totalorder %s89, %s105
      %p107 = scmp.eq.s32.totalorder %s43, 0
      %p108 = por %p106, %p107
      %s109 = ssub.s32 %s45, %s52
      %p110 = scmp.eq.s32.totalorder %s109, 0
      %s112 = sadd.s32 %s111, 1
      %s113 = scalar_select %p110, %s111, %s112
      %p116 = pneg %p110
      %p117 = scmp.eq.s32.totalorder %s37, 3
      %p118 = por %p116, %p117
      %p119 = scmp.ne.s32.totalorder %s111, %s114
      %p120 = scmp.eq.s32.totalorder %s37, 0
      %p121 = por %p119, %p120
      %p122 = scmp.ne.s32.totalorder %s111, %s114
      %p123 = scmp.eq.s32.totalorder %s42, 3
      %p124 = por %p122, %p123
      %p125 = scmp.ne.s32.totalorder %s114, %s115
      %p126 = scmp.eq.s32.totalorder %s42, 0
      %p127 = por %p125, %p126
      %p128 = scmp.ne.s32.totalorder %s114, %s115
      %p129 = scmp.eq.s32.totalorder %s43, 3
      %p130 = por %p128, %p129
      %p132 = scmp.ne.s32.totalorder %s115, %s131
      %p133 = scmp.eq.s32.totalorder %s43, 0
      %p134 = por %p132, %p133
      %s135 = ssub.s32 %s45, %s52
      %p136 = scmp.eq.s32.totalorder %s135, 0
      %s138 = sadd.s32 %s137, 1
      %s139 = scalar_select %p136, %s137, %s138
      %p142 = pneg %p136
      %p143 = scmp.eq.s32.totalorder %s37, 3
      %p144 = por %p142, %p143
      %p145 = scmp.ne.s32.totalorder %s137, %s140
      %p146 = scmp.eq.s32.totalorder %s37, 0
      %p147 = por %p145, %p146
      %p148 = scmp.ne.s32.totalorder %s137, %s140
      %p149 = scmp.eq.s32.totalorder %s42, 3
      %p150 = por %p148, %p149
      %p151 = scmp.ne.s32.totalorder %s140, %s141
      %p152 = scmp.eq.s32.totalorder %s42, 0
      %p153 = por %p151, %p152
      %p154 = scmp.ne.s32.totalorder %s140, %s141
      %p155 = scmp.eq.s32.totalorder %s43, 3
      %p156 = por %p154, %p155
      %p158 = scmp.ne.s32.totalorder %s141, %s157
      %p159 = scmp.eq.s32.totalorder %s43, 0
      %p160 = por %p158, %p159
      %s161 = ssub.s32 %s45, %s52
      %p162 = scmp.eq.s32.totalorder %s161, 0
      %s164 = sadd.s32 %s163, 1
      %s165 = scalar_select %p162, %s163, %s164
      %p168 = pneg %p162
      %p169 = scmp.eq.s32.totalorder %s37, 3
      %p170 = por %p168, %p169
      %p171 = scmp.ne.s32.totalorder %s163, %s166
      %p172 = scmp.eq.s32.totalorder %s37, 0
      %p173 = por %p171, %p172
      %p174 = scmp.ne.s32.totalorder %s163, %s166
      %p175 = scmp.eq.s32.totalorder %s42, 3
      %p176 = por %p174, %p175
      %p177 = scmp.ne.s32.totalorder %s166, %s167
      %p178 = scmp.eq.s32.totalorder %s42, 0
      %p179 = por %p177, %p178
      %p180 = scmp.ne.s32.totalorder %s166, %s167
      %p181 = scmp.eq.s32.totalorder %s43, 3
      %p182 = por %p180, %p181
      %p184 = scmp.ne.s32.totalorder %s167, %s183
      %p185 = scmp.eq.s32.totalorder %s43, 0
      %p186 = por %p184, %p185
      %s187 = ssub.s32 %s45, %s52
      %p188 = scmp.eq.s32.totalorder %s187, 0
      %s190 = sadd.s32 %s189, 1
      %s191 = scalar_select %p188, %s189, %s190
      %p194 = pneg %p188
      %p195 = scmp.eq.s32.totalorder %s37, 3
      %p196 = por %p194, %p195
      %p197 = scmp.ne.s32.totalorder %s189, %s192
      %p198 = scmp.eq.s32.totalorder %s37, 0
      %p199 = por %p197, %p198
      %p200 = scmp.ne.s32.totalorder %s189, %s192
      %p201 = scmp.eq.s32.totalorder %s42, 3
      %p202 = por %p200, %p201
      %p203 = scmp.ne.s32.totalorder %s192, %s193
      %p204 = scmp.eq.s32.totalorder %s42, 0
      %p205 = por %p203, %p204
      %p206 = scmp.ne.s32.totalorder %s192, %s193
      %p207 = scmp.eq.s32.totalorder %s43, 3
      %p208 = por %p206, %p207
      %p210 = scmp.ne.s32.totalorder %s193, %s209
      %p211 = scmp.eq.s32.totalorder %s43, 0
      %p212 = por %p210, %p211
      %s213 = ssub.s32 %s45, %s52
      %p214 = scmp.eq.s32.totalorder %s213, 0
      %s216 = sadd.s32 %s215, 1
      %s217 = scalar_select %p214, %s215, %s216
      %p220 = pneg %p214
      %p221 = scmp.eq.s32.totalorder %s37, 3
      %p222 = por %p220, %p221
      %p223 = scmp.ne.s32.totalorder %s215, %s218
      %p224 = scmp.eq.s32.totalorder %s37, 0
      %p225 = por %p223, %p224
      %p226 = scmp.ne.s32.totalorder %s215, %s218
      %p227 = scmp.eq.s32.totalorder %s42, 3
      %p228 = por %p226, %p227
      %p229 = scmp.ne.s32.totalorder %s218, %s219
      %p230 = scmp.eq.s32.totalorder %s42, 0
      %p231 = por %p229, %p230
      %p232 = scmp.ne.s32.totalorder %s218, %s219
      %p233 = scmp.eq.s32.totalorder %s43, 3
      %p234 = por %p232, %p233
      %p236 = scmp.ne.s32.totalorder %s219, %s235
      %p237 = scmp.eq.s32.totalorder %s43, 0
      %p238 = por %p236, %p237
      %s239 = ssub.s32 %s45, %s52
      %p240 = scmp.eq.s32.totalorder %s239, 0
      %s242 = sadd.s32 %s241, 1
      %s243 = scalar_select %p240, %s241, %s242
      %p246 = pneg %p240
      %p247 = scmp.eq.s32.totalorder %s37, 3
      %p248 = por %p246, %p247
      %p249 = scmp.ne.s32.totalorder %s241, %s244
      %p250 = scmp.eq.s32.totalorder %s37, 0
      %p251 = por %p249, %p250
      %p252 = scmp.ne.s32.totalorder %s241, %s244
      %p253 = scmp.eq.s32.totalorder %s42, 3
      %p254 = por %p252, %p253
      %p255 = scmp.ne.s32.totalorder %s244, %s245
      %p256 = scmp.eq.s32.totalorder %s42, 0
      %p257 = por %p255, %p256
      %p258 = scmp.ne.s32.totalorder %s244, %s245
      %p259 = scmp.eq.s32.totalorder %s43, 3
      %p260 = por %p258, %p259
      %p262 = scmp.ne.s32.totalorder %s245, %s261
      %p263 = scmp.eq.s32.totalorder %s43, 0
      %p264 = por %p262, %p263
      %s265 = ssub.s32 %s45, %s52
      %p266 = scmp.eq.s32.totalorder %s265, 0
      %s268 = sadd.s32 %s267, 1
      %s269 = scalar_select %p266, %s267, %s268
      %p272 = pneg %p266
      %p273 = scmp.eq.s32.totalorder %s37, 3
      %p274 = por %p272, %p273
      %p275 = scmp.ne.s32.totalorder %s267, %s270
      %p276 = scmp.eq.s32.totalorder %s37, 0
      %p277 = por %p275, %p276
      %p278 = scmp.ne.s32.totalorder %s267, %s270
      %p279 = scmp.eq.s32.totalorder %s42, 3
      %p280 = por %p278, %p279
      %p281 = scmp.ne.s32.totalorder %s270, %s271
      %p282 = scmp.eq.s32.totalorder %s42, 0
      %p283 = por %p281, %p282
      %p284 = scmp.ne.s32.totalorder %s270, %s271
      %p285 = scmp.eq.s32.totalorder %s43, 3
      %p286 = por %p284, %p285
      %p288 = scmp.ne.s32.totalorder %s271, %s287
      %p289 = scmp.eq.s32.totalorder %s43, 0
      %p290 = por %p288, %p289
      %s291 = ssub.s32 %s45, %s52
      %p292 = scmp.eq.s32.totalorder %s291, 0
      %s294 = sadd.s32 %s293, 1
      %s295 = scalar_select %p292, %s293, %s294
      %p298 = pneg %p292
      %p299 = scmp.eq.s32.totalorder %s37, 3
      %p300 = por %p298, %p299
      %p301 = scmp.ne.s32.totalorder %s293, %s296
      %p302 = scmp.eq.s32.totalorder %s37, 0
      %p303 = por %p301, %p302
      %p304 = scmp.ne.s32.totalorder %s293, %s296
      %p305 = scmp.eq.s32.totalorder %s42, 3
      %p306 = por %p304, %p305
      %p307 = scmp.ne.s32.totalorder %s296, %s297
      %p308 = scmp.eq.s32.totalorder %s42, 0
      %p309 = por %p307, %p308
      %p310 = scmp.ne.s32.totalorder %s296, %s297
      %p311 = scmp.eq.s32.totalorder %s43, 3
      %p312 = por %p310, %p311
      %p314 = scmp.ne.s32.totalorder %s297, %s313
      %p315 = scmp.eq.s32.totalorder %s43, 0
      %p316 = por %p314, %p315
      %s317 = ssub.s32 %s45, %s52
      %p318 = scmp.eq.s32.totalorder %s317, 0
      %s320 = sadd.s32 %s319, 1
      %s321 = scalar_select %p318, %s319, %s320
      %p324 = pneg %p318
      %p325 = scmp.eq.s32.totalorder %s37, 3
      %p326 = por %p324, %p325
      %p327 = scmp.ne.s32.totalorder %s319, %s322
      %p328 = scmp.eq.s32.totalorder %s37, 0
      %p329 = por %p327, %p328
      %p330 = scmp.ne.s32.totalorder %s319, %s322
      %p331 = scmp.eq.s32.totalorder %s42, 3
      %p332 = por %p330, %p331
      %p333 = scmp.ne.s32.totalorder %s322, %s323
      %p334 = scmp.eq.s32.totalorder %s42, 0
      %p335 = por %p333, %p334
      %p336 = scmp.ne.s32.totalorder %s322, %s323
      %p337 = scmp.eq.s32.totalorder %s43, 3
      %p338 = por %p336, %p337
      %p340 = scmp.ne.s32.totalorder %s323, %s339
      %p341 = scmp.eq.s32.totalorder %s43, 0
      %p342 = por %p340, %p341
      %s343 = ssub.s32 %s45, %s52
      %p344 = scmp.eq.s32.totalorder %s343, 0
      %s346 = sadd.s32 %s345, 1
      %s347 = scalar_select %p344, %s345, %s346
      %p350 = pneg %p344
      %p351 = scmp.eq.s32.totalorder %s37, 3
      %p352 = por %p350, %p351
      %p353 = scmp.ne.s32.totalorder %s345, %s348
      %p354 = scmp.eq.s32.totalorder %s37, 0
      %p355 = por %p353, %p354
      %p356 = scmp.ne.s32.totalorder %s345, %s348
      %p357 = scmp.eq.s32.totalorder %s42, 3
      %p358 = por %p356, %p357
      %p359 = scmp.ne.s32.totalorder %s348, %s349
      %p360 = scmp.eq.s32.totalorder %s42, 0
      %p361 = por %p359, %p360
      %p362 = scmp.ne.s32.totalorder %s348, %s349
      %p363 = scmp.eq.s32.totalorder %s43, 3
      %p364 = por %p362, %p363
      %p366 = scmp.ne.s32.totalorder %s349, %s365
      %p367 = scmp.eq.s32.totalorder %s43, 0
      %p368 = por %p366, %p367
      %s369 = ssub.s32 %s45, %s52
      %p370 = scmp.eq.s32.totalorder %s369, 0
      %s372 = sadd.s32 %s371, 1
      %s373 = scalar_select %p370, %s371, %s372
      %p376 = pneg %p370
      %p377 = scmp.eq.s32.totalorder %s37, 3
      %p378 = por %p376, %p377
      %p379 = scmp.ne.s32.totalorder %s371, %s374
      %p380 = scmp.eq.s32.totalorder %s37, 0
      %p381 = por %p379, %p380
      %p382 = scmp.ne.s32.totalorder %s371, %s374
      %p383 = scmp.eq.s32.totalorder %s42, 3
      %p384 = por %p382, %p383
      %p385 = scmp.ne.s32.totalorder %s374, %s375
      %p386 = scmp.eq.s32.totalorder %s42, 0
      %p387 = por %p385, %p386
      %p388 = scmp.ne.s32.totalorder %s374, %s375
      %p389 = scmp.eq.s32.totalorder %s43, 3
      %p390 = por %p388, %p389
      %p392 = scmp.ne.s32.totalorder %s375, %s391
      %p393 = scmp.eq.s32.totalorder %s43, 0
      %p394 = por %p392, %p393
      %s395 = ssub.s32 %s44, %s56
      %p396 = scmp.eq.s32.totalorder %s395, 0
      %s398 = sadd.s32 %s397, 1
      %s399 = scalar_select %p396, %s397, %s398
      %p402 = pneg %p396
      %p403 = scmp.eq.s32.totalorder %s37, 3
      %p404 = por %p402, %p403
      %p405 = scmp.ne.s32.totalorder %s397, %s400
      %p406 = scmp.eq.s32.totalorder %s37, 0
      %p407 = por %p405, %p406
      %p408 = scmp.ne.s32.totalorder %s397, %s400
      %p409 = scmp.eq.s32.totalorder %s42, 3
      %p410 = por %p408, %p409
      %p411 = scmp.ne.s32.totalorder %s400, %s401
      %p412 = scmp.eq.s32.totalorder %s42, 0
      %p413 = por %p411, %p412
      %p414 = scmp.ne.s32.totalorder %s400, %s401
      %p415 = scmp.eq.s32.totalorder %s43, 3
      %p416 = por %p414, %p415
      %p418 = scmp.ne.s32.totalorder %s401, %s417
      %p419 = scmp.eq.s32.totalorder %s43, 0
      %p420 = por %p418, %p419
      %p421 = scmp.le.s32.totalorder 1, %s37
      %p422 = scmp.lt.s32.totalorder %s37, 5
      %p423 = pnand %p421, %p422
      %p424 = pneg %p423
      // Predicated region
      $region9: #{clip_vision_encoder_forward.3} parent=5 // pred_check
        _
      $region10: #{clip_vision_encoder_forward.3} parent=5 // pred_check_branch
        %426 = sbr.rel (%p423) target = $region12
      $region11: #{clip_vision_encoder_forward.3} parent=5 // pred_region
        %s427 = ssub.s32 %s37, 1
      $region12: #{clip_vision_encoder_forward.3} parent=5 // pred_fallthru
        _
      %p428 = scmp.lt.s32.totalorder %s37, 4
      // Predicated region
      $region13: #{clip_vision_encoder_forward.3} parent=5 // pred_check
        %p429 = pneg %p428
      $region14: #{clip_vision_encoder_forward.3} parent=5 // pred_check_branch
        %431 = sbr.rel (%p429) target = $region16
      $region15: #{clip_vision_encoder_forward.3} parent=5 // pred_region
        // Predicated region
        $region17: #{clip_vision_encoder_forward.3} parent=15 // pred_check
          %p432 = pneg %p69
        $region18: #{clip_vision_encoder_forward.3} parent=15 // pred_check_branch
          %434 = sbr.rel (%p432) target = $region20
        $region19: #{clip_vision_encoder_forward.3} parent=15 // pred_region
          %p435 = scmp.lt.s32.totalorder %s44, 1
          %s436 = scalar_select %p435, %s44, 1
          %s437 = smul.addr %s436, 8
          %s438 = scalar_lea.vmem %s0, %s437
        $region20: #{clip_vision_encoder_forward.3} parent=15 // pred_fallthru
          _
        // Predicated region
        $region21: #{clip_vision_encoder_forward.3} parent=15 // pred_check
          %p439 = pneg %p95
        $region22: #{clip_vision_encoder_forward.3} parent=15 // pred_check_branch
          %441 = sbr.rel (%p439) target = $region24
        $region23: #{clip_vision_encoder_forward.3} parent=15 // pred_region
          %p442 = scmp.lt.s32.totalorder %s45, 1
          %s443 = scalar_select %p442, %s45, 1
          %s444 = scalar_lea.vmem %s1, %s443
        $region24: #{clip_vision_encoder_forward.3} parent=15 // pred_fallthru
          _
        // Predicated region
        $region25: #{clip_vision_encoder_forward.3} parent=15 // pred_check
          %p445 = pneg %p121
        $region26: #{clip_vision_encoder_forward.3} parent=15 // pred_check_branch
          %447 = sbr.rel (%p445) target = $region28
        $region27: #{clip_vision_encoder_forward.3} parent=15 // pred_region
          %p448 = scmp.lt.s32.totalorder %s45, 1
          %s449 = scalar_select %p448, %s45, 1
          %s450 = scalar_lea.vmem %s2, %s449
        $region28: #{clip_vision_encoder_forward.3} parent=15 // pred_fallthru
          _
        // Predicated region
        $region29: #{clip_vision_encoder_forward.3} parent=15 // pred_check
          %p451 = pneg %p147
        $region30: #{clip_vision_encoder_forward.3} parent=15 // pred_check_branch
          %453 = sbr.rel (%p451) target = $region32
        $region31: #{clip_vision_encoder_forward.3} parent=15 // pred_region
          %s454 = sand.u32 %s137, 1
          %s455 = scalar_lea.sflag [#allocation4], %s454
          %s456 = sand.u32 %s137, 1
          %s457 = smul.addr %s456, 192
          %s458 = scalar_lea.vmem [#allocation3], %s457
          %s460 = ssub.s32 3072, 3072
          %461 = vsyncadd %s455, %s460
          %s462 = smul.addr %s45, 48
          %s463 = smul.addr %s462, 64
          %s464 = scalar_lea.hbm %s3, %s463
          %s465 = sshll.u32 %s458, 4
          %s466 = int_to_ptr.vmem [resolvable:$true] %s465
          %471 = dma.hbm_to_vmem [thread:$0]  %s464, 3072, %s466, %s455, 192, 192, 12
        $region32: #{clip_vision_encoder_forward.3} parent=15 // pred_fallthru
          _
        // Predicated region
        $region33: #{clip_vision_encoder_forward.3} parent=15 // pred_check
          %p472 = pneg %p173
        $region34: #{clip_vision_encoder_forward.3} parent=15 // pred_check_branch
          %474 = sbr.rel (%p472) target = $region36
        $region35: #{clip_vision_encoder_forward.3} parent=15 // pred_region
          %s475 = sand.u32 %s37, 1
          %s476 = scalar_lea.sflag [#allocation7], %s475
          %s477 = sand.u32 %s163, 1
          %s478 = smul.addr %s477, 3
          %s479 = scalar_lea.vmem [#allocation6], %s478
          %s481 = ssub.s32 48, 48
          %482 = vsyncadd %s476, %s481
          %s483 = smul.addr %s45, 3
          %s484 = smul.addr %s483, 16
          %s485 = scalar_lea.hbm %s4, %s484
          %s487 = sshll.u32 %s479, 4
          %s488 = int_to_ptr.vmem [resolvable:$true] %s487
          %490 = dma.hbm_to_vmem [thread:$0]  %s485, 48, %s488, %s476
        $region36: #{clip_vision_encoder_forward.3} parent=15 // pred_fallthru
          _
        // Predicated region
        $region37: #{clip_vision_encoder_forward.3} parent=15 // pred_check
          %p491 = pneg %p199
        $region38: #{clip_vision_encoder_forward.3} parent=15 // pred_check_branch
          %493 = sbr.rel (%p491) target = $region40
        $region39: #{clip_vision_encoder_forward.3} parent=15 // pred_region
          %s494 = sand.u32 %s37, 1
          %s495 = scalar_lea.sflag [#allocation7], %s494
          %s496 = sand.u32 %s189, 1
          %s497 = smul.addr %s496, 64
          %s498 = scalar_lea.vmem [#allocation8], %s497
          %s500 = ssub.s32 1024, 1024
          %501 = vsyncadd %s495, %s500
          %s502 = smul.addr %s45, 16
          %s503 = smul.addr %s502, 64
          %s504 = scalar_lea.hbm %s5, %s503
          %s505 = sshll.u32 %s498, 4
          %s506 = int_to_ptr.vmem [resolvable:$true] %s505
          %511 = dma.hbm_to_vmem [thread:$0]  %s504, 1024, %s506, %s495, 64, 64, 4
        $region40: #{clip_vision_encoder_forward.3} parent=15 // pred_fallthru
          _
        // Predicated region
        $region41: #{clip_vision_encoder_forward.3} parent=15 // pred_check
          %p512 = pneg %p225
        $region42: #{clip_vision_encoder_forward.3} parent=15 // pred_check_branch
          %514 = sbr.rel (%p512) target = $region44
        $region43: #{clip_vision_encoder_forward.3} parent=15 // pred_region
          %s515 = sand.u32 %s37, 1
          %s516 = scalar_lea.sflag [#allocation10], %s515
          %s517 = sand.u32 %s215, 1
          %s518 = scalar_lea.vmem [#allocation9], %s517
          %s520 = ssub.s32 16, 16
          %521 = vsyncadd %s516, %s520
          %s522 = smul.addr %s45, 16
          %s523 = scalar_lea.hbm %s6, %s522
          %s525 = sshll.u32 %s518, 4
          %s526 = int_to_ptr.vmem [resolvable:$true] %s525
          %528 = dma.hbm_to_vmem [thread:$0]  %s523, 16, %s526, %s516
        $region44: #{clip_vision_encoder_forward.3} parent=15 // pred_fallthru
          _
        // Predicated region
        $region45: #{clip_vision_encoder_forward.3} parent=15 // pred_check
          %p529 = pneg %p251
        $region46: #{clip_vision_encoder_forward.3} parent=15 // pred_check_branch
          %531 = sbr.rel (%p529) target = $region48
        $region47: #{clip_vision_encoder_forward.3} parent=15 // pred_region
          %s532 = sand.u32 %s37, 1
          %s533 = scalar_lea.sflag [#allocation10], %s532
          %s534 = sand.u32 %s241, 1
          %s535 = scalar_lea.vmem [#allocation11], %s534
          %s537 = ssub.s32 16, 16
          %538 = vsyncadd %s533, %s537
          %s539 = smul.addr %s45, 16
          %s540 = scalar_lea.hbm %s7, %s539
          %s542 = sshll.u32 %s535, 4
          %s543 = int_to_ptr.vmem [resolvable:$true] %s542
          %545 = dma.hbm_to_vmem [thread:$0]  %s540, 16, %s543, %s533
        $region48: #{clip_vision_encoder_forward.3} parent=15 // pred_fallthru
          _
        // Predicated region
        $region49: #{clip_vision_encoder_forward.3} parent=15 // pred_check
          %p546 = pneg %p277
        $region50: #{clip_vision_encoder_forward.3} parent=15 // pred_check_branch
          %548 = sbr.rel (%p546) target = $region52
        $region51: #{clip_vision_encoder_forward.3} parent=15 // pred_region
          %s549 = sand.u32 %s37, 1
          %s550 = scalar_lea.sflag [#allocation13], %s549
          %s551 = sand.u32 %s267, 1
          %s552 = scalar_lea.vmem [#allocation12], %s551
          %s554 = ssub.s32 16, 16
          %555 = vsyncadd %s550, %s554
          %s556 = smul.addr %s45, 16
          %s557 = scalar_lea.hbm %s8, %s556
          %s559 = sshll.u32 %s552, 4
          %s560 = int_to_ptr.vmem [resolvable:$true] %s559
          %562 = dma.hbm_to_vmem [thread:$0]  %s557, 16, %s560, %s550
        $region52: #{clip_vision_encoder_forward.3} parent=15 // pred_fallthru
          _
        // Predicated region
        $region53: #{clip_vision_encoder_forward.3} parent=15 // pred_check
          %p563 = pneg %p303
        $region54: #{clip_vision_encoder_forward.3} parent=15 // pred_check_branch
          %565 = sbr.rel (%p563) target = $region56
        $region55: #{clip_vision_encoder_forward.3} parent=15 // pred_region
          %p566 = scmp.lt.s32.totalorder %s45, 1
          %s567 = scalar_select %p566, %s45, 1
          %s568 = smul.addr %s567, 64
          %s569 = smul.addr %s568, 4
          %s570 = scalar_lea.vmem %s9, %s569
        $region56: #{clip_vision_encoder_forward.3} parent=15 // pred_fallthru
          _
        // Predicated region
        $region57: #{clip_vision_encoder_forward.3} parent=15 // pred_check
          %p571 = pneg %p329
        $region58: #{clip_vision_encoder_forward.3} parent=15 // pred_check_branch
          %573 = sbr.rel (%p571) target = $region60
        $region59: #{clip_vision_encoder_forward.3} parent=15 // pred_region
          %s574 = sand.u32 %s37, 1
          %s575 = scalar_lea.sflag [#allocation13], %s574
          %s576 = sand.u32 %s319, 1
          %s577 = smul.addr %s576, 4
          %s578 = scalar_lea.vmem [#allocation14], %s577
          %s580 = ssub.s32 64, 64
          %581 = vsyncadd %s575, %s580
          %s582 = smul.addr %s45, 4
          %s583 = smul.addr %s582, 16
          %s584 = scalar_lea.hbm %s10, %s583
          %s586 = sshll.u32 %s578, 4
          %s587 = int_to_ptr.vmem [resolvable:$true] %s586
          %589 = dma.hbm_to_vmem [thread:$0]  %s584, 64, %s587, %s575
        $region60: #{clip_vision_encoder_forward.3} parent=15 // pred_fallthru
          _
        // Predicated region
        $region61: #{clip_vision_encoder_forward.3} parent=15 // pred_check
          %p590 = pneg %p355
        $region62: #{clip_vision_encoder_forward.3} parent=15 // pred_check_branch
          %592 = sbr.rel (%p590) target = $region64
        $region63: #{clip_vision_encoder_forward.3} parent=15 // pred_region
          %p593 = scmp.lt.s32.totalorder %s45, 1
          %s594 = scalar_select %p593, %s45, 1
          %s595 = smul.addr %s594, 64
          %s596 = smul.addr %s595, 4
          %s597 = scalar_lea.vmem %s11, %s596
        $region64: #{clip_vision_encoder_forward.3} parent=15 // pred_fallthru
          _
        // Predicated region
        $region65: #{clip_vision_encoder_forward.3} parent=15 // pred_check
          %p598 = pneg %p381
        $region66: #{clip_vision_encoder_forward.3} parent=15 // pred_check_branch
          %600 = sbr.rel (%p598) target = $region68
        $region67: #{clip_vision_encoder_forward.3} parent=15 // pred_region
          %s601 = sand.u32 %s371, 1
          %s602 = scalar_lea.sflag [#allocation16], %s601
          %s603 = sand.u32 %s371, 1
          %s604 = scalar_lea.vmem [#allocation15], %s603
          %s606 = ssub.s32 16, 16
          %607 = vsyncadd %s602, %s606
          %s608 = smul.addr %s45, 16
          %s609 = scalar_lea.hbm %s12, %s608
          %s611 = sshll.u32 %s604, 4
          %s612 = int_to_ptr.vmem [resolvable:$true] %s611
          %614 = dma.hbm_to_vmem [thread:$0]  %s609, 16, %s612, %s602
        $region68: #{clip_vision_encoder_forward.3} parent=15 // pred_fallthru
          _
      $region16: #{clip_vision_encoder_forward.3} parent=5 // pred_fallthru
        _
      %p615 = scmp.le.s32.totalorder 1, %s37
      %p616 = scmp.lt.s32.totalorder %s37, 5
      %p617 = pnand %p615, %p616
      %p618 = pneg %p617
      // Predicated region
      $region69: #{clip_vision_encoder_forward.3} parent=5 // pred_check
        _
      $region70: #{clip_vision_encoder_forward.3} parent=5 // pred_check_branch
        %620 = sbr.rel (%p617) target = $region72
      $region71: #{clip_vision_encoder_forward.3} parent=5 // pred_region
        %s621 = ssub.s32 %s37, 1
        %s622 = sand.u32 %s140, 1
        %s623 = scalar_lea.sflag [#allocation4], %s622
        %s624 = sand.u32 %s140, 1
        %s625 = smul.addr %s624, 192
        %s626 = scalar_lea.vmem [#allocation3], %s625
        // Predicated region
        $region73: #{clip_vision_encoder_forward.3} parent=71 // pred_check
          %p627 = pneg %p153
        $region74: #{clip_vision_encoder_forward.3} parent=71 // pred_check_branch
          %629 = sbr.rel (%p627) target = $region76
        $region75: #{clip_vision_encoder_forward.3} parent=71 // pred_region
          %630 = dma.done %s623, 3072
        $region76: #{clip_vision_encoder_forward.3} parent=71 // pred_fallthru
          _
        %s631 = sand.u32 %s42, 1
        %s632 = scalar_lea.sflag [#allocation7], %s631
        %s633 = sand.u32 %s166, 1
        %s634 = smul.addr %s633, 3
        %s635 = scalar_lea.vmem [#allocation6], %s634
        // Predicated region
        $region77: #{clip_vision_encoder_forward.3} parent=71 // pred_check
          %p636 = pneg %p179
        $region78: #{clip_vision_encoder_forward.3} parent=71 // pred_check_branch
          %638 = sbr.rel (%p636) target = $region80
        $region79: #{clip_vision_encoder_forward.3} parent=71 // pred_region
          %639 = dma.done %s632, 48
        $region80: #{clip_vision_encoder_forward.3} parent=71 // pred_fallthru
          _
        %s640 = sand.u32 %s42, 1
        %s641 = scalar_lea.sflag [#allocation7], %s640
        %s642 = sand.u32 %s192, 1
        %s643 = smul.addr %s642, 64
        %s644 = scalar_lea.vmem [#allocation8], %s643
        // Predicated region
        $region81: #{clip_vision_encoder_forward.3} parent=71 // pred_check
          %p645 = pneg %p205
        $region82: #{clip_vision_encoder_forward.3} parent=71 // pred_check_branch
          %647 = sbr.rel (%p645) target = $region84
        $region83: #{clip_vision_encoder_forward.3} parent=71 // pred_region
          %648 = dma.done %s641, 1024
        $region84: #{clip_vision_encoder_forward.3} parent=71 // pred_fallthru
          _
        %s649 = sand.u32 %s42, 1
        %s650 = scalar_lea.sflag [#allocation10], %s649
        %s651 = sand.u32 %s218, 1
        %s652 = scalar_lea.vmem [#allocation9], %s651
        // Predicated region
        $region85: #{clip_vision_encoder_forward.3} parent=71 // pred_check
          %p653 = pneg %p231
        $region86: #{clip_vision_encoder_forward.3} parent=71 // pred_check_branch
          %655 = sbr.rel (%p653) target = $region88
        $region87: #{clip_vision_encoder_forward.3} parent=71 // pred_region
          %656 = dma.done %s650, 16
        $region88: #{clip_vision_encoder_forward.3} parent=71 // pred_fallthru
          _
        %s657 = sand.u32 %s42, 1
        %s658 = scalar_lea.sflag [#allocation10], %s657
        %s659 = sand.u32 %s244, 1
        %s660 = scalar_lea.vmem [#allocation11], %s659
        // Predicated region
        $region89: #{clip_vision_encoder_forward.3} parent=71 // pred_check
          %p661 = pneg %p257
        $region90: #{clip_vision_encoder_forward.3} parent=71 // pred_check_branch
          %663 = sbr.rel (%p661) target = $region92
        $region91: #{clip_vision_encoder_forward.3} parent=71 // pred_region
          %664 = dma.done %s658, 16
        $region92: #{clip_vision_encoder_forward.3} parent=71 // pred_fallthru
          _
        %s665 = sand.u32 %s42, 1
        %s666 = scalar_lea.sflag [#allocation13], %s665
        %s667 = sand.u32 %s270, 1
        %s668 = scalar_lea.vmem [#allocation12], %s667
        // Predicated region
        $region93: #{clip_vision_encoder_forward.3} parent=71 // pred_check
          %p669 = pneg %p283
        $region94: #{clip_vision_encoder_forward.3} parent=71 // pred_check_branch
          %671 = sbr.rel (%p669) target = $region96
        $region95: #{clip_vision_encoder_forward.3} parent=71 // pred_region
          %672 = dma.done %s666, 16
        $region96: #{clip_vision_encoder_forward.3} parent=71 // pred_fallthru
          _
        %s673 = sand.u32 %s42, 1
        %s674 = scalar_lea.sflag [#allocation13], %s673
        %s675 = sand.u32 %s322, 1
        %s676 = smul.addr %s675, 4
        %s677 = scalar_lea.vmem [#allocation14], %s676
        // Predicated region
        $region97: #{clip_vision_encoder_forward.3} parent=71 // pred_check
          %p678 = pneg %p335
        $region98: #{clip_vision_encoder_forward.3} parent=71 // pred_check_branch
          %680 = sbr.rel (%p678) target = $region100
        $region99: #{clip_vision_encoder_forward.3} parent=71 // pred_region
          %681 = dma.done %s674, 64
        $region100: #{clip_vision_encoder_forward.3} parent=71 // pred_fallthru
          _
        %s682 = sand.u32 %s374, 1
        %s683 = scalar_lea.sflag [#allocation16], %s682
        %s684 = sand.u32 %s374, 1
        %s685 = scalar_lea.vmem [#allocation15], %s684
        // Predicated region
        $region101: #{clip_vision_encoder_forward.3} parent=71 // pred_check
          %p686 = pneg %p387
        $region102: #{clip_vision_encoder_forward.3} parent=71 // pred_check_branch
          %688 = sbr.rel (%p686) target = $region104
        $region103: #{clip_vision_encoder_forward.3} parent=71 // pred_region
          %689 = dma.done %s683, 16
        $region104: #{clip_vision_encoder_forward.3} parent=71 // pred_fallthru
          _
        %p690 = scmp.lt.s32.totalorder %s46, 1
        %s691 = scalar_select %p690, %s46, 1
        %s692 = smul.addr %s691, 8
        %s693 = scalar_lea.vmem %s0, %s692
        %p694 = pneg %p75
        %p695 = pneg %p72
        %p696 = scmp.lt.s32.totalorder %s47, 1
        %s697 = scalar_select %p696, %s47, 1
        %s698 = scalar_lea.vmem %s1, %s697
        %p699 = pneg %p101
        %p700 = pneg %p98
        %p701 = scmp.lt.s32.totalorder %s47, 1
        %s702 = scalar_select %p701, %s47, 1
        %s703 = scalar_lea.vmem %s2, %s702
        %p704 = pneg %p127
        %p705 = pneg %p124
        %s706 = sand.u32 %s140, 1
        %s707 = scalar_lea.sflag [#allocation4], %s706
        %s708 = sand.u32 %s140, 1
        %s709 = smul.addr %s708, 192
        %s710 = scalar_lea.vmem [#allocation3], %s709
        %p711 = pneg %p153
        %p712 = pneg %p150
        %s713 = sand.u32 %s42, 1
        %s714 = scalar_lea.sflag [#allocation7], %s713
        %s715 = sand.u32 %s166, 1
        %s716 = smul.addr %s715, 3
        %s717 = scalar_lea.vmem [#allocation6], %s716
        %p718 = pneg %p179
        %p719 = pneg %p176
        %s720 = sand.u32 %s42, 1
        %s721 = scalar_lea.sflag [#allocation7], %s720
        %s722 = sand.u32 %s192, 1
        %s723 = smul.addr %s722, 64
        %s724 = scalar_lea.vmem [#allocation8], %s723
        %p725 = pneg %p205
        %p726 = pneg %p202
        %s727 = sand.u32 %s42, 1
        %s728 = scalar_lea.sflag [#allocation10], %s727
        %s729 = sand.u32 %s218, 1
        %s730 = scalar_lea.vmem [#allocation9], %s729
        %p731 = pneg %p231
        %p732 = pneg %p228
        %s733 = sand.u32 %s42, 1
        %s734 = scalar_lea.sflag [#allocation10], %s733
        %s735 = sand.u32 %s244, 1
        %s736 = scalar_lea.vmem [#allocation11], %s735
        %p737 = pneg %p257
        %p738 = pneg %p254
        %s739 = sand.u32 %s42, 1
        %s740 = scalar_lea.sflag [#allocation13], %s739
        %s741 = sand.u32 %s270, 1
        %s742 = scalar_lea.vmem [#allocation12], %s741
        %p743 = pneg %p283
        %p744 = pneg %p280
        %p745 = scmp.lt.s32.totalorder %s47, 1
        %s746 = scalar_select %p745, %s47, 1
        %s747 = smul.addr %s746, 64
        %s748 = smul.addr %s747, 4
        %s749 = scalar_lea.vmem %s9, %s748
        %p750 = pneg %p309
        %p751 = pneg %p306
        %s752 = sand.u32 %s42, 1
        %s753 = scalar_lea.sflag [#allocation13], %s752
        %s754 = sand.u32 %s322, 1
        %s755 = smul.addr %s754, 4
        %s756 = scalar_lea.vmem [#allocation14], %s755
        %p757 = pneg %p335
        %p758 = pneg %p332
        %p759 = scmp.lt.s32.totalorder %s47, 1
        %s760 = scalar_select %p759, %s47, 1
        %s761 = smul.addr %s760, 64
        %s762 = smul.addr %s761, 4
        %s763 = scalar_lea.vmem %s11, %s762
        %p764 = pneg %p361
        %p765 = pneg %p358
        %s766 = sand.u32 %s374, 1
        %s767 = scalar_lea.sflag [#allocation16], %s766
        %s768 = sand.u32 %s374, 1
        %s769 = scalar_lea.vmem [#allocation15], %s768
        %p770 = pneg %p387
        %p771 = pneg %p384
        %p772 = pneg %p413
        %p773 = pneg %p410
        %s774 = sand.u32 %s400, 1
        %s775 = scalar_lea.sflag [#allocation5], %s774
        %s776 = sand.u32 %s400, 1
        %s777 = scalar_lea.vmem [#allocation17], %s776
        %p778 = scmp.lt.s32.totalorder %s46, 1
        %s779 = scalar_select %p778, %s46, 1
        %s780 = smul.addr %s779, 8
        %s781 = scalar_lea.vmem %s0, %s780
        %p782 = scmp.lt.s32.totalorder %s47, 1
        %s783 = scalar_select %p782, %s47, 1
        %s784 = scalar_lea.vmem %s1, %s783
        %p785 = scmp.lt.s32.totalorder %s47, 1
        %s786 = scalar_select %p785, %s47, 1
        %s787 = scalar_lea.vmem %s2, %s786
        %p788 = scmp.lt.s32.totalorder %s47, 1
        %s789 = scalar_select %p788, %s47, 1
        %s790 = smul.addr %s789, 64
        %s791 = smul.addr %s790, 4
        %s792 = scalar_lea.vmem %s9, %s791
        %p793 = scmp.lt.s32.totalorder %s47, 1
        %s794 = scalar_select %p793, %s47, 1
        %s795 = smul.addr %s794, 64
        %s796 = smul.addr %s795, 4
        %s797 = scalar_lea.vmem %s11, %s796
        %p799 = scmp.eq.s32.totalorder %s47, 0
        // Predicated region
        $region105: #{clip_vision_encoder_forward.3} parent=71 // pred_check
          %p800 = pneg %p799
        $region106: #{clip_vision_encoder_forward.3} parent=71 // pred_check_branch
          %802 = sbr.rel (%p800) target = $region108
        $region107: #{clip_vision_encoder_forward.3} parent=71 // pred_region
          %v803 = vld [vmem:[%s781] sm:$0xff]
          %804 = vst [vmem:[#allocation2] sm:$0xff] %v803
        $region108: #{clip_vision_encoder_forward.3} parent=71 // pred_fallthru
          _
        %v805 = vld [vmem:[#allocation2] sm:$0xff]
        %v806 = vld [vmem:[%s784] sm:$0x1]
        %v807 = vld [vmem:[%s787] sm:$0x1]
        %808 = vadd.xlane.f32.xlu0 %v805
        %v809 = vpop.xlane.xlu0 %808
        %v810 = vrcp.pop 128.0
        %v811 = vmul.f32 %v809, %v810
        %v812 = vsub.f32 %v805, %v811
        %v813 = vmul.f32 %v812, %v812
        %814 = vadd.xlane.f32.xlu0 %v813
        %v815 = vpop.xlane.xlu0 %814
        %v816 = vmul.f32 %v815, %v810
        %v817 = vadd.f32 %v816, 1e-05
        %v818 = vrsqrt.pop %v817
        %v819 = vmul.f32 %v812, %v818
        %v821 = vlaneseq
        %v822 = vshrl.u32 %v821, 7
        %v823 = vsub.s32 0, %v822
        %v824 = vrot.slane %v806, %v823
        %v826 = vmul.f32 %v819, %v824
        %v828 = vlaneseq
        %v829 = vshrl.u32 %v828, 7
        %v830 = vsub.s32 0, %v829
        %v831 = vrot.slane %v807, %v830
        %v833 = vadd.f32 %v826, %v831
        %v834 = vpack.c.bf16 %v833, %v833
        %v835 = vld [vmem:[%s626] sm:$0xff]
        %v836 = vld [vmem:[%s626 + $0x8] sm:$0xf]
        %v837 = vld [vmem:[%s626 + $0xc] sm:$0xff]
        %v838 = vld [vmem:[%s626 + $0x14] sm:$0xf]
        %v839 = vld [vmem:[%s626 + $0x18] sm:$0xff]
        %v840 = vld [vmem:[%s626 + $0x20] sm:$0xf]
        %v841 = vld [vmem:[%s626 + $0x24] sm:$0xff]
        %v842 = vld [vmem:[%s626 + $0x2c] sm:$0xf]
        %v843 = vld [vmem:[%s626 + $0x30] sm:$0xff]
        %v844 = vld [vmem:[%s626 + $0x38] sm:$0xf]
        %v845 = vld [vmem:[%s626 + $0x3c] sm:$0xff]
        %v846 = vld [vmem:[%s626 + $0x44] sm:$0xf]
        %v847 = vld [vmem:[%s626 + $0x48] sm:$0xff]
        %v848 = vld [vmem:[%s626 + $0x50] sm:$0xf]
        %v849 = vld [vmem:[%s626 + $0x54] sm:$0xff]
        %v850 = vld [vmem:[%s626 + $0x5c] sm:$0xf]
        %v851 = vld [vmem:[%s626 + $0x60] sm:$0xff]
        %v852 = vld [vmem:[%s626 + $0x68] sm:$0xf]
        %v853 = vld [vmem:[%s626 + $0x6c] sm:$0xff]
        %v854 = vld [vmem:[%s626 + $0x74] sm:$0xf]
        %v855 = vld [vmem:[%s626 + $0x78] sm:$0xff]
        %v856 = vld [vmem:[%s626 + $0x80] sm:$0xf]
        %v857 = vld [vmem:[%s626 + $0x84] sm:$0xff]
        %v858 = vld [vmem:[%s626 + $0x8c] sm:$0xf]
        %v859 = vld [vmem:[%s626 + $0x90] sm:$0xff]
        %v860 = vld [vmem:[%s626 + $0x98] sm:$0xf]
        %v861 = vld [vmem:[%s626 + $0x9c] sm:$0xff]
        %v862 = vld [vmem:[%s626 + $0xa4] sm:$0xf]
        %v863 = vld [vmem:[%s626 + $0xa8] sm:$0xff]
        %v864 = vld [vmem:[%s626 + $0xb0] sm:$0xf]
        %v865 = vld [vmem:[%s626 + $0xb4] sm:$0xff]
        %v866 = vld [vmem:[%s626 + $0xbc] sm:$0xf]
        %v867 = vld [vmem:[%s635] sm:$0x7]
        %v869 = vlaneseq
        %v870 = vshrl.u32 %v869, 7
        %v871 = vsub.s32 0, %v870
        %v872 = vrot.slane %v867, %v871
        %v873 = vlaneseq
        %v874 = vshrl.u32 %v873, 7
        %v875 = vsub.s32 1, %v874
        %v876 = vrot.slane %v867, %v875
        %v877 = vlaneseq
        %v878 = vshrl.u32 %v877, 7
        %v879 = vsub.s32 2, %v878
        %v880 = vrot.slane %v867, %v879
        %v916 = vunpack.c.l.b16 %v835
        %v917 = vunpack.c.h.b16 %v835
        %v918 = vunpack.c.l.b16 %v836
        %v919 = vunpack.c.l.b16 %v837
        %v920 = vunpack.c.h.b16 %v837
        %v921 = vunpack.c.l.b16 %v838
        %v922 = vunpack.c.l.b16 %v839
        %v923 = vunpack.c.h.b16 %v839
        %v924 = vunpack.c.l.b16 %v840
        %v925 = vunpack.c.l.b16 %v841
        %v926 = vunpack.c.h.b16 %v841
        %v927 = vunpack.c.l.b16 %v842
        %v928 = vunpack.c.l.b16 %v843
        %v929 = vunpack.c.h.b16 %v843
        %v930 = vunpack.c.l.b16 %v844
        %v931 = vunpack.c.l.b16 %v845
        %v932 = vunpack.c.h.b16 %v845
        %v933 = vunpack.c.l.b16 %v846
        %v934 = vunpack.c.l.b16 %v847
        %v935 = vunpack.c.h.b16 %v847
        %v936 = vunpack.c.l.b16 %v848
        %v937 = vunpack.c.l.b16 %v849
        %v938 = vunpack.c.h.b16 %v849
        %v939 = vunpack.c.l.b16 %v850
        %v940 = vunpack.c.l.b16 %v851
        %v941 = vunpack.c.h.b16 %v851
        %v942 = vunpack.c.l.b16 %v852
        %v943 = vunpack.c.l.b16 %v853
        %v944 = vunpack.c.h.b16 %v853
        %v945 = vunpack.c.l.b16 %v854
        %v946 = vunpack.c.l.b16 %v855
        %v947 = vunpack.c.h.b16 %v855
        %v948 = vunpack.c.l.b16 %v856
        %v949 = vunpack.c.l.b16 %v857
        %v950 = vunpack.c.h.b16 %v857
        %v951 = vunpack.c.l.b16 %v858
        %v952 = vunpack.c.l.b16 %v859
        %v953 = vunpack.c.h.b16 %v859
        %v954 = vunpack.c.l.b16 %v860
        %v955 = vunpack.c.l.b16 %v861
        %v956 = vunpack.c.h.b16 %v861
        %v957 = vunpack.c.l.b16 %v862
        %v958 = vunpack.c.l.b16 %v863
        %v959 = vunpack.c.h.b16 %v863
        %v960 = vunpack.c.l.b16 %v864
        %v961 = vunpack.c.l.b16 %v865
        %v962 = vunpack.c.h.b16 %v865
        %v963 = vunpack.c.l.b16 %v866
        %v964 = vpack.c.b16 %v919, %v916
        %v965 = vpack.c.b16 %v920, %v917
        %v966 = vpack.c.b16 %v921, %v918
        %v967 = vpack.c.b16 %v925, %v922
        %v968 = vpack.c.b16 %v926, %v923
        %v969 = vpack.c.b16 %v927, %v924
        %v970 = vpack.c.b16 %v931, %v928
        %v971 = vpack.c.b16 %v932, %v929
        %v972 = vpack.c.b16 %v933, %v930
        %v973 = vpack.c.b16 %v937, %v934
        %v974 = vpack.c.b16 %v938, %v935
        %v975 = vpack.c.b16 %v939, %v936
        %v976 = vpack.c.b16 %v943, %v940
        %v977 = vpack.c.b16 %v944, %v941
        %v978 = vpack.c.b16 %v945, %v942
        %v979 = vpack.c.b16 %v949, %v946
        %v980 = vpack.c.b16 %v950, %v947
        %v981 = vpack.c.b16 %v951, %v948
        %v982 = vpack.c.b16 %v955, %v952
        %v983 = vpack.c.b16 %v956, %v953
        %v984 = vpack.c.b16 %v957, %v954
        %v985 = vpack.c.b16 %v961, %v958
        %v986 = vpack.c.b16 %v962, %v959
        %v987 = vpack.c.b16 %v963, %v960
        %1012 = vmatprep.subr.bf16.mxu0 %v986
        %1013 = vmatpush1.bf16.msra.mxu0 %v985
        %1014 = vmatprep.subr.bf16.mxu0 %v983
        %1015 = vmatpush1.bf16.msra.mxu0 %v982
        %1016 = vmatprep.subr.bf16.mxu0 %v980
        %1017 = vmatpush1.bf16.msra.mxu0 %v979
        %1018 = vmatprep.subr.bf16.mxu0 %v977
        %1019 = vmatpush1.bf16.msra.mxu0 %v976
        %1020 = vmatprep.subr.bf16.mxu0 %v974
        %1021 = vmatpush1.bf16.msra.mxu0 %v973
        %1022 = vmatprep.subr.bf16.mxu0 %v971
        %1023 = vmatpush1.bf16.msra.mxu0 %v970
        %1024 = vmatprep.subr.bf16.mxu0 %v968
        %1025 = vmatpush1.bf16.msra.mxu0 %v967
        %1026 = vmatprep.subr.bf16.mxu0 %v965
        %1027 = vmatpush1.bf16.msra.mxu0 %v964
        %1028 = vmatprep.subr.bf16.mxu0 0
        %1029 = vmatpush2.bf16.msra.mxu0 0
        %1030 = vmatprep.subr.bf16.mxu0 0
        %1031 = vmatpush2.bf16.msra.mxu0 0
        %1032 = vmatprep.subr.bf16.mxu0 0
        %1033 = vmatpush2.bf16.msra.mxu0 0
        %1034 = vmatprep.subr.bf16.mxu0 0
        %1035 = vmatpush2.bf16.msra.mxu0 0
        %1036 = vmatprep.subr.bf16.mxu0 0
        %1037 = vmatpush2.bf16.msra.mxu0 0
        %1038 = vmatprep.subr.bf16.mxu0 0
        %1039 = vmatpush2.bf16.msra.mxu0 0
        %1040 = vmatprep.subr.bf16.mxu0 0
        %1041 = vmatpush2.bf16.msra.mxu0 0
        %1042 = vmatprep.subr.bf16.mxu0 0
        %1043 = vmatpush2.bf16.msra.mxu0 0
        %1044 = vmatprep.mubr.bf16.mxu0 0
        %1045 = vmatmul.mubr.bf16.gmra.mxu0 %v834
        %v1046 = vpop.f32.mrf.mxu0
        %v1047 = vadd.f32 %v872, %v1046
        %v1048 = vpop.f32.mrf.mxu0
        %v1049 = vadd.f32 %v876, %v1048
        %v1050 = vpop.f32.mrf.mxu0
        %v1051 = vpop.f32.mrf.mxu0
        %1052 = vdwg.mxu0
        %1053 = vmatprep.subr.bf16.mxu0 0
        %1054 = vmatpush1.bf16.msra.mxu0 %v987
        %1055 = vmatprep.subr.bf16.mxu0 0
        %1056 = vmatpush1.bf16.msra.mxu0 %v984
        %1057 = vmatprep.subr.bf16.mxu0 0
        %1058 = vmatpush1.bf16.msra.mxu0 %v981
        %1059 = vmatprep.subr.bf16.mxu0 0
        %1060 = vmatpush1.bf16.msra.mxu0 %v978
        %1061 = vmatprep.subr.bf16.mxu0 0
        %1062 = vmatpush1.bf16.msra.mxu0 %v975
        %1063 = vmatprep.subr.bf16.mxu0 0
        %1064 = vmatpush1.bf16.msra.mxu0 %v972
        %1065 = vmatprep.subr.bf16.mxu0 0
        %1066 = vmatpush1.bf16.msra.mxu0 %v969
        %1067 = vmatprep.subr.bf16.mxu0 0
        %1068 = vmatpush1.bf16.msra.mxu0 %v966
        %1069 = vmatprep.subr.bf16.mxu0 0
        %1070 = vmatpush2.bf16.msra.mxu0 0
        %1071 = vmatprep.subr.bf16.mxu0 0
        %1072 = vmatpush2.bf16.msra.mxu0 0
        %1073 = vmatprep.subr.bf16.mxu0 0
        %1074 = vmatpush2.bf16.msra.mxu0 0
        %1075 = vmatprep.subr.bf16.mxu0 0
        %1076 = vmatpush2.bf16.msra.mxu0 0
        %1077 = vmatprep.subr.bf16.mxu0 0
        %1078 = vmatpush2.bf16.msra.mxu0 0
        %1079 = vmatprep.subr.bf16.mxu0 0
        %1080 = vmatpush2.bf16.msra.mxu0 0
        %1081 = vmatprep.subr.bf16.mxu0 0
        %1082 = vmatpush2.bf16.msra.mxu0 0
        %1083 = vmatprep.subr.bf16.mxu0 0
        %1084 = vmatpush2.bf16.msra.mxu0 0
        %1085 = vmatprep.mubr.bf16.mxu0 0
        %1086 = vmatmul.mubr.bf16.gmra.mxu0 %v834
        %v1087 = vpop.f32.mrf.mxu0
        %v1088 = vadd.f32 %v880, %v1087
        %v1089 = vpop.f32.mrf.mxu0
        %v1090 = vpop.f32.mrf.mxu0
        %v1091 = vpop.f32.mrf.mxu0
        %1092 = vdwg.mxu0
        %v1093 = vlaneseq
        %v1094 = vand.u32 %v1093, 127
        %vm1095 = vcmp.lt.s32.totalorder %v1094, 5
        %v1096 = vsel %vm1095, 0.0, -1e+30
        %v1097 = vpack.c.bf16 %v1047, %v1047
        %v1098 = vpack.c.bf16 %v1049, %v1049
        %v1099 = vpack.c.bf16 %v1088, %v1088
        %vm1100 = vcmask 261120
        %v1102 = vsel %vm1100, %v1097, 0
        %v1105 = vsel %vm1100, %v1098, 0
        %1107 = vmatprep.subr.bf16.mxu0 0
        %1108 = vmatpush1.bf16.xpose.msra.mxu0 0
        %1109 = vmatprep.subr.bf16.mxu0 0
        %1110 = vmatpush1.bf16.xpose.msra.mxu0 0
        %1111 = vmatprep.subr.bf16.mxu0 0
        %1112 = vmatpush1.bf16.xpose.msra.mxu0 0
        %1113 = vmatprep.subr.bf16.mxu0 0
        %1114 = vmatpush1.bf16.xpose.msra.mxu0 0
        %1115 = vmatprep.subr.bf16.mxu0 0
        %1116 = vmatpush1.bf16.xpose.msra.mxu0 0
        %1117 = vmatprep.subr.bf16.mxu0 0
        %1118 = vmatpush1.bf16.xpose.msra.mxu0 0
        %1119 = vmatprep.subr.bf16.mxu0 0
        %1120 = vmatpush1.bf16.xpose.msra.mxu0 0
        %1121 = vmatprep.subr.bf16.mxu0 0
        %1122 = vmatpush1.bf16.xpose.msra.mxu0 %v1105
        %1123 = vmatprep.subr.bf16.mxu0 0
        %1124 = vmatpush2.bf16.xpose.msra.mxu0 0
        %1125 = vmatprep.subr.bf16.mxu0 0
        %1126 = vmatpush2.bf16.xpose.msra.mxu0 0
        %1127 = vmatprep.subr.bf16.mxu0 0
        %1128 = vmatpush2.bf16.xpose.msra.mxu0 0
        %1129 = vmatprep.subr.bf16.mxu0 0
        %1130 = vmatpush2.bf16.xpose.msra.mxu0 0
        %1131 = vmatprep.subr.bf16.mxu0 0
        %1132 = vmatpush2.bf16.xpose.msra.mxu0 0
        %1133 = vmatprep.subr.bf16.mxu0 0
        %1134 = vmatpush2.bf16.xpose.msra.mxu0 0
        %1135 = vmatprep.subr.bf16.mxu0 0
        %1136 = vmatpush2.bf16.xpose.msra.mxu0 0
        %1137 = vmatprep.subr.bf16.mxu0 0
        %1138 = vmatpush2.bf16.xpose.msra.mxu0 0
        %1139 = vmatprep.mubr.bf16.mxu0 0
        %1140 = vmatmul.mubr.bf16.gmra.mxu0 %v1102
        %v1141 = vpop.f32.mrf.mxu0
        %v1142 = vadd.f32 %v1096, %v1141
        %v1143 = vpop.f32.mrf.mxu0
        %v1144 = vpop.f32.mrf.mxu0
        %v1145 = vpop.f32.mrf.mxu0
        %1146 = vdwg.mxu0
        %vm1147 = vcmask 64512
        %v1148 = vsel %vm1147, %v1142, -inf
        %1149 = vmax.xlane.f32.xlu0 %v1148
        %v1150 = vpop.xlane.xlu0 %1149
        %v1151 = vsub.f32 %v1142, %v1150
        %v1152 = vmul.f32 %v1151, 1.442695
        %v1153 = vpow.pop %v1152
        %v1154 = vsel %vm1147, %v1153, 0.0
        %1155 = vadd.xlane.f32.xlu0 %v1154
        %v1156 = vpop.xlane.xlu0 %1155
        %v1157 = vrcp.pop %v1156
        %v1158 = vpack.c.bf16 %v1153, %v1153
        %v1160 = vsel %vm1147, %v1158, 0
        %vm1162 = vcmask 1043456
        %v1164 = vsel %vm1162, %v1099, 0
        %1166 = vmatprep.subr.bf16.mxu0 0
        %1167 = vmatpush1.bf16.msra.mxu0 0
        %1168 = vmatprep.subr.bf16.mxu0 0
        %1169 = vmatpush1.bf16.msra.mxu0 0
        %1170 = vmatprep.subr.bf16.mxu0 0
        %1171 = vmatpush1.bf16.msra.mxu0 0
        %1172 = vmatprep.subr.bf16.mxu0 0
        %1173 = vmatpush1.bf16.msra.mxu0 0
        %1174 = vmatprep.subr.bf16.mxu0 0
        %1175 = vmatpush1.bf16.msra.mxu0 0
        %1176 = vmatprep.subr.bf16.mxu0 0
        %1177 = vmatpush1.bf16.msra.mxu0 0
        %1178 = vmatprep.subr.bf16.mxu0 0
        %1179 = vmatpush1.bf16.msra.mxu0 0
        %1180 = vmatprep.subr.bf16.mxu0 0
        %1181 = vmatpush1.bf16.msra.mxu0 %v1164
        %1182 = vmatprep.subr.bf16.mxu0 0
        %1183 = vmatpush2.bf16.msra.mxu0 0
        %1184 = vmatprep.subr.bf16.mxu0 0
        %1185 = vmatpush2.bf16.msra.mxu0 0
        %1186 = vmatprep.subr.bf16.mxu0 0
        %1187 = vmatpush2.bf16.msra.mxu0 0
        %1188 = vmatprep.subr.bf16.mxu0 0
        %1189 = vmatpush2.bf16.msra.mxu0 0
        %1190 = vmatprep.subr.bf16.mxu0 0
        %1191 = vmatpush2.bf16.msra.mxu0 0
        %1192 = vmatprep.subr.bf16.mxu0 0
        %1193 = vmatpush2.bf16.msra.mxu0 0
        %1194 = vmatprep.subr.bf16.mxu0 0
        %1195 = vmatpush2.bf16.msra.mxu0 0
        %1196 = vmatprep.subr.bf16.mxu0 0
        %1197 = vmatpush2.bf16.msra.mxu0 0
        %1198 = vmatprep.mubr.bf16.mxu0 0
        %1199 = vmatmul.mubr.bf16.gmra.mxu0 %v1160
        %v1200 = vpop.f32.mrf.mxu0
        %v1201 = vadd.f32 0.0, %v1200
        %v1202 = vpop.f32.mrf.mxu0
        %v1203 = vpop.f32.mrf.mxu0
        %v1204 = vpop.f32.mrf.mxu0
        %1205 = vdwg.mxu0
        %v1206 = vmul.f32 %v1201, %v1157
        %1208 = vrot.lane.b32.xlu0 %v1097, 96
        %v1209 = vpop.permute.xlu0 %1208
        %1211 = vrot.lane.b32.xlu0 %v1098, 96
        %v1212 = vpop.permute.xlu0 %1211
        %v1214 = vsel %vm1100, %v1209, 0
        %v1217 = vsel %vm1100, %v1212, 0
        %1219 = vmatprep.subr.bf16.mxu0 0
        %1220 = vmatpush1.bf16.xpose.msra.mxu0 0
        %1221 = vmatprep.subr.bf16.mxu0 0
        %1222 = vmatpush1.bf16.xpose.msra.mxu0 0
        %1223 = vmatprep.subr.bf16.mxu0 0
        %1224 = vmatpush1.bf16.xpose.msra.mxu0 0
        %1225 = vmatprep.subr.bf16.mxu0 0
        %1226 = vmatpush1.bf16.xpose.msra.mxu0 0
        %1227 = vmatprep.subr.bf16.mxu0 0
        %1228 = vmatpush1.bf16.xpose.msra.mxu0 0
        %1229 = vmatprep.subr.bf16.mxu0 0
        %1230 = vmatpush1.bf16.xpose.msra.mxu0 0
        %1231 = vmatprep.subr.bf16.mxu0 0
        %1232 = vmatpush1.bf16.xpose.msra.mxu0 0
        %1233 = vmatprep.subr.bf16.mxu0 0
        %1234 = vmatpush1.bf16.xpose.msra.mxu0 %v1217
        %1235 = vmatprep.subr.bf16.mxu0 0
        %1236 = vmatpush2.bf16.xpose.msra.mxu0 0
        %1237 = vmatprep.subr.bf16.mxu0 0
        %1238 = vmatpush2.bf16.xpose.msra.mxu0 0
        %1239 = vmatprep.subr.bf16.mxu0 0
        %1240 = vmatpush2.bf16.xpose.msra.mxu0 0
        %1241 = vmatprep.subr.bf16.mxu0 0
        %1242 = vmatpush2.bf16.xpose.msra.mxu0 0
        %1243 = vmatprep.subr.bf16.mxu0 0
        %1244 = vmatpush2.bf16.xpose.msra.mxu0 0
        %1245 = vmatprep.subr.bf16.mxu0 0
        %1246 = vmatpush2.bf16.xpose.msra.mxu0 0
        %1247 = vmatprep.subr.bf16.mxu0 0
        %1248 = vmatpush2.bf16.xpose.msra.mxu0 0
        %1249 = vmatprep.subr.bf16.mxu0 0
        %1250 = vmatpush2.bf16.xpose.msra.mxu0 0
        %1251 = vmatprep.mubr.bf16.mxu0 0
        %1252 = vmatmul.mubr.bf16.gmra.mxu0 %v1214
        %v1253 = vpop.f32.mrf.mxu0
        %v1254 = vadd.f32 %v1096, %v1253
        %v1255 = vpop.f32.mrf.mxu0
        %v1256 = vpop.f32.mrf.mxu0
        %v1257 = vpop.f32.mrf.mxu0
        %1258 = vdwg.mxu0
        %v1259 = vsel %vm1147, %v1254, -inf
        %1260 = vmax.xlane.f32.xlu0 %v1259
        %v1261 = vpop.xlane.xlu0 %1260
        %v1262 = vsub.f32 %v1254, %v1261
        %v1263 = vmul.f32 %v1262, 1.442695
        %v1264 = vpow.pop %v1263
        %v1265 = vsel %vm1147, %v1264, 0.0
        %1266 = vadd.xlane.f32.xlu0 %v1265
        %v1267 = vpop.xlane.xlu0 %1266
        %v1268 = vrcp.pop %v1267
        %v1269 = vpack.c.bf16 %v1264, %v1264
        %1271 = vrot.lane.b32.xlu0 %v1099, 96
        %v1272 = vpop.permute.xlu0 %1271
        %v1274 = vsel %vm1147, %v1269, 0
        %v1277 = vsel %vm1162, %v1272, 0
        %1279 = vmatprep.subr.bf16.mxu0 0
        %1280 = vmatpush1.bf16.msra.mxu0 0
        %1281 = vmatprep.subr.bf16.mxu0 0
        %1282 = vmatpush1.bf16.msra.mxu0 0
        %1283 = vmatprep.subr.bf16.mxu0 0
        %1284 = vmatpush1.bf16.msra.mxu0 0
        %1285 = vmatprep.subr.bf16.mxu0 0
        %1286 = vmatpush1.bf16.msra.mxu0 0
        %1287 = vmatprep.subr.bf16.mxu0 0
        %1288 = vmatpush1.bf16.msra.mxu0 0
        %1289 = vmatprep.subr.bf16.mxu0 0
        %1290 = vmatpush1.bf16.msra.mxu0 0
        %1291 = vmatprep.subr.bf16.mxu0 0
        %1292 = vmatpush1.bf16.msra.mxu0 0
        %1293 = vmatprep.subr.bf16.mxu0 0
        %1294 = vmatpush1.bf16.msra.mxu0 %v1277
        %1295 = vmatprep.subr.bf16.mxu0 0
        %1296 = vmatpush2.bf16.msra.mxu0 0
        %1297 = vmatprep.subr.bf16.mxu0 0
        %1298 = vmatpush2.bf16.msra.mxu0 0
        %1299 = vmatprep.subr.bf16.mxu0 0
        %1300 = vmatpush2.bf16.msra.mxu0 0
        %1301 = vmatprep.subr.bf16.mxu0 0
        %1302 = vmatpush2.bf16.msra.mxu0 0
        %1303 = vmatprep.subr.bf16.mxu0 0
        %1304 = vmatpush2.bf16.msra.mxu0 0
        %1305 = vmatprep.subr.bf16.mxu0 0
        %1306 = vmatpush2.bf16.msra.mxu0 0
        %1307 = vmatprep.subr.bf16.mxu0 0
        %1308 = vmatpush2.bf16.msra.mxu0 0
        %1309 = vmatprep.subr.bf16.mxu0 0
        %1310 = vmatpush2.bf16.msra.mxu0 0
        %1311 = vmatprep.mubr.bf16.mxu0 0
        %1312 = vmatmul.mubr.bf16.gmra.mxu0 %v1274
        %v1313 = vpop.f32.mrf.mxu0
        %v1314 = vadd.f32 0.0, %v1313
        %v1315 = vpop.f32.mrf.mxu0
        %v1316 = vpop.f32.mrf.mxu0
        %v1317 = vpop.f32.mrf.mxu0
        %1318 = vdwg.mxu0
        %v1319 = vmul.f32 %v1314, %v1268
        %1320 = vrot.lane.b32.xlu0 %v1097, 64
        %v1321 = vpop.permute.xlu0 %1320
        %1322 = vrot.lane.b32.xlu0 %v1098, 64
        %v1323 = vpop.permute.xlu0 %1322
        %v1325 = vsel %vm1100, %v1321, 0
        %v1328 = vsel %vm1100, %v1323, 0
        %1330 = vmatprep.subr.bf16.mxu0 0
        %1331 = vmatpush1.bf16.xpose.msra.mxu0 0
        %1332 = vmatprep.subr.bf16.mxu0 0
        %1333 = vmatpush1.bf16.xpose.msra.mxu0 0
        %1334 = vmatprep.subr.bf16.mxu0 0
        %1335 = vmatpush1.bf16.xpose.msra.mxu0 0
        %1336 = vmatprep.subr.bf16.mxu0 0
        %1337 = vmatpush1.bf16.xpose.msra.mxu0 0
        %1338 = vmatprep.subr.bf16.mxu0 0
        %1339 = vmatpush1.bf16.xpose.msra.mxu0 0
        %1340 = vmatprep.subr.bf16.mxu0 0
        %1341 = vmatpush1.bf16.xpose.msra.mxu0 0
        %1342 = vmatprep.subr.bf16.mxu0 0
        %1343 = vmatpush1.bf16.xpose.msra.mxu0 0
        %1344 = vmatprep.subr.bf16.mxu0 0
        %1345 = vmatpush1.bf16.xpose.msra.mxu0 %v1328
        %1346 = vmatprep.subr.bf16.mxu0 0
        %1347 = vmatpush2.bf16.xpose.msra.mxu0 0
        %1348 = vmatprep.subr.bf16.mxu0 0
        %1349 = vmatpush2.bf16.xpose.msra.mxu0 0
        %1350 = vmatprep.subr.bf16.mxu0 0
        %1351 = vmatpush2.bf16.xpose.msra.mxu0 0
        %1352 = vmatprep.subr.bf16.mxu0 0
        %1353 = vmatpush2.bf16.xpose.msra.mxu0 0
        %1354 = vmatprep.subr.bf16.mxu0 0
        %1355 = vmatpush2.bf16.xpose.msra.mxu0 0
        %1356 = vmatprep.subr.bf16.mxu0 0
        %1357 = vmatpush2.bf16.xpose.msra.mxu0 0
        %1358 = vmatprep.subr.bf16.mxu0 0
        %1359 = vmatpush2.bf16.xpose.msra.mxu0 0
        %1360 = vmatprep.subr.bf16.mxu0 0
        %1361 = vmatpush2.bf16.xpose.msra.mxu0 0
        %1362 = vmatprep.mubr.bf16.mxu0 0
        %1363 = vmatmul.mubr.bf16.gmra.mxu0 %v1325
        %v1364 = vpop.f32.mrf.mxu0
        %v1365 = vadd.f32 %v1096, %v1364
        %v1366 = vpop.f32.mrf.mxu0
        %v1367 = vpop.f32.mrf.mxu0
        %v1368 = vpop.f32.mrf.mxu0
        %1369 = vdwg.mxu0
        %v1370 = vsel %vm1147, %v1365, -inf
        %1371 = vmax.xlane.f32.xlu0 %v1370
        %v1372 = vpop.xlane.xlu0 %1371
        %v1373 = vsub.f32 %v1365, %v1372
        %v1374 = vmul.f32 %v1373, 1.442695
        %v1375 = vpow.pop %v1374
        %v1376 = vsel %vm1147, %v1375, 0.0
        %1377 = vadd.xlane.f32.xlu0 %v1376
        %v1378 = vpop.xlane.xlu0 %1377
        %v1379 = vrcp.pop %v1378
        %v1380 = vpack.c.bf16 %v1375, %v1375
        %1381 = vrot.lane.b32.xlu0 %v1099, 64
        %v1382 = vpop.permute.xlu0 %1381
        %v1384 = vsel %vm1147, %v1380, 0
        %v1387 = vsel %vm1162, %v1382, 0
        %1389 = vmatprep.subr.bf16.mxu0 0
        %1390 = vmatpush1.bf16.msra.mxu0 0
        %1391 = vmatprep.subr.bf16.mxu0 0
        %1392 = vmatpush1.bf16.msra.mxu0 0
        %1393 = vmatprep.subr.bf16.mxu0 0
        %1394 = vmatpush1.bf16.msra.mxu0 0
        %1395 = vmatprep.subr.bf16.mxu0 0
        %1396 = vmatpush1.bf16.msra.mxu0 0
        %1397 = vmatprep.subr.bf16.mxu0 0
        %1398 = vmatpush1.bf16.msra.mxu0 0
        %1399 = vmatprep.subr.bf16.mxu0 0
        %1400 = vmatpush1.bf16.msra.mxu0 0
        %1401 = vmatprep.subr.bf16.mxu0 0
        %1402 = vmatpush1.bf16.msra.mxu0 0
        %1403 = vmatprep.subr.bf16.mxu0 0
        %1404 = vmatpush1.bf16.msra.mxu0 %v1387
        %1405 = vmatprep.subr.bf16.mxu0 0
        %1406 = vmatpush2.bf16.msra.mxu0 0
        %1407 = vmatprep.subr.bf16.mxu0 0
        %1408 = vmatpush2.bf16.msra.mxu0 0
        %1409 = vmatprep.subr.bf16.mxu0 0
        %1410 = vmatpush2.bf16.msra.mxu0 0
        %1411 = vmatprep.subr.bf16.mxu0 0
        %1412 = vmatpush2.bf16.msra.mxu0 0
        %1413 = vmatprep.subr.bf16.mxu0 0
        %1414 = vmatpush2.bf16.msra.mxu0 0
        %1415 = vmatprep.subr.bf16.mxu0 0
        %1416 = vmatpush2.bf16.msra.mxu0 0
        %1417 = vmatprep.subr.bf16.mxu0 0
        %1418 = vmatpush2.bf16.msra.mxu0 0
        %1419 = vmatprep.subr.bf16.mxu0 0
        %1420 = vmatpush2.bf16.msra.mxu0 0
        %1421 = vmatprep.mubr.bf16.mxu0 0
        %1422 = vmatmul.mubr.bf16.gmra.mxu0 %v1384
        %v1423 = vpop.f32.mrf.mxu0
        %v1424 = vadd.f32 0.0, %v1423
        %v1425 = vpop.f32.mrf.mxu0
        %v1426 = vpop.f32.mrf.mxu0
        %v1427 = vpop.f32.mrf.mxu0
        %1428 = vdwg.mxu0
        %v1429 = vmul.f32 %v1424, %v1379
        %1430 = vrot.lane.b32.xlu0 %v1097, 32
        %v1431 = vpop.permute.xlu0 %1430
        %1432 = vrot.lane.b32.xlu0 %v1098, 32
        %v1433 = vpop.permute.xlu0 %1432
        %v1435 = vsel %vm1100, %v1431, 0
        %v1438 = vsel %vm1100, %v1433, 0
        %1440 = vmatprep.subr.bf16.mxu0 0
        %1441 = vmatpush1.bf16.xpose.msra.mxu0 0
        %1442 = vmatprep.subr.bf16.mxu0 0
        %1443 = vmatpush1.bf16.xpose.msra.mxu0 0
        %1444 = vmatprep.subr.bf16.mxu0 0
        %1445 = vmatpush1.bf16.xpose.msra.mxu0 0
        %1446 = vmatprep.subr.bf16.mxu0 0
        %1447 = vmatpush1.bf16.xpose.msra.mxu0 0
        %1448 = vmatprep.subr.bf16.mxu0 0
        %1449 = vmatpush1.bf16.xpose.msra.mxu0 0
        %1450 = vmatprep.subr.bf16.mxu0 0
        %1451 = vmatpush1.bf16.xpose.msra.mxu0 0
        %1452 = vmatprep.subr.bf16.mxu0 0
        %1453 = vmatpush1.bf16.xpose.msra.mxu0 0
        %1454 = vmatprep.subr.bf16.mxu0 0
        %1455 = vmatpush1.bf16.xpose.msra.mxu0 %v1438
        %1456 = vmatprep.subr.bf16.mxu0 0
        %1457 = vmatpush2.bf16.xpose.msra.mxu0 0
        %1458 = vmatprep.subr.bf16.mxu0 0
        %1459 = vmatpush2.bf16.xpose.msra.mxu0 0
        %1460 = vmatprep.subr.bf16.mxu0 0
        %1461 = vmatpush2.bf16.xpose.msra.mxu0 0
        %1462 = vmatprep.subr.bf16.mxu0 0
        %1463 = vmatpush2.bf16.xpose.msra.mxu0 0
        %1464 = vmatprep.subr.bf16.mxu0 0
        %1465 = vmatpush2.bf16.xpose.msra.mxu0 0
        %1466 = vmatprep.subr.bf16.mxu0 0
        %1467 = vmatpush2.bf16.xpose.msra.mxu0 0
        %1468 = vmatprep.subr.bf16.mxu0 0
        %1469 = vmatpush2.bf16.xpose.msra.mxu0 0
        %1470 = vmatprep.subr.bf16.mxu0 0
        %1471 = vmatpush2.bf16.xpose.msra.mxu0 0
        %1472 = vmatprep.mubr.bf16.mxu0 0
        %1473 = vmatmul.mubr.bf16.gmra.mxu0 %v1435
        %v1474 = vpop.f32.mrf.mxu0
        %v1475 = vadd.f32 %v1096, %v1474
        %v1476 = vpop.f32.mrf.mxu0
        %v1477 = vpop.f32.mrf.mxu0
        %v1478 = vpop.f32.mrf.mxu0
        %1479 = vdwg.mxu0
        %v1480 = vsel %vm1147, %v1475, -inf
        %1481 = vmax.xlane.f32.xlu0 %v1480
        %v1482 = vpop.xlane.xlu0 %1481
        %v1483 = vsub.f32 %v1475, %v1482
        %v1484 = vmul.f32 %v1483, 1.442695
        %v1485 = vpow.pop %v1484
        %v1486 = vsel %vm1147, %v1485, 0.0
        %1487 = vadd.xlane.f32.xlu0 %v1486
        %v1488 = vpop.xlane.xlu0 %1487
        %v1489 = vrcp.pop %v1488
        %v1490 = vpack.c.bf16 %v1485, %v1485
        %1491 = vrot.lane.b32.xlu0 %v1099, 32
        %v1492 = vpop.permute.xlu0 %1491
        %v1494 = vsel %vm1147, %v1490, 0
        %v1497 = vsel %vm1162, %v1492, 0
        %1499 = vmatprep.subr.bf16.mxu0 0
        %1500 = vmatpush1.bf16.msra.mxu0 0
        %1501 = vmatprep.subr.bf16.mxu0 0
        %1502 = vmatpush1.bf16.msra.mxu0 0
        %1503 = vmatprep.subr.bf16.mxu0 0
        %1504 = vmatpush1.bf16.msra.mxu0 0
        %1505 = vmatprep.subr.bf16.mxu0 0
        %1506 = vmatpush1.bf16.msra.mxu0 0
        %1507 = vmatprep.subr.bf16.mxu0 0
        %1508 = vmatpush1.bf16.msra.mxu0 0
        %1509 = vmatprep.subr.bf16.mxu0 0
        %1510 = vmatpush1.bf16.msra.mxu0 0
        %1511 = vmatprep.subr.bf16.mxu0 0
        %1512 = vmatpush1.bf16.msra.mxu0 0
        %1513 = vmatprep.subr.bf16.mxu0 0
        %1514 = vmatpush1.bf16.msra.mxu0 %v1497
        %1515 = vmatprep.subr.bf16.mxu0 0
        %1516 = vmatpush2.bf16.msra.mxu0 0
        %1517 = vmatprep.subr.bf16.mxu0 0
        %1518 = vmatpush2.bf16.msra.mxu0 0
        %1519 = vmatprep.subr.bf16.mxu0 0
        %1520 = vmatpush2.bf16.msra.mxu0 0
        %1521 = vmatprep.subr.bf16.mxu0 0
        %1522 = vmatpush2.bf16.msra.mxu0 0
        %1523 = vmatprep.subr.bf16.mxu0 0
        %1524 = vmatpush2.bf16.msra.mxu0 0
        %1525 = vmatprep.subr.bf16.mxu0 0
        %1526 = vmatpush2.bf16.msra.mxu0 0
        %1527 = vmatprep.subr.bf16.mxu0 0
        %1528 = vmatpush2.bf16.msra.mxu0 0
        %1529 = vmatprep.subr.bf16.mxu0 0
        %1530 = vmatpush2.bf16.msra.mxu0 0
        %1531 = vmatprep.mubr.bf16.mxu0 0
        %1532 = vmatmul.mubr.bf16.gmra.mxu0 %v1494
        %v1533 = vpop.f32.mrf.mxu0
        %v1534 = vadd.f32 0.0, %v1533
        %v1535 = vpop.f32.mrf.mxu0
        %v1536 = vpop.f32.mrf.mxu0
        %v1537 = vpop.f32.mrf.mxu0
        %1538 = vdwg.mxu0
        %v1539 = vmul.f32 %v1534, %v1489
        %1541 = vrot.lane.b32.xlu0 %v1319, 32
        %v1542 = vpop.permute.xlu0 %1541
        %1545 = vrot.lane.b32.xlu0 %v1429, 64
        %v1546 = vpop.permute.xlu0 %1545
        %1549 = vrot.lane.b32.xlu0 %v1539, 96
        %v1550 = vpop.permute.xlu0 %1549
        %v1552 = vsel %vm1100, %v1206, %v1542
        %vm1553 = vcmask 523264
        %v1554 = vsel %vm1553, %v1552, %v1546
        %vm1555 = vcmask 785408
        %v1556 = vsel %vm1555, %v1554, %v1550
        %v1557 = vpack.c.bf16 %v1556, %v1556
        %v1558 = vld [vmem:[%s644] sm:$0xf]
        %v1559 = vld [vmem:[%s644 + $0x4] sm:$0xf]
        %v1560 = vld [vmem:[%s644 + $0x8] sm:$0xf]
        %v1561 = vld [vmem:[%s644 + $0xc] sm:$0xf]
        %v1562 = vld [vmem:[%s644 + $0x10] sm:$0xf]
        %v1563 = vld [vmem:[%s644 + $0x14] sm:$0xf]
        %v1564 = vld [vmem:[%s644 + $0x18] sm:$0xf]
        %v1565 = vld [vmem:[%s644 + $0x1c] sm:$0xf]
        %v1566 = vld [vmem:[%s644 + $0x20] sm:$0xf]
        %v1567 = vld [vmem:[%s644 + $0x24] sm:$0xf]
        %v1568 = vld [vmem:[%s644 + $0x28] sm:$0xf]
        %v1569 = vld [vmem:[%s644 + $0x2c] sm:$0xf]
        %v1570 = vld [vmem:[%s644 + $0x30] sm:$0xf]
        %v1571 = vld [vmem:[%s644 + $0x34] sm:$0xf]
        %v1572 = vld [vmem:[%s644 + $0x38] sm:$0xf]
        %v1573 = vld [vmem:[%s644 + $0x3c] sm:$0xf]
        %v1574 = vld [vmem:[%s652] sm:$0x1]
        %v1576 = vlaneseq
        %v1577 = vshrl.u32 %v1576, 7
        %v1578 = vsub.s32 0, %v1577
        %v1579 = vrot.slane %v1574, %v1578
        %v1597 = vunpack.c.l.b16 %v1558
        %v1598 = vunpack.c.l.b16 %v1559
        %v1599 = vunpack.c.l.b16 %v1560
        %v1600 = vunpack.c.l.b16 %v1561
        %v1601 = vunpack.c.l.b16 %v1562
        %v1602 = vunpack.c.l.b16 %v1563
        %v1603 = vunpack.c.l.b16 %v1564
        %v1604 = vunpack.c.l.b16 %v1565
        %v1605 = vunpack.c.l.b16 %v1566
        %v1606 = vunpack.c.l.b16 %v1567
        %v1607 = vunpack.c.l.b16 %v1568
        %v1608 = vunpack.c.l.b16 %v1569
        %v1609 = vunpack.c.l.b16 %v1570
        %v1610 = vunpack.c.l.b16 %v1571
        %v1611 = vunpack.c.l.b16 %v1572
        %v1612 = vunpack.c.l.b16 %v1573
        %v1613 = vpack.c.b16 %v1598, %v1597
        %v1614 = vpack.c.b16 %v1600, %v1599
        %v1615 = vpack.c.b16 %v1602, %v1601
        %v1616 = vpack.c.b16 %v1604, %v1603
        %v1617 = vpack.c.b16 %v1606, %v1605
        %v1618 = vpack.c.b16 %v1608, %v1607
        %v1619 = vpack.c.b16 %v1610, %v1609
        %v1620 = vpack.c.b16 %v1612, %v1611
        %1629 = vmatprep.subr.bf16.mxu0 0
        %1630 = vmatpush1.bf16.msra.mxu0 %v1620
        %1631 = vmatprep.subr.bf16.mxu0 0
        %1632 = vmatpush1.bf16.msra.mxu0 %v1619
        %1633 = vmatprep.subr.bf16.mxu0 0
        %1634 = vmatpush1.bf16.msra.mxu0 %v1618
        %1635 = vmatprep.subr.bf16.mxu0 0
        %1636 = vmatpush1.bf16.msra.mxu0 %v1617
        %1637 = vmatprep.subr.bf16.mxu0 0
        %1638 = vmatpush1.bf16.msra.mxu0 %v1616
        %1639 = vmatprep.subr.bf16.mxu0 0
        %1640 = vmatpush1.bf16.msra.mxu0 %v1615
        %1641 = vmatprep.subr.bf16.mxu0 0
        %1642 = vmatpush1.bf16.msra.mxu0 %v1614
        %1643 = vmatprep.subr.bf16.mxu0 0
        %1644 = vmatpush1.bf16.msra.mxu0 %v1613
        %1645 = vmatprep.subr.bf16.mxu0 0
        %1646 = vmatpush2.bf16.msra.mxu0 0
        %1647 = vmatprep.subr.bf16.mxu0 0
        %1648 = vmatpush2.bf16.msra.mxu0 0
        %1649 = vmatprep.subr.bf16.mxu0 0
        %1650 = vmatpush2.bf16.msra.mxu0 0
        %1651 = vmatprep.subr.bf16.mxu0 0
        %1652 = vmatpush2.bf16.msra.mxu0 0
        %1653 = vmatprep.subr.bf16.mxu0 0
        %1654 = vmatpush2.bf16.msra.mxu0 0
        %1655 = vmatprep.subr.bf16.mxu0 0
        %1656 = vmatpush2.bf16.msra.mxu0 0
        %1657 = vmatprep.subr.bf16.mxu0 0
        %1658 = vmatpush2.bf16.msra.mxu0 0
        %1659 = vmatprep.subr.bf16.mxu0 0
        %1660 = vmatpush2.bf16.msra.mxu0 0
        %1661 = vmatprep.mubr.bf16.mxu0 0
        %1662 = vmatmul.mubr.bf16.gmra.mxu0 %v1557
        %v1663 = vpop.f32.mrf.mxu0
        %v1664 = vadd.f32 %v1579, %v1663
        %v1665 = vpop.f32.mrf.mxu0
        %v1666 = vpop.f32.mrf.mxu0
        %v1667 = vpop.f32.mrf.mxu0
        %1668 = vdwg.mxu0
        %v1669 = vadd.f32 %v805, %v1664
        %v1670 = vld [vmem:[%s660] sm:$0x1]
        %v1671 = vld [vmem:[%s668] sm:$0x1]
        %1672 = vadd.xlane.f32.xlu0 %v1669
        %v1673 = vpop.xlane.xlu0 %1672
        %v1674 = vmul.f32 %v1673, %v810
        %v1675 = vsub.f32 %v1669, %v1674
        %v1676 = vmul.f32 %v1675, %v1675
        %1677 = vadd.xlane.f32.xlu0 %v1676
        %v1678 = vpop.xlane.xlu0 %1677
        %v1679 = vmul.f32 %v1678, %v810
        %v1680 = vadd.f32 %v1679, 1e-05
        %v1681 = vrsqrt.pop %v1680
        %v1682 = vmul.f32 %v1675, %v1681
        %v1684 = vlaneseq
        %v1685 = vshrl.u32 %v1684, 7
        %v1686 = vsub.s32 0, %v1685
        %v1687 = vrot.slane %v1670, %v1686
        %v1689 = vmul.f32 %v1682, %v1687
        %v1691 = vlaneseq
        %v1692 = vshrl.u32 %v1691, 7
        %v1693 = vsub.s32 0, %v1692
        %v1694 = vrot.slane %v1671, %v1693
        %v1696 = vadd.f32 %v1689, %v1694
        %v1697 = vpack.c.bf16 %v1696, %v1696
        %v1698 = vld [vmem:[%s792] sm:$0xff]
        %v1699 = vld [vmem:[%s792 + $0x8] sm:$0xff]
        %v1700 = vld [vmem:[%s792 + $0x10] sm:$0xff]
        %v1701 = vld [vmem:[%s792 + $0x18] sm:$0xff]
        %v1702 = vld [vmem:[%s792 + $0x20] sm:$0xff]
        %v1703 = vld [vmem:[%s792 + $0x28] sm:$0xff]
        %v1704 = vld [vmem:[%s792 + $0x30] sm:$0xff]
        %v1705 = vld [vmem:[%s792 + $0x38] sm:$0xff]
        %v1706 = vld [vmem:[%s792 + $0x40] sm:$0xff]
        %v1707 = vld [vmem:[%s792 + $0x48] sm:$0xff]
        %v1708 = vld [vmem:[%s792 + $0x50] sm:$0xff]
        %v1709 = vld [vmem:[%s792 + $0x58] sm:$0xff]
        %v1710 = vld [vmem:[%s792 + $0x60] sm:$0xff]
        %v1711 = vld [vmem:[%s792 + $0x68] sm:$0xff]
        %v1712 = vld [vmem:[%s792 + $0x70] sm:$0xff]
        %v1713 = vld [vmem:[%s792 + $0x78] sm:$0xff]
        %v1714 = vld [vmem:[%s792 + $0x80] sm:$0xff]
        %v1715 = vld [vmem:[%s792 + $0x88] sm:$0xff]
        %v1716 = vld [vmem:[%s792 + $0x90] sm:$0xff]
        %v1717 = vld [vmem:[%s792 + $0x98] sm:$0xff]
        %v1718 = vld [vmem:[%s792 + $0xa0] sm:$0xff]
        %v1719 = vld [vmem:[%s792 + $0xa8] sm:$0xff]
        %v1720 = vld [vmem:[%s792 + $0xb0] sm:$0xff]
        %v1721 = vld [vmem:[%s792 + $0xb8] sm:$0xff]
        %v1722 = vld [vmem:[%s792 + $0xc0] sm:$0xff]
        %v1723 = vld [vmem:[%s792 + $0xc8] sm:$0xff]
        %v1724 = vld [vmem:[%s792 + $0xd0] sm:$0xff]
        %v1725 = vld [vmem:[%s792 + $0xd8] sm:$0xff]
        %v1726 = vld [vmem:[%s792 + $0xe0] sm:$0xff]
        %v1727 = vld [vmem:[%s792 + $0xe8] sm:$0xff]
        %v1728 = vld [vmem:[%s792 + $0xf0] sm:$0xff]
        %v1729 = vld [vmem:[%s792 + $0xf8] sm:$0xff]
        %v1730 = vld [vmem:[%s677] sm:$0xf]
        %v1732 = vlaneseq
        %v1733 = vshrl.u32 %v1732, 7
        %v1734 = vsub.s32 0, %v1733
        %v1735 = vrot.slane %v1730, %v1734
        %v1736 = vlaneseq
        %v1737 = vshrl.u32 %v1736, 7
        %v1738 = vsub.s32 1, %v1737
        %v1739 = vrot.slane %v1730, %v1738
        %v1740 = vlaneseq
        %v1741 = vshrl.u32 %v1740, 7
        %v1742 = vsub.s32 2, %v1741
        %v1743 = vrot.slane %v1730, %v1742
        %v1744 = vlaneseq
        %v1745 = vshrl.u32 %v1744, 7
        %v1746 = vsub.s32 3, %v1745
        %v1747 = vrot.slane %v1730, %v1746
        %v1784 = vunpack.c.l.b16 %v1698
        %v1785 = vunpack.c.h.b16 %v1698
        %v1786 = vunpack.c.l.b16 %v1699
        %v1787 = vunpack.c.h.b16 %v1699
        %v1788 = vunpack.c.l.b16 %v1700
        %v1789 = vunpack.c.h.b16 %v1700
        %v1790 = vunpack.c.l.b16 %v1701
        %v1791 = vunpack.c.h.b16 %v1701
        %v1792 = vunpack.c.l.b16 %v1702
        %v1793 = vunpack.c.h.b16 %v1702
        %v1794 = vunpack.c.l.b16 %v1703
        %v1795 = vunpack.c.h.b16 %v1703
        %v1796 = vunpack.c.l.b16 %v1704
        %v1797 = vunpack.c.h.b16 %v1704
        %v1798 = vunpack.c.l.b16 %v1705
        %v1799 = vunpack.c.h.b16 %v1705
        %v1800 = vunpack.c.l.b16 %v1706
        %v1801 = vunpack.c.h.b16 %v1706
        %v1802 = vunpack.c.l.b16 %v1707
        %v1803 = vunpack.c.h.b16 %v1707
        %v1804 = vunpack.c.l.b16 %v1708
        %v1805 = vunpack.c.h.b16 %v1708
        %v1806 = vunpack.c.l.b16 %v1709
        %v1807 = vunpack.c.h.b16 %v1709
        %v1808 = vunpack.c.l.b16 %v1710
        %v1809 = vunpack.c.h.b16 %v1710
        %v1810 = vunpack.c.l.b16 %v1711
        %v1811 = vunpack.c.h.b16 %v1711
        %v1812 = vunpack.c.l.b16 %v1712
        %v1813 = vunpack.c.h.b16 %v1712
        %v1814 = vunpack.c.l.b16 %v1713
        %v1815 = vunpack.c.h.b16 %v1713
        %v1816 = vunpack.c.l.b16 %v1714
        %v1817 = vunpack.c.h.b16 %v1714
        %v1818 = vunpack.c.l.b16 %v1715
        %v1819 = vunpack.c.h.b16 %v1715
        %v1820 = vunpack.c.l.b16 %v1716
        %v1821 = vunpack.c.h.b16 %v1716
        %v1822 = vunpack.c.l.b16 %v1717
        %v1823 = vunpack.c.h.b16 %v1717
        %v1824 = vunpack.c.l.b16 %v1718
        %v1825 = vunpack.c.h.b16 %v1718
        %v1826 = vunpack.c.l.b16 %v1719
        %v1827 = vunpack.c.h.b16 %v1719
        %v1828 = vunpack.c.l.b16 %v1720
        %v1829 = vunpack.c.h.b16 %v1720
        %v1830 = vunpack.c.l.b16 %v1721
        %v1831 = vunpack.c.h.b16 %v1721
        %v1832 = vunpack.c.l.b16 %v1722
        %v1833 = vunpack.c.h.b16 %v1722
        %v1834 = vunpack.c.l.b16 %v1723
        %v1835 = vunpack.c.h.b16 %v1723
        %v1836 = vunpack.c.l.b16 %v1724
        %v1837 = vunpack.c.h.b16 %v1724
        %v1838 = vunpack.c.l.b16 %v1725
        %v1839 = vunpack.c.h.b16 %v1725
        %v1840 = vunpack.c.l.b16 %v1726
        %v1841 = vunpack.c.h.b16 %v1726
        %v1842 = vunpack.c.l.b16 %v1727
        %v1843 = vunpack.c.h.b16 %v1727
        %v1844 = vunpack.c.l.b16 %v1728
        %v1845 = vunpack.c.h.b16 %v1728
        %v1846 = vunpack.c.l.b16 %v1729
        %v1847 = vunpack.c.h.b16 %v1729
        %v1848 = vpack.c.b16 %v1788, %v1784
        %v1849 = vpack.c.b16 %v1789, %v1785
        %v1850 = vpack.c.b16 %v1790, %v1786
        %v1851 = vpack.c.b16 %v1791, %v1787
        %v1852 = vpack.c.b16 %v1796, %v1792
        %v1853 = vpack.c.b16 %v1797, %v1793
        %v1854 = vpack.c.b16 %v1798, %v1794
        %v1855 = vpack.c.b16 %v1799, %v1795
        %v1856 = vpack.c.b16 %v1804, %v1800
        %v1857 = vpack.c.b16 %v1805, %v1801
        %v1858 = vpack.c.b16 %v1806, %v1802
        %v1859 = vpack.c.b16 %v1807, %v1803
        %v1860 = vpack.c.b16 %v1812, %v1808
        %v1861 = vpack.c.b16 %v1813, %v1809
        %v1862 = vpack.c.b16 %v1814, %v1810
        %v1863 = vpack.c.b16 %v1815, %v1811
        %v1864 = vpack.c.b16 %v1820, %v1816
        %v1865 = vpack.c.b16 %v1821, %v1817
        %v1866 = vpack.c.b16 %v1822, %v1818
        %v1867 = vpack.c.b16 %v1823, %v1819
        %v1868 = vpack.c.b16 %v1828, %v1824
        %v1869 = vpack.c.b16 %v1829, %v1825
        %v1870 = vpack.c.b16 %v1830, %v1826
        %v1871 = vpack.c.b16 %v1831, %v1827
        %v1872 = vpack.c.b16 %v1836, %v1832
        %v1873 = vpack.c.b16 %v1837, %v1833
        %v1874 = vpack.c.b16 %v1838, %v1834
        %v1875 = vpack.c.b16 %v1839, %v1835
        %v1876 = vpack.c.b16 %v1844, %v1840
        %v1877 = vpack.c.b16 %v1845, %v1841
        %v1878 = vpack.c.b16 %v1846, %v1842
        %v1879 = vpack.c.b16 %v1847, %v1843
        %1912 = vmatprep.subr.bf16.mxu0 %v1877
        %1913 = vmatpush1.bf16.msra.mxu0 %v1876
        %1914 = vmatprep.subr.bf16.mxu0 %v1873
        %1915 = vmatpush1.bf16.msra.mxu0 %v1872
        %1916 = vmatprep.subr.bf16.mxu0 %v1869
        %1917 = vmatpush1.bf16.msra.mxu0 %v1868
        %1918 = vmatprep.subr.bf16.mxu0 %v1865
        %1919 = vmatpush1.bf16.msra.mxu0 %v1864
        %1920 = vmatprep.subr.bf16.mxu0 %v1861
        %1921 = vmatpush1.bf16.msra.mxu0 %v1860
        %1922 = vmatprep.subr.bf16.mxu0 %v1857
        %1923 = vmatpush1.bf16.msra.mxu0 %v1856
        %1924 = vmatprep.subr.bf16.mxu0 %v1853
        %1925 = vmatpush1.bf16.msra.mxu0 %v1852
        %1926 = vmatprep.subr.bf16.mxu0 %v1849
        %1927 = vmatpush1.bf16.msra.mxu0 %v1848
        %1928 = vmatprep.subr.bf16.mxu0 0
        %1929 = vmatpush2.bf16.msra.mxu0 0
        %1930 = vmatprep.subr.bf16.mxu0 0
        %1931 = vmatpush2.bf16.msra.mxu0 0
        %1932 = vmatprep.subr.bf16.mxu0 0
        %1933 = vmatpush2.bf16.msra.mxu0 0
        %1934 = vmatprep.subr.bf16.mxu0 0
        %1935 = vmatpush2.bf16.msra.mxu0 0
        %1936 = vmatprep.subr.bf16.mxu0 0
        %1937 = vmatpush2.bf16.msra.mxu0 0
        %1938 = vmatprep.subr.bf16.mxu0 0
        %1939 = vmatpush2.bf16.msra.mxu0 0
        %1940 = vmatprep.subr.bf16.mxu0 0
        %1941 = vmatpush2.bf16.msra.mxu0 0
        %1942 = vmatprep.subr.bf16.mxu0 0
        %1943 = vmatpush2.bf16.msra.mxu0 0
        %1944 = vmatprep.mubr.bf16.mxu0 0
        %1945 = vmatmul.mubr.bf16.gmra.mxu0 %v1697
        %v1946 = vpop.f32.mrf.mxu0
        %v1947 = vadd.f32 %v1735, %v1946
        %v1948 = vpop.f32.mrf.mxu0
        %v1949 = vadd.f32 %v1739, %v1948
        %v1950 = vpop.f32.mrf.mxu0
        %v1951 = vpop.f32.mrf.mxu0
        %1952 = vdwg.mxu0
        %1953 = vmatprep.subr.bf16.mxu0 %v1879
        %1954 = vmatpush1.bf16.msra.mxu0 %v1878
        %1955 = vmatprep.subr.bf16.mxu0 %v1875
        %1956 = vmatpush1.bf16.msra.mxu0 %v1874
        %1957 = vmatprep.subr.bf16.mxu0 %v1871
        %1958 = vmatpush1.bf16.msra.mxu0 %v1870
        %1959 = vmatprep.subr.bf16.mxu0 %v1867
        %1960 = vmatpush1.bf16.msra.mxu0 %v1866
        %1961 = vmatprep.subr.bf16.mxu0 %v1863
        %1962 = vmatpush1.bf16.msra.mxu0 %v1862
        %1963 = vmatprep.subr.bf16.mxu0 %v1859
        %1964 = vmatpush1.bf16.msra.mxu0 %v1858
        %1965 = vmatprep.subr.bf16.mxu0 %v1855
        %1966 = vmatpush1.bf16.msra.mxu0 %v1854
        %1967 = vmatprep.subr.bf16.mxu0 %v1851
        %1968 = vmatpush1.bf16.msra.mxu0 %v1850
        %1969 = vmatprep.subr.bf16.mxu0 0
        %1970 = vmatpush2.bf16.msra.mxu0 0
        %1971 = vmatprep.subr.bf16.mxu0 0
        %1972 = vmatpush2.bf16.msra.mxu0 0
        %1973 = vmatprep.subr.bf16.mxu0 0
        %1974 = vmatpush2.bf16.msra.mxu0 0
        %1975 = vmatprep.subr.bf16.mxu0 0
        %1976 = vmatpush2.bf16.msra.mxu0 0
        %1977 = vmatprep.subr.bf16.mxu0 0
        %1978 = vmatpush2.bf16.msra.mxu0 0
        %1979 = vmatprep.subr.bf16.mxu0 0
        %1980 = vmatpush2.bf16.msra.mxu0 0
        %1981 = vmatprep.subr.bf16.mxu0 0
        %1982 = vmatpush2.bf16.msra.mxu0 0
        %1983 = vmatprep.subr.bf16.mxu0 0
        %1984 = vmatpush2.bf16.msra.mxu0 0
        %1985 = vmatprep.mubr.bf16.mxu0 0
        %1986 = vmatmul.mubr.bf16.gmra.mxu0 %v1697
        %v1987 = vpop.f32.mrf.mxu0
        %v1988 = vadd.f32 %v1743, %v1987
        %v1989 = vpop.f32.mrf.mxu0
        %v1990 = vadd.f32 %v1747, %v1989
        %v1991 = vpop.f32.mrf.mxu0
        %v1992 = vpop.f32.mrf.mxu0
        %1993 = vdwg.mxu0
        %v1994 = vmul.f32 %v1947, %v1947
        %v1995 = vmul.f32 %v1949, %v1949
        %v1996 = vmul.f32 %v1988, %v1988
        %v1997 = vmul.f32 %v1990, %v1990
        %v1998 = vmul.f32 %v1947, %v1994
        %v1999 = vmul.f32 %v1949, %v1995
        %v2000 = vmul.f32 %v1988, %v1996
        %v2001 = vmul.f32 %v1990, %v1997
        %v2002 = vmul.f32 %v1998, 0.044715
        %v2003 = vmul.f32 %v1999, 0.044715
        %v2004 = vmul.f32 %v2000, 0.044715
        %v2005 = vmul.f32 %v2001, 0.044715
        %v2006 = vadd.f32 %v1947, %v2002
        %v2007 = vadd.f32 %v1949, %v2003
        %v2008 = vadd.f32 %v1988, %v2004
        %v2009 = vadd.f32 %v1990, %v2005
        %v2010 = vmul.f32 %v2006, 0.7978846
        %v2011 = vmul.f32 %v2007, 0.7978846
        %v2012 = vmul.f32 %v2008, 0.7978846
        %v2013 = vmul.f32 %v2009, 0.7978846
        %v2014 = vtanh.pop %v2010
        %v2015 = vtanh.pop %v2011
        %v2016 = vtanh.pop %v2012
        %v2017 = vtanh.pop %v2013
        %v2018 = vadd.f32 %v2014, 1.0
        %v2019 = vadd.f32 %v2015, 1.0
        %v2020 = vadd.f32 %v2016, 1.0
        %v2021 = vadd.f32 %v2017, 1.0
        %v2022 = vmul.f32 %v2018, 0.5
        %v2023 = vmul.f32 %v2019, 0.5
        %v2024 = vmul.f32 %v2020, 0.5
        %v2025 = vmul.f32 %v2021, 0.5
        %v2026 = vmul.f32 %v1947, %v2022
        %v2027 = vmul.f32 %v1949, %v2023
        %v2028 = vmul.f32 %v1988, %v2024
        %v2029 = vmul.f32 %v1990, %v2025
        %v2030 = vpack.c.bf16 %v2026, %v2026
        %v2031 = vpack.c.bf16 %v2027, %v2027
        %v2032 = vpack.c.bf16 %v2028, %v2028
        %v2033 = vpack.c.bf16 %v2029, %v2029
        %v2034 = vld [vmem:[%s797] sm:$0xf]
        %v2035 = vld [vmem:[%s797 + $0x4] sm:$0xf]
        %v2036 = vld [vmem:[%s797 + $0x8] sm:$0xf]
        %v2037 = vld [vmem:[%s797 + $0xc] sm:$0xf]
        %v2038 = vld [vmem:[%s797 + $0x10] sm:$0xf]
        %v2039 = vld [vmem:[%s797 + $0x14] sm:$0xf]
        %v2040 = vld [vmem:[%s797 + $0x18] sm:$0xf]
        %v2041 = vld [vmem:[%s797 + $0x1c] sm:$0xf]
        %v2042 = vld [vmem:[%s797 + $0x20] sm:$0xf]
        %v2043 = vld [vmem:[%s797 + $0x24] sm:$0xf]
        %v2044 = vld [vmem:[%s797 + $0x28] sm:$0xf]
        %v2045 = vld [vmem:[%s797 + $0x2c] sm:$0xf]
        %v2046 = vld [vmem:[%s797 + $0x30] sm:$0xf]
        %v2047 = vld [vmem:[%s797 + $0x34] sm:$0xf]
        %v2048 = vld [vmem:[%s797 + $0x38] sm:$0xf]
        %v2049 = vld [vmem:[%s797 + $0x3c] sm:$0xf]
        %v2050 = vld [vmem:[%s797 + $0x40] sm:$0xf]
        %v2051 = vld [vmem:[%s797 + $0x44] sm:$0xf]
        %v2052 = vld [vmem:[%s797 + $0x48] sm:$0xf]
        %v2053 = vld [vmem:[%s797 + $0x4c] sm:$0xf]
        %v2054 = vld [vmem:[%s797 + $0x50] sm:$0xf]
        %v2055 = vld [vmem:[%s797 + $0x54] sm:$0xf]
        %v2056 = vld [vmem:[%s797 + $0x58] sm:$0xf]
        %v2057 = vld [vmem:[%s797 + $0x5c] sm:$0xf]
        %v2058 = vld [vmem:[%s797 + $0x60] sm:$0xf]
        %v2059 = vld [vmem:[%s797 + $0x64] sm:$0xf]
        %v2060 = vld [vmem:[%s797 + $0x68] sm:$0xf]
        %v2061 = vld [vmem:[%s797 + $0x6c] sm:$0xf]
        %v2062 = vld [vmem:[%s797 + $0x70] sm:$0xf]
        %v2063 = vld [vmem:[%s797 + $0x74] sm:$0xf]
        %v2064 = vld [vmem:[%s797 + $0x78] sm:$0xf]
        %v2065 = vld [vmem:[%s797 + $0x7c] sm:$0xf]
        %v2066 = vld [vmem:[%s797 + $0x80] sm:$0xf]
        %v2067 = vld [vmem:[%s797 + $0x84] sm:$0xf]
        %v2068 = vld [vmem:[%s797 + $0x88] sm:$0xf]
        %v2069 = vld [vmem:[%s797 + $0x8c] sm:$0xf]
        %v2070 = vld [vmem:[%s797 + $0x90] sm:$0xf]
        %v2071 = vld [vmem:[%s797 + $0x94] sm:$0xf]
        %v2072 = vld [vmem:[%s797 + $0x98] sm:$0xf]
        %v2073 = vld [vmem:[%s797 + $0x9c] sm:$0xf]
        %v2074 = vld [vmem:[%s797 + $0xa0] sm:$0xf]
        %v2075 = vld [vmem:[%s797 + $0xa4] sm:$0xf]
        %v2076 = vld [vmem:[%s797 + $0xa8] sm:$0xf]
        %v2077 = vld [vmem:[%s797 + $0xac] sm:$0xf]
        %v2078 = vld [vmem:[%s797 + $0xb0] sm:$0xf]
        %v2079 = vld [vmem:[%s797 + $0xb4] sm:$0xf]
        %v2080 = vld [vmem:[%s797 + $0xb8] sm:$0xf]
        %v2081 = vld [vmem:[%s797 + $0xbc] sm:$0xf]
        %v2082 = vld [vmem:[%s797 + $0xc0] sm:$0xf]
        %v2083 = vld [vmem:[%s797 + $0xc4] sm:$0xf]
        %v2084 = vld [vmem:[%s797 + $0xc8] sm:$0xf]
        %v2085 = vld [vmem:[%s797 + $0xcc] sm:$0xf]
        %v2086 = vld [vmem:[%s797 + $0xd0] sm:$0xf]
        %v2087 = vld [vmem:[%s797 + $0xd4] sm:$0xf]
        %v2088 = vld [vmem:[%s797 + $0xd8] sm:$0xf]
        %v2089 = vld [vmem:[%s797 + $0xdc] sm:$0xf]
        %v2090 = vld [vmem:[%s797 + $0xe0] sm:$0xf]
        %v2091 = vld [vmem:[%s797 + $0xe4] sm:$0xf]
        %v2092 = vld [vmem:[%s797 + $0xe8] sm:$0xf]
        %v2093 = vld [vmem:[%s797 + $0xec] sm:$0xf]
        %v2094 = vld [vmem:[%s797 + $0xf0] sm:$0xf]
        %v2095 = vld [vmem:[%s797 + $0xf4] sm:$0xf]
        %v2096 = vld [vmem:[%s797 + $0xf8] sm:$0xf]
        %v2097 = vld [vmem:[%s797 + $0xfc] sm:$0xf]
        %v2098 = vld [vmem:[%s685] sm:$0x1]
        %v2100 = vlaneseq
        %v2101 = vshrl.u32 %v2100, 7
        %v2102 = vsub.s32 0, %v2101
        %v2103 = vrot.slane %v2098, %v2102
        %v2169 = vunpack.c.l.b16 %v2034
        %v2170 = vunpack.c.l.b16 %v2035
        %v2171 = vunpack.c.l.b16 %v2036
        %v2172 = vunpack.c.l.b16 %v2037
        %v2173 = vunpack.c.l.b16 %v2038
        %v2174 = vunpack.c.l.b16 %v2039
        %v2175 = vunpack.c.l.b16 %v2040
        %v2176 = vunpack.c.l.b16 %v2041
        %v2177 = vunpack.c.l.b16 %v2042
        %v2178 = vunpack.c.l.b16 %v2043
        %v2179 = vunpack.c.l.b16 %v2044
        %v2180 = vunpack.c.l.b16 %v2045
        %v2181 = vunpack.c.l.b16 %v2046
        %v2182 = vunpack.c.l.b16 %v2047
        %v2183 = vunpack.c.l.b16 %v2048
        %v2184 = vunpack.c.l.b16 %v2049
        %v2185 = vunpack.c.l.b16 %v2050
        %v2186 = vunpack.c.l.b16 %v2051
        %v2187 = vunpack.c.l.b16 %v2052
        %v2188 = vunpack.c.l.b16 %v2053
        %v2189 = vunpack.c.l.b16 %v2054
        %v2190 = vunpack.c.l.b16 %v2055
        %v2191 = vunpack.c.l.b16 %v2056
        %v2192 = vunpack.c.l.b16 %v2057
        %v2193 = vunpack.c.l.b16 %v2058
        %v2194 = vunpack.c.l.b16 %v2059
        %v2195 = vunpack.c.l.b16 %v2060
        %v2196 = vunpack.c.l.b16 %v2061
        %v2197 = vunpack.c.l.b16 %v2062
        %v2198 = vunpack.c.l.b16 %v2063
        %v2199 = vunpack.c.l.b16 %v2064
        %v2200 = vunpack.c.l.b16 %v2065
        %v2201 = vunpack.c.l.b16 %v2066
        %v2202 = vunpack.c.l.b16 %v2067
        %v2203 = vunpack.c.l.b16 %v2068
        %v2204 = vunpack.c.l.b16 %v2069
        %v2205 = vunpack.c.l.b16 %v2070
        %v2206 = vunpack.c.l.b16 %v2071
        %v2207 = vunpack.c.l.b16 %v2072
        %v2208 = vunpack.c.l.b16 %v2073
        %v2209 = vunpack.c.l.b16 %v2074
        %v2210 = vunpack.c.l.b16 %v2075
        %v2211 = vunpack.c.l.b16 %v2076
        %v2212 = vunpack.c.l.b16 %v2077
        %v2213 = vunpack.c.l.b16 %v2078
        %v2214 = vunpack.c.l.b16 %v2079
        %v2215 = vunpack.c.l.b16 %v2080
        %v2216 = vunpack.c.l.b16 %v2081
        %v2217 = vunpack.c.l.b16 %v2082
        %v2218 = vunpack.c.l.b16 %v2083
        %v2219 = vunpack.c.l.b16 %v2084
        %v2220 = vunpack.c.l.b16 %v2085
        %v2221 = vunpack.c.l.b16 %v2086
        %v2222 = vunpack.c.l.b16 %v2087
        %v2223 = vunpack.c.l.b16 %v2088
        %v2224 = vunpack.c.l.b16 %v2089
        %v2225 = vunpack.c.l.b16 %v2090
        %v2226 = vunpack.c.l.b16 %v2091
        %v2227 = vunpack.c.l.b16 %v2092
        %v2228 = vunpack.c.l.b16 %v2093
        %v2229 = vunpack.c.l.b16 %v2094
        %v2230 = vunpack.c.l.b16 %v2095
        %v2231 = vunpack.c.l.b16 %v2096
        %v2232 = vunpack.c.l.b16 %v2097
        %v2233 = vpack.c.b16 %v2170, %v2169
        %v2234 = vpack.c.b16 %v2172, %v2171
        %v2235 = vpack.c.b16 %v2174, %v2173
        %v2236 = vpack.c.b16 %v2176, %v2175
        %v2237 = vpack.c.b16 %v2178, %v2177
        %v2238 = vpack.c.b16 %v2180, %v2179
        %v2239 = vpack.c.b16 %v2182, %v2181
        %v2240 = vpack.c.b16 %v2184, %v2183
        %v2241 = vpack.c.b16 %v2186, %v2185
        %v2242 = vpack.c.b16 %v2188, %v2187
        %v2243 = vpack.c.b16 %v2190, %v2189
        %v2244 = vpack.c.b16 %v2192, %v2191
        %v2245 = vpack.c.b16 %v2194, %v2193
        %v2246 = vpack.c.b16 %v2196, %v2195
        %v2247 = vpack.c.b16 %v2198, %v2197
        %v2248 = vpack.c.b16 %v2200, %v2199
        %v2249 = vpack.c.b16 %v2202, %v2201
        %v2250 = vpack.c.b16 %v2204, %v2203
        %v2251 = vpack.c.b16 %v2206, %v2205
        %v2252 = vpack.c.b16 %v2208, %v2207
        %v2253 = vpack.c.b16 %v2210, %v2209
        %v2254 = vpack.c.b16 %v2212, %v2211
        %v2255 = vpack.c.b16 %v2214, %v2213
        %v2256 = vpack.c.b16 %v2216, %v2215
        %v2257 = vpack.c.b16 %v2218, %v2217
        %v2258 = vpack.c.b16 %v2220, %v2219
        %v2259 = vpack.c.b16 %v2222, %v2221
        %v2260 = vpack.c.b16 %v2224, %v2223
        %v2261 = vpack.c.b16 %v2226, %v2225
        %v2262 = vpack.c.b16 %v2228, %v2227
        %v2263 = vpack.c.b16 %v2230, %v2229
        %v2264 = vpack.c.b16 %v2232, %v2231
        %2297 = vmatprep.subr.bf16.mxu0 0
        %2298 = vmatpush1.bf16.msra.mxu0 %v2240
        %2299 = vmatprep.subr.bf16.mxu0 0
        %2300 = vmatpush1.bf16.msra.mxu0 %v2239
        %2301 = vmatprep.subr.bf16.mxu0 0
        %2302 = vmatpush1.bf16.msra.mxu0 %v2238
        %2303 = vmatprep.subr.bf16.mxu0 0
        %2304 = vmatpush1.bf16.msra.mxu0 %v2237
        %2305 = vmatprep.subr.bf16.mxu0 0
        %2306 = vmatpush1.bf16.msra.mxu0 %v2236
        %2307 = vmatprep.subr.bf16.mxu0 0
        %2308 = vmatpush1.bf16.msra.mxu0 %v2235
        %2309 = vmatprep.subr.bf16.mxu0 0
        %2310 = vmatpush1.bf16.msra.mxu0 %v2234
        %2311 = vmatprep.subr.bf16.mxu0 0
        %2312 = vmatpush1.bf16.msra.mxu0 %v2233
        %2313 = vmatprep.subr.bf16.mxu0 0
        %2314 = vmatpush2.bf16.msra.mxu0 %v2248
        %2315 = vmatprep.subr.bf16.mxu0 0
        %2316 = vmatpush2.bf16.msra.mxu0 %v2247
        %2317 = vmatprep.subr.bf16.mxu0 0
        %2318 = vmatpush2.bf16.msra.mxu0 %v2246
        %2319 = vmatprep.subr.bf16.mxu0 0
        %2320 = vmatpush2.bf16.msra.mxu0 %v2245
        %2321 = vmatprep.subr.bf16.mxu0 0
        %2322 = vmatpush2.bf16.msra.mxu0 %v2244
        %2323 = vmatprep.subr.bf16.mxu0 0
        %2324 = vmatpush2.bf16.msra.mxu0 %v2243
        %2325 = vmatprep.subr.bf16.mxu0 0
        %2326 = vmatpush2.bf16.msra.mxu0 %v2242
        %2327 = vmatprep.subr.bf16.mxu0 0
        %2328 = vmatpush2.bf16.msra.mxu0 %v2241
        %2329 = vmatprep.mubr.bf16.mxu0 %v2031
        %2330 = vmatmul.mubr.bf16.gmra.mxu0 %v2030
        %v2331 = vpop.f32.mrf.mxu0
        %v2332 = vadd.f32 %v2103, %v2331
        %v2333 = vpop.f32.mrf.mxu0
        %v2334 = vpop.f32.mrf.mxu0
        %v2335 = vpop.f32.mrf.mxu0
        %2336 = vdwg.mxu0
        %2337 = vmatprep.subr.bf16.mxu0 0
        %2338 = vmatpush1.bf16.msra.mxu0 %v2256
        %2339 = vmatprep.subr.bf16.mxu0 0
        %2340 = vmatpush1.bf16.msra.mxu0 %v2255
        %2341 = vmatprep.subr.bf16.mxu0 0
        %2342 = vmatpush1.bf16.msra.mxu0 %v2254
        %2343 = vmatprep.subr.bf16.mxu0 0
        %2344 = vmatpush1.bf16.msra.mxu0 %v2253
        %2345 = vmatprep.subr.bf16.mxu0 0
        %2346 = vmatpush1.bf16.msra.mxu0 %v2252
        %2347 = vmatprep.subr.bf16.mxu0 0
        %2348 = vmatpush1.bf16.msra.mxu0 %v2251
        %2349 = vmatprep.subr.bf16.mxu0 0
        %2350 = vmatpush1.bf16.msra.mxu0 %v2250
        %2351 = vmatprep.subr.bf16.mxu0 0
        %2352 = vmatpush1.bf16.msra.mxu0 %v2249
        %2353 = vmatprep.subr.bf16.mxu0 0
        %2354 = vmatpush2.bf16.msra.mxu0 %v2264
        %2355 = vmatprep.subr.bf16.mxu0 0
        %2356 = vmatpush2.bf16.msra.mxu0 %v2263
        %2357 = vmatprep.subr.bf16.mxu0 0
        %2358 = vmatpush2.bf16.msra.mxu0 %v2262
        %2359 = vmatprep.subr.bf16.mxu0 0
        %2360 = vmatpush2.bf16.msra.mxu0 %v2261
        %2361 = vmatprep.subr.bf16.mxu0 0
        %2362 = vmatpush2.bf16.msra.mxu0 %v2260
        %2363 = vmatprep.subr.bf16.mxu0 0
        %2364 = vmatpush2.bf16.msra.mxu0 %v2259
        %2365 = vmatprep.subr.bf16.mxu0 0
        %2366 = vmatpush2.bf16.msra.mxu0 %v2258
        %2367 = vmatprep.subr.bf16.mxu0 0
        %2368 = vmatpush2.bf16.msra.mxu0 %v2257
        %2369 = vmatprep.mubr.bf16.mxu0 %v2033
        %2370 = vmatmul.mubr.bf16.gmra.mxu0 %v2032
        %v2371 = vpop.f32.mrf.mxu0
        %v2372 = vadd.f32 %v2332, %v2371
        %v2373 = vpop.f32.mrf.mxu0
        %v2374 = vpop.f32.mrf.mxu0
        %v2375 = vpop.f32.mrf.mxu0
        %2376 = vdwg.mxu0
        %v2377 = vadd.f32 %v1669, %v2372
        %2378 = vst [vmem:[#allocation2] sm:$0xff] %v2377
        %p2379 = scmp.eq.s32.totalorder %s47, 1
        // Predicated region
        $region109: #{clip_vision_encoder_forward.3} parent=71 // pred_check
          %p2380 = pneg %p2379
        $region110: #{clip_vision_encoder_forward.3} parent=71 // pred_check_branch
          %2382 = sbr.rel (%p2380) target = $region112
        $region111: #{clip_vision_encoder_forward.3} parent=71 // pred_region
          %vm2383 = vcmask 1044480
          %v2384 = vsel %vm2383, %v2377, 0.0
          %v2385 = vrot.slane %v2384, 4
          %v2386 = vadd.f32 %v2384, %v2385
          %v2387 = vrot.slane %v2386, 2
          %v2388 = vadd.f32 %v2386, %v2387
          %v2389 = vrot.slane %v2388, 1
          %v2390 = vadd.f32 %v2388, %v2389
          %v2391 = vmul.f32 %v2390, 0.2
          %2392 = vst [vmem:[%s777] sm:$0x1] %v2391
        $region112: #{clip_vision_encoder_forward.3} parent=71 // pred_fallthru
          _
        %s2393 = sand.u32 %s400, 1
        %s2394 = scalar_lea.sflag [#allocation5], %s2393
        %s2395 = sand.u32 %s400, 1
        %s2396 = scalar_lea.vmem [#allocation17], %s2395
        // Predicated region
        $region113: #{clip_vision_encoder_forward.3} parent=71 // pred_check
          %p2397 = pneg %p410
        $region114: #{clip_vision_encoder_forward.3} parent=71 // pred_check_branch
          %2399 = sbr.rel (%p2397) target = $region116
        $region115: #{clip_vision_encoder_forward.3} parent=71 // pred_region
          %s2401 = ssub.s32 16, 16
          %2402 = vsyncadd %s2394, %s2401
          %s2403 = smul.addr %s46, 16
          %s2404 = scalar_lea.hbm %s13, %s2403
          %s2406 = sshll.u32 %s2396, 4
          %s2407 = int_to_ptr.vmem [resolvable:$true] %s2406
          %2409 = dma.vmem_to_hbm [thread:$0]  %s2407, 16, %s2404, %s2394
        $region116: #{clip_vision_encoder_forward.3} parent=71 // pred_fallthru
          _
      $region72: #{clip_vision_encoder_forward.3} parent=5 // pred_fallthru
        _
      %p2410 = scmp.le.s32.totalorder 2, %s37
      // Predicated region
      $region117: #{clip_vision_encoder_forward.3} parent=5 // pred_check
        %p2411 = pneg %p2410
      $region118: #{clip_vision_encoder_forward.3} parent=5 // pred_check_branch
        %2413 = sbr.rel (%p2411) target = $region120
      $region119: #{clip_vision_encoder_forward.3} parent=5 // pred_region
        %s2414 = ssub.s32 %s37, 2
        // Predicated region
        $region121: #{clip_vision_encoder_forward.3} parent=119 // pred_check
          %p2415 = pneg %p416
        $region122: #{clip_vision_encoder_forward.3} parent=119 // pred_check_branch
          %2417 = sbr.rel (%p2415) target = $region124
        $region123: #{clip_vision_encoder_forward.3} parent=119 // pred_region
          %s2418 = sand.u32 %s401, 1
          %s2419 = scalar_lea.sflag [#allocation5], %s2418
          %s2420 = sand.u32 %s401, 1
          %s2421 = scalar_lea.vmem [#allocation17], %s2420
          %2422 = dma.done %s2419, 16
        $region124: #{clip_vision_encoder_forward.3} parent=119 // pred_fallthru
          _
      $region120: #{clip_vision_encoder_forward.3} parent=5 // pred_fallthru
        _
    $region6: #{clip_vision_encoder_forward.3} parent=1 // loop_footer
      %s41 = sadd.s32 1, %s37
    $region7: #{clip_vision_encoder_forward.3} parent=1 // loop_footer_branch
      %36 = sbr.rel target = $region3
    $region8: #{clip_vision_encoder_forward.3} parent=1 // loop_exit
      _
    %2423 = vsyncpa [#allocation4], 1
    %s2424 = scalar_lea.sflag [#allocation4], 1
    %2425 = vsyncpa %s2424, 1
    %2426 = vsyncpa [#allocation7], 1
    %s2427 = scalar_lea.sflag [#allocation7], 1
    %2428 = vsyncpa %s2427, 1
    %2429 = vsyncpa [#allocation10], 1
    %s2430 = scalar_lea.sflag [#allocation10], 1
    %2431 = vsyncpa %s2430, 1
    %2432 = vsyncpa [#allocation13], 1
    %s2433 = scalar_lea.sflag [#allocation13], 1
    %2434 = vsyncpa %s2433, 1
    %2435 = vsyncpa [#allocation16], 1
    %s2436 = scalar_lea.sflag [#allocation16], 1
    %2437 = vsyncpa %s2436, 1
    %2438 = vsyncpa [#allocation5], 1
    %s2439 = scalar_lea.sflag [#allocation5], 1
    %2440 = vsyncpa %s2439, 1

</llo_original>
